<compile_context>
chip_gen: v7x
topology: tpu7x:2x2x1
jax: 0.10.0
libtpu: 0.0.40
codegen_flags: <defaults>
</compile_context>

<pallas_src>
import jax
import jax.numpy as jnp
import numpy as np
from jax.experimental import pallas as pl
from jax.experimental.pallas import tpu as pltpu

BN_EPS = 1e-5
_PREC = jax.lax.Precision.HIGHEST  # full-f32 MXU passes for tight validation


def _stats_kernel(n_ref, x_ref, w_ref, b_ref, sum_ref, ssq_ref):
    """Accumulate per-feature sum and sum-of-squares of lin = x @ w + b."""
    i = pl.program_id(0)

    @pl.when(i == 0)
    def _():
        sum_ref[...] = jnp.zeros_like(sum_ref)
        ssq_ref[...] = jnp.zeros_like(ssq_ref)

    lin = (jnp.dot(x_ref[...], w_ref[...],
                   preferred_element_type=jnp.float32, precision=_PREC)
           + b_ref[...])                                          # (TILE_R, F)

    # Row-validity mask (drops zero-padded rows) folded into an MXU
    # row-reduction: sum = mask_row @ lin, sumsq = mask_row @ (lin*lin).
    tile_r = x_ref.shape[0]
    rows = i * tile_r + jax.lax.broadcasted_iota(jnp.int32, (1, tile_r), 1)
    mask = (rows < n_ref[0]).astype(jnp.float32)                  # (1, TILE_R)

    sum_ref[...] += jnp.dot(mask, lin,
                            preferred_element_type=jnp.float32, precision=_PREC)
    ssq_ref[...] += jnp.dot(mask, lin * lin,
                            preferred_element_type=jnp.float32, precision=_PREC)


def _apply_kernel(x_ref, w_ref, b_ref, o_ref):
    """out = relu(x @ w_eff + b_eff)  (BN mean/var/gamma/beta pre-folded)."""
    lin = jnp.dot(x_ref[...], w_ref[...],
                  preferred_element_type=jnp.float32, precision=_PREC)
    o_ref[...] = jnp.maximum(lin + b_ref[...], 0.0).astype(o_ref.dtype)


def vfe_forward(x, w, b, gamma, beta, *, tile_rows=256):
    """x: (N, cin) f32.  w: (cin, F).  b/gamma/beta: (F,).  -> (N, F) f32."""
    N, cin = x.shape
    F = w.shape[1]

    num_tiles = (N + tile_rows - 1) // tile_rows
    n_pad = num_tiles * tile_rows

    x32 = x.astype(jnp.float32)
    if n_pad != N:
        x32 = jnp.pad(x32, ((0, n_pad - N), (0, 0)))
    w32 = w.astype(jnp.float32)
    b2d = b.reshape(1, F).astype(jnp.float32)
    gamma2d = gamma.reshape(1, F).astype(jnp.float32)
    beta2d = beta.reshape(1, F).astype(jnp.float32)

    compiler_params_arb = pltpu.CompilerParams(
        dimension_semantics=("arbitrary",),
        vmem_limit_bytes=32 * 1024 * 1024)
    compiler_params_par = pltpu.CompilerParams(
        dimension_semantics=("parallel",),
        vmem_limit_bytes=32 * 1024 * 1024)

    # --- Pass 1: per-feature sum / sum-of-squares of lin (BN batch stats). ---
    n_actual = jnp.array([N], dtype=jnp.int32)
    lin_sum, lin_ssq = pl.pallas_call(
        _stats_kernel,
        out_shape=(jax.ShapeDtypeStruct((1, F), jnp.float32),
                   jax.ShapeDtypeStruct((1, F), jnp.float32)),
        grid_spec=pltpu.PrefetchScalarGridSpec(
            num_scalar_prefetch=1,
            grid=(num_tiles,),
            in_specs=[
                pl.BlockSpec((tile_rows, cin), lambda i, n: (i, 0)),
                pl.BlockSpec((cin, F), lambda i, n: (0, 0)),   # resident
                pl.BlockSpec((1, F), lambda i, n: (0, 0)),     # resident
            ],
            out_specs=(
                pl.BlockSpec((1, F), lambda i, n: (0, 0)),     # accumulator
                pl.BlockSpec((1, F), lambda i, n: (0, 0)),     # accumulator
            ),
        ),
        compiler_params=compiler_params_arb,
    )(n_actual, x32, w32, b2d)

    # --- Tiny XLA epilogue: fold BN (batch stats) + affine into the Linear. ---
    inv_n = jnp.float32(1.0 / N)
    mu = lin_sum * inv_n                                        # (1, F)
    var = jnp.maximum(lin_ssq * inv_n - mu * mu, 0.0)           # biased var
    inv_std = jax.lax.rsqrt(var + BN_EPS)
    scale = gamma2d * inv_std                                   # (1, F)
    w_eff = w32 * scale                                         # (cin, F)
    b_eff = (b2d - mu) * scale + beta2d                         # (1, F)

    # --- Pass 2: out = relu(x @ w_eff + b_eff), fully parallel over tiles. ---
    out = pl.pallas_call(
        _apply_kernel,
        out_shape=jax.ShapeDtypeStruct((n_pad, F), jnp.float32),
        grid_spec=pl.GridSpec(
            grid=(num_tiles,),
            in_specs=[
                pl.BlockSpec((tile_rows, cin), lambda i: (i, 0)),
                pl.BlockSpec((cin, F), lambda i: (0, 0)),      # resident
                pl.BlockSpec((1, F), lambda i: (0, 0)),        # resident
            ],
            out_specs=pl.BlockSpec((tile_rows, F), lambda i: (i, 0)),
        ),
        compiler_params=compiler_params_par,
    )(x32, w_eff, b_eff)

    return out[:N]


def _reference(x, w, b, gamma, beta):
    """Pure-JAX replica of the PyTorch forward (BN in training mode)."""
    lin = jnp.dot(x.astype(jnp.float32), w, precision=_PREC) + b
    mu = jnp.mean(lin, axis=0)
    var = jnp.mean((lin - mu) ** 2, axis=0)        # biased variance
    bn = (lin - mu) / jnp.sqrt(var + BN_EPS) * gamma + beta
    return jnp.maximum(bn, 0.0)


# TODO(synk): BatchNorm1d running_mean/running_var state updates (training-time
# side effect) are not materialized; forward output uses batch statistics.

if __name__ == "__main__":
    key = jax.random.PRNGKey(0)
    k_x, k_w, k_b, k_g, k_bt = jax.random.split(key, 5)

    # VFE(cin=7, cout=32): Linear(7 -> 16) + BatchNorm1d(16) + ReLU,
    # applied to N points.  N is deliberately not a multiple of the tile
    # to exercise the padding/mask path.
    N, cin, cout = 1000, 7, 32
    F = cout // 2

    x = jax.random.normal(k_x, (N, cin), jnp.float32)
    bound = 1.0 / np.sqrt(cin)
    w = jax.random.uniform(k_w, (cin, F), jnp.float32, -bound, bound)
    b = jax.random.uniform(k_b, (F,), jnp.float32, -bound, bound)
    gamma = jax.random.uniform(k_g, (F,), jnp.float32, 0.5, 1.5)
    beta = jax.random.uniform(k_bt, (F,), jnp.float32, -0.5, 0.5)

    out = vfe_forward(x, w, b, gamma, beta)
    out = jax.block_until_ready(out)

    ref = _reference(x, w, b, gamma, beta)
    assert out.shape == (N, F), out.shape
    np.testing.assert_allclose(np.asarray(out), np.asarray(ref),
                               rtol=1e-4, atol=1e-4)

    print("KERNEL_OK")
</pallas_src>

<mosaic_0001>
module attributes {stable_mosaic.version = 11 : i64} {
  func.func @_stats_kernel(%arg0: i32, %arg1: memref<1xi32, #tpu.memory_space<smem>>, %arg2: memref<256x7xf32, #tpu.memory_space<vmem>>, %arg3: memref<7x16xf32, #tpu.memory_space<vmem>>, %arg4: memref<1x16xf32, #tpu.memory_space<vmem>>, %arg5: memref<1x16xf32, #tpu.memory_space<vmem>>, %arg6: memref<1x16xf32, #tpu.memory_space<vmem>>) attributes {dimension_semantics = [#tpu.dimension_semantics<arbitrary>], iteration_bounds = array<i64: 4>, scalar_prefetch = 1 : i64, scratch_operands = 0 : i64, tpu.core_type = #tpu.core_type<tc>, window_params = [{transform_indices = @transform_0, window_bounds = array<i64: 256, 7>}, {pipeline_mode = #tpu.pipeline_mode<synchronous>, transform_indices = @transform_1, window_bounds = array<i64: 7, 16>}, {pipeline_mode = #tpu.pipeline_mode<synchronous>, transform_indices = @transform_2, window_bounds = array<i64: 1, 16>}, {pipeline_mode = #tpu.pipeline_mode<synchronous>, transform_indices = @transform_3, window_bounds = array<i64: 1, 16>}, {pipeline_mode = #tpu.pipeline_mode<synchronous>, transform_indices = @transform_4, window_bounds = array<i64: 1, 16>}]} {
    %c0_i32 = arith.constant 0 : i32
    %0 = arith.cmpi eq, %arg0, %c0_i32 : i32
    %1 = arith.extui %0 : i1 to i32
    %c0_i32_0 = arith.constant 0 : i32
    %2 = arith.cmpi ne, %1, %c0_i32_0 : i32
    scf.if %2 {
      %cst_17 = arith.constant 0.000000e+00 : f32
      %27 = vector.broadcast %cst_17 : f32 to vector<1x16xf32>
      %c0_18 = arith.constant 0 : index
      %c0_19 = arith.constant 0 : index
      %28 = vector.load %arg5[%c0_18, %c0_19] : memref<1x16xf32, #tpu.memory_space<vmem>>, vector<1x16xf32>
      tpu.vector_store %arg5[%c0_18, %c0_19], %27 {strides = array<i32>} : memref<1x16xf32, #tpu.memory_space<vmem>>, vector<1x16xf32>,
      %cst_20 = arith.constant 0.000000e+00 : f32
      %29 = vector.broadcast %cst_20 : f32 to vector<1x16xf32>
      %c0_21 = arith.constant 0 : index
      %c0_22 = arith.constant 0 : index
      %30 = vector.load %arg6[%c0_21, %c0_22] : memref<1x16xf32, #tpu.memory_space<vmem>>, vector<1x16xf32>
      tpu.vector_store %arg6[%c0_21, %c0_22], %29 {strides = array<i32>} : memref<1x16xf32, #tpu.memory_space<vmem>>, vector<1x16xf32>,
    } else {
    }
    %c0 = arith.constant 0 : index
    %c0_1 = arith.constant 0 : index
    %3 = vector.load %arg2[%c0, %c0_1] : memref<256x7xf32, #tpu.memory_space<vmem>>, vector<256x7xf32>
    %c0_2 = arith.constant 0 : index
    %c0_3 = arith.constant 0 : index
    %4 = vector.load %arg3[%c0_2, %c0_3] : memref<7x16xf32, #tpu.memory_space<vmem>>, vector<7x16xf32>
    %cst = arith.constant dense<0.000000e+00> : vector<256x16xf32>
    %5 = tpu.matmul %3, %4, %cst {dimension_numbers = #tpu.dot_dimension_numbers<[1], [0], [0], [1], [0, 0, 1, 1], [], []>, precision = #tpu.contract_precision<fp32>} : vector<256x7xf32>, vector<7x16xf32>, vector<256x16xf32> -> vector<256x16xf32>
    %c0_4 = arith.constant 0 : index
    %c0_5 = arith.constant 0 : index
    %6 = vector.load %arg4[%c0_4, %c0_5] : memref<1x16xf32, #tpu.memory_space<vmem>>, vector<1x16xf32>
    %7 = vector.broadcast %6 : vector<1x16xf32> to vector<256x16xf32>
    %8 = arith.addf %5, %7 : vector<256x16xf32>
    %c256_i32 = arith.constant 256 : i32
    %9 = arith.muli %arg0, %c256_i32 : i32
    %10 = tpu.iota {dimensions = array<i32: 1>} : vector<1x256xi32>
    %11 = vector.broadcast %9 : i32 to vector<1x256xi32>
    %12 = arith.addi %11, %10 : vector<1x256xi32>
    %c0_6 = arith.constant 0 : index
    %13 = memref.load %arg1[%c0_6] : memref<1xi32, #tpu.memory_space<smem>>
    %14 = vector.broadcast %13 : i32 to vector<1x256xi32>
    %15 = arith.cmpi slt, %12, %14 : vector<1x256xi32>
    %16 = arith.extui %15 : vector<1x256xi1> to vector<1x256xi32>
    %17 = arith.sitofp %16 : vector<1x256xi32> to vector<1x256xf32>
    %c0_7 = arith.constant 0 : index
    %c0_8 = arith.constant 0 : index
    %18 = vector.load %arg5[%c0_7, %c0_8] : memref<1x16xf32, #tpu.memory_space<vmem>>, vector<1x16xf32>
    %cst_9 = arith.constant dense<0.000000e+00> : vector<1x16xf32>
    %19 = tpu.matmul %17, %8, %cst_9 {dimension_numbers = #tpu.dot_dimension_numbers<[1], [0], [0], [1], [0, 0, 1, 1], [], []>, precision = #tpu.contract_precision<fp32>} : vector<1x256xf32>, vector<256x16xf32>, vector<1x16xf32> -> vector<1x16xf32>
    %20 = arith.addf %18, %19 : vector<1x16xf32>
    %c0_10 = arith.constant 0 : index
    %c0_11 = arith.constant 0 : index
    %21 = vector.load %arg5[%c0_10, %c0_11] : memref<1x16xf32, #tpu.memory_space<vmem>>, vector<1x16xf32>
    tpu.vector_store %arg5[%c0_10, %c0_11], %20 {strides = array<i32>} : memref<1x16xf32, #tpu.memory_space<vmem>>, vector<1x16xf32>,
    %c0_12 = arith.constant 0 : index
    %c0_13 = arith.constant 0 : index
    %22 = vector.load %arg6[%c0_12, %c0_13] : memref<1x16xf32, #tpu.memory_space<vmem>>, vector<1x16xf32>
    %23 = arith.mulf %8, %8 : vector<256x16xf32>
    %cst_14 = arith.constant dense<0.000000e+00> : vector<1x16xf32>
    %24 = tpu.matmul %17, %23, %cst_14 {dimension_numbers = #tpu.dot_dimension_numbers<[1], [0], [0], [1], [0, 0, 1, 1], [], []>, precision = #tpu.contract_precision<fp32>} : vector<1x256xf32>, vector<256x16xf32>, vector<1x16xf32> -> vector<1x16xf32>
    %25 = arith.addf %22, %24 : vector<1x16xf32>
    %c0_15 = arith.constant 0 : index
    %c0_16 = arith.constant 0 : index
    %26 = vector.load %arg6[%c0_15, %c0_16] : memref<1x16xf32, #tpu.memory_space<vmem>>, vector<1x16xf32>
    tpu.vector_store %arg6[%c0_15, %c0_16], %25 {strides = array<i32>} : memref<1x16xf32, #tpu.memory_space<vmem>>, vector<1x16xf32>,
    return
  }
  func.func @transform_0(%arg0: i32, %arg1: memref<1xi32, #tpu.memory_space<smem>>) -> (i32, i32) {
    %c0_i32 = arith.constant 0 : i32
    %c0_i32_0 = arith.constant 0 : i32
    return %arg0, %c0_i32 : i32, i32
  }
  func.func @transform_1(%arg0: i32, %arg1: memref<1xi32, #tpu.memory_space<smem>>) -> (i32, i32) {
    %c0_i32 = arith.constant 0 : i32
    %c0_i32_0 = arith.constant 0 : i32
    %c0_i32_1 = arith.constant 0 : i32
    return %c0_i32, %c0_i32_0 : i32, i32
  }
  func.func @transform_2(%arg0: i32, %arg1: memref<1xi32, #tpu.memory_space<smem>>) -> (i32, i32) {
    %c0_i32 = arith.constant 0 : i32
    %c0_i32_0 = arith.constant 0 : i32
    %c0_i32_1 = arith.constant 0 : i32
    return %c0_i32, %c0_i32_0 : i32, i32
  }
  func.func @transform_3(%arg0: i32, %arg1: memref<1xi32, #tpu.memory_space<smem>>) -> (i32, i32) {
    %c0_i32 = arith.constant 0 : i32
    %c0_i32_0 = arith.constant 0 : i32
    %c0_i32_1 = arith.constant 0 : i32
    return %c0_i32, %c0_i32_0 : i32, i32
  }
  func.func @transform_4(%arg0: i32, %arg1: memref<1xi32, #tpu.memory_space<smem>>) -> (i32, i32) {
    %c0_i32 = arith.constant 0 : i32
    %c0_i32_0 = arith.constant 0 : i32
    %c0_i32_1 = arith.constant 0 : i32
    return %c0_i32, %c0_i32_0 : i32, i32
  }
}

</mosaic_0001>

<llo_original>
// kernel: tpu_custom_call.1
$region0: #{tpu_custom_call.1}
  #allocation0 [shape = 'u32[]', space=smem, size = 0x4, offset = 0x4, fixed_abs, tag = 'smem constant byte address 0x4 - core index']
  #allocation1 [shape = 'u32[144,128]{1,0:T(1,128)}', space=vmem, size = 0x12000, scoped, tag = 'internal scratch']
  #allocation2 [shape = 's32[1]{0}', space=sflag, size = 0x4, scoped, tag = 'scoped memory for tpu_custom_call.1']
  #allocation3 [shape = 's32[1]{0:T(128)S(6)}', space=smem, size = 0x200, scoped, tag = 'prefetched SMEM operand 0']
  %s0 = inlined_call_operand.<no memory space> [shape: s32[1], index: 0, kind: input, shape index: {}]
  %s1 = inlined_call_operand.vmem [shape: f32[1024,7], index: 1, kind: input, shape index: {}]
  %s2 = inlined_call_operand.vmem [shape: f32[7,16], index: 2, kind: input, shape index: {}]
  %s3 = inlined_call_operand.vmem [shape: f32[1,16], index: 3, kind: input, shape index: {}]
  %s4 = inlined_call_operand.hbm [shape: f32[1,16], index: 4, kind: output, shape index: {0}]
  %s5 = inlined_call_operand.hbm [shape: f32[1,16], index: 5, kind: output, shape index: {1}]
  %6 = xla_tuple %s4, %s5
  %s7 = sld [smem:[#allocation0]]
  $region57: #{tpu_custom_call.1} parent=0
    _
  %s9 = ssub.s32 1, %s7
  %s10 = scalar_select 0, %s9, %s7
  %11 = sst [smem:[#allocation3]] %s0
  $region1: #{tpu_custom_call.1} parent=0
    #allocation4 [shape = 'u8[512]{0}', space=vmem, size = 0x400, scoped, tag = 'output window, operand 0, single buffered']
    #allocation5 [shape = 's32[2]{0}', space=sflag, size = 0x8, scoped, tag = 'scoped memory for tpu_custom_call.1']
    #allocation6 [shape = 'u8[512]{0}', space=vmem, size = 0x400, scoped, tag = 'output window, operand 1, single buffered']
    #allocation7 [shape = 's32[1]{0}', space=sflag, size = 0x4, scoped, tag = 'scoped memory for tpu_custom_call.1']
    %12 = vsyncpa [#allocation5], 0
    %13 = vsyncpa [#allocation7], 0
    loop: start=0, step=1, limit=6
    $region2: #{tpu_custom_call.1} parent=1 // loop_pre_header
      _
    $region3: #{tpu_custom_call.1} parent=1 // loop_header
      %s15 = sphi 0, %s19
      %p16 = scmp.ge.s32.totalorder %s15, 6
      %s25 = sphi 0, %s27
      %s28 = sphi 0, %s25
      %s29 = sphi 0, %s28
      %s45 = sphi 0, %s29
      %s49 = sphi 0, %s49
      %s51 = sphi 0, %s49
      %s52 = sphi 0, %s51
      %s66 = sphi 0, %s52
      %s70 = sphi 0, %s70
      %s72 = sphi 0, %s70
      %s73 = sphi 0, %s72
      %s87 = sphi 0, %s73
      %s91 = sphi 0, %s91
      %s93 = sphi 0, %s91
      %s94 = sphi 0, %s93
      %s108 = sphi 0, %s94
      %s112 = sphi 0, %s112
      %s114 = sphi 0, %s112
      %s115 = sphi 0, %s114
      %s129 = sphi 0, %s115
    $region4: #{tpu_custom_call.1} parent=1 // loop_header_branch
      %18 = sbr.rel (%p16) target = $region8
    $region5: #{tpu_custom_call.1} parent=1 // loop_body
      %s20 = ssub.s32 %s15, 1
      %s21 = ssub.s32 %s15, 2
      %s22 = sadd.s32 %s15, 1
      %s23 = ssub.s32 %s15, %s22
      %p24 = scmp.eq.s32.totalorder %s23, 0
      %s26 = sadd.s32 %s25, 1
      %s27 = scalar_select %p24, %s25, %s26
      %p30 = pneg %p24
      %p31 = scmp.eq.s32.totalorder %s15, 3
      %p32 = por %p30, %p31
      %p33 = scmp.ne.s32.totalorder %s25, %s28
      %p34 = scmp.eq.s32.totalorder %s15, 0
      %p35 = por %p33, %p34
      %p36 = scmp.ne.s32.totalorder %s25, %s28
      %p37 = scmp.eq.s32.totalorder %s20, 3
      %p38 = por %p36, %p37
      %p39 = scmp.ne.s32.totalorder %s28, %s29
      %p40 = scmp.eq.s32.totalorder %s20, 0
      %p41 = por %p39, %p40
      %p42 = scmp.ne.s32.totalorder %s28, %s29
      %p43 = scmp.eq.s32.totalorder %s21, 3
      %p44 = por %p42, %p43
      %p46 = scmp.ne.s32.totalorder %s29, %s45
      %p47 = scmp.eq.s32.totalorder %s21, 0
      %p48 = por %p46, %p47
      %s50 = sadd.s32 %s49, 1
      %p53 = scmp.eq.s32.totalorder %s15, 3
      %p54 = scmp.ne.s32.totalorder %s49, %s51
      %p55 = scmp.eq.s32.totalorder %s15, 0
      %p56 = por %p54, %p55
      %p57 = scmp.ne.s32.totalorder %s49, %s51
      %p58 = scmp.eq.s32.totalorder %s20, 3
      %p59 = por %p57, %p58
      %p60 = scmp.ne.s32.totalorder %s51, %s52
      %p61 = scmp.eq.s32.totalorder %s20, 0
      %p62 = por %p60, %p61
      %p63 = scmp.ne.s32.totalorder %s51, %s52
      %p64 = scmp.eq.s32.totalorder %s21, 3
      %p65 = por %p63, %p64
      %p67 = scmp.ne.s32.totalorder %s52, %s66
      %p68 = scmp.eq.s32.totalorder %s21, 0
      %p69 = por %p67, %p68
      %s71 = sadd.s32 %s70, 1
      %p74 = scmp.eq.s32.totalorder %s15, 3
      %p75 = scmp.ne.s32.totalorder %s70, %s72
      %p76 = scmp.eq.s32.totalorder %s15, 0
      %p77 = por %p75, %p76
      %p78 = scmp.ne.s32.totalorder %s70, %s72
      %p79 = scmp.eq.s32.totalorder %s20, 3
      %p80 = por %p78, %p79
      %p81 = scmp.ne.s32.totalorder %s72, %s73
      %p82 = scmp.eq.s32.totalorder %s20, 0
      %p83 = por %p81, %p82
      %p84 = scmp.ne.s32.totalorder %s72, %s73
      %p85 = scmp.eq.s32.totalorder %s21, 3
      %p86 = por %p84, %p85
      %p88 = scmp.ne.s32.totalorder %s73, %s87
      %p89 = scmp.eq.s32.totalorder %s21, 0
      %p90 = por %p88, %p89
      %s92 = sadd.s32 %s91, 1
      %p95 = scmp.eq.s32.totalorder %s15, 3
      %p96 = scmp.ne.s32.totalorder %s91, %s93
      %p97 = scmp.eq.s32.totalorder %s15, 0
      %p98 = por %p96, %p97
      %p99 = scmp.ne.s32.totalorder %s91, %s93
      %p100 = scmp.eq.s32.totalorder %s20, 3
      %p101 = por %p99, %p100
      %p102 = scmp.ne.s32.totalorder %s93, %s94
      %p103 = scmp.eq.s32.totalorder %s20, 0
      %p104 = por %p102, %p103
      %p105 = scmp.ne.s32.totalorder %s93, %s94
      %p106 = scmp.eq.s32.totalorder %s21, 3
      %p107 = por %p105, %p106
      %p109 = scmp.ne.s32.totalorder %s94, %s108
      %p110 = scmp.eq.s32.totalorder %s21, 0
      %p111 = por %p109, %p110
      %s113 = sadd.s32 %s112, 1
      %p116 = scmp.eq.s32.totalorder %s15, 3
      %p117 = scmp.ne.s32.totalorder %s112, %s114
      %p118 = scmp.eq.s32.totalorder %s15, 0
      %p119 = por %p117, %p118
      %p120 = scmp.ne.s32.totalorder %s112, %s114
      %p121 = scmp.eq.s32.totalorder %s20, 3
      %p122 = por %p120, %p121
      %p123 = scmp.ne.s32.totalorder %s114, %s115
      %p124 = scmp.eq.s32.totalorder %s20, 0
      %p125 = por %p123, %p124
      %p126 = scmp.ne.s32.totalorder %s114, %s115
      %p127 = scmp.eq.s32.totalorder %s21, 3
      %p128 = por %p126, %p127
      %p130 = scmp.ne.s32.totalorder %s115, %s129
      %p131 = scmp.eq.s32.totalorder %s21, 0
      %p132 = por %p130, %p131
      %p133 = scmp.le.s32.totalorder 1, %s15
      %p134 = scmp.lt.s32.totalorder %s15, 5
      %p135 = pnand %p133, %p134
      %p136 = pneg %p135
      // Predicated region
      $region9: #{tpu_custom_call.1} parent=5 // pred_check
        _
      $region10: #{tpu_custom_call.1} parent=5 // pred_check_branch
        %138 = sbr.rel (%p135) target = $region12
      $region11: #{tpu_custom_call.1} parent=5 // pred_region
        %s139 = ssub.s32 %s15, 1
        // Predicated region
        $region13: #{tpu_custom_call.1} parent=11 // pred_check
          %p140 = pneg %p62
        $region14: #{tpu_custom_call.1} parent=11 // pred_check_branch
          %142 = sbr.rel (%p140) target = $region16
        $region15: #{tpu_custom_call.1} parent=11 // pred_region
          _
        $region16: #{tpu_custom_call.1} parent=11 // pred_fallthru
          _
        // Predicated region
        $region17: #{tpu_custom_call.1} parent=11 // pred_check
          %p143 = pneg %p83
        $region18: #{tpu_custom_call.1} parent=11 // pred_check_branch
          %145 = sbr.rel (%p143) target = $region20
        $region19: #{tpu_custom_call.1} parent=11 // pred_region
          _
        $region20: #{tpu_custom_call.1} parent=11 // pred_fallthru
          _
      $region12: #{tpu_custom_call.1} parent=5 // pred_fallthru
        _
      %p146 = scmp.lt.s32.totalorder %s15, 4
      // Predicated region
      $region21: #{tpu_custom_call.1} parent=5 // pred_check
        %p147 = pneg %p146
      $region22: #{tpu_custom_call.1} parent=5 // pred_check_branch
        %149 = sbr.rel (%p147) target = $region24
      $region23: #{tpu_custom_call.1} parent=5 // pred_region
        // Predicated region
        $region25: #{tpu_custom_call.1} parent=23 // pred_check
          %p150 = pneg %p35
        $region26: #{tpu_custom_call.1} parent=23 // pred_check_branch
          %152 = sbr.rel (%p150) target = $region28
        $region27: #{tpu_custom_call.1} parent=23 // pred_region
          %s153 = smul.u32 32, %s15
          %p154 = scmp.lt.s32.totalorder %s153, 127
          %s155 = scalar_select %p154, %s153, 127
          %s156 = smul.addr %s155, 8
          %s157 = scalar_lea.vmem %s1, %s156
          %s158 = smul.u32 32, %s15
        $region28: #{tpu_custom_call.1} parent=23 // pred_fallthru
          _
      $region24: #{tpu_custom_call.1} parent=5 // pred_fallthru
        _
      %p159 = scmp.le.s32.totalorder 1, %s15
      %p160 = scmp.lt.s32.totalorder %s15, 5
      %p161 = pnand %p159, %p160
      %p162 = pneg %p161
      // Predicated region
      $region29: #{tpu_custom_call.1} parent=5 // pred_check
        _
      $region30: #{tpu_custom_call.1} parent=5 // pred_check_branch
        %164 = sbr.rel (%p161) target = $region32
      $region31: #{tpu_custom_call.1} parent=5 // pred_region
        %s165 = ssub.s32 %s15, 1
        %s166 = smul.u32 32, %s20
        %p167 = scmp.lt.s32.totalorder %s166, 127
        %s168 = scalar_select %p167, %s166, 127
        %s169 = smul.addr %s168, 8
        %s170 = scalar_lea.vmem %s1, %s169
        %p171 = pneg %p41
        %p172 = pneg %p38
        %p173 = pneg %p62
        %p174 = pneg %p59
        %p175 = pneg %p83
        %p176 = pneg %p80
        %p177 = pneg %p104
        %p178 = pneg %p101
        %p179 = pneg %p125
        %p180 = pneg %p122
        %s181 = smul.u32 32, %s20
        %p182 = scmp.lt.s32.totalorder %s181, 127
        %s183 = scalar_select %p182, %s181, 127
        %s184 = smul.addr %s183, 8
        %s185 = scalar_lea.vmem %s1, %s184
        %s186 = smul.u32 32, %s20
        %p187 = scmp.eq.s32.totalorder %s20, 0
        // Predicated region
        $region33: #{tpu_custom_call.1} parent=31 // pred_check
          %p188 = pneg %p187
        $region34: #{tpu_custom_call.1} parent=31 // pred_check_branch
          %190 = sbr.rel (%p188) target = $region36
        $region35: #{tpu_custom_call.1} parent=31 // pred_region
          %vm191 = vcmask 122880
          %192 = vst.msk [vmem:[#allocation4] sm:$0x1] %vm191, 0.0
          %193 = vst.msk [vmem:[#allocation6] sm:$0x1] %vm191, 0.0
        $region36: #{tpu_custom_call.1} parent=31 // pred_fallthru
          _
        %v194 = vld [vmem:[%s185] sm:$0xff]
        %v195 = vld [vmem:[%s185 + $0x8] sm:$0xff]
        %v196 = vld [vmem:[%s185 + $0x10] sm:$0xff]
        %v197 = vld [vmem:[%s185 + $0x18] sm:$0xff]
        %v198 = vld [vmem:[%s185 + $0x20] sm:$0xff]
        %v199 = vld [vmem:[%s185 + $0x28] sm:$0xff]
        %v200 = vld [vmem:[%s185 + $0x30] sm:$0xff]
        %v201 = vld [vmem:[%s185 + $0x38] sm:$0xff]
        %v202 = vld [vmem:[%s185 + $0x40] sm:$0xff]
        %v203 = vld [vmem:[%s185 + $0x48] sm:$0xff]
        %v204 = vld [vmem:[%s185 + $0x50] sm:$0xff]
        %v205 = vld [vmem:[%s185 + $0x58] sm:$0xff]
        %v206 = vld [vmem:[%s185 + $0x60] sm:$0xff]
        %v207 = vld [vmem:[%s185 + $0x68] sm:$0xff]
        %v208 = vld [vmem:[%s185 + $0x70] sm:$0xff]
        %v209 = vld [vmem:[%s185 + $0x78] sm:$0xff]
        %v210 = vld [vmem:[%s185 + $0x80] sm:$0xff]
        %v211 = vld [vmem:[%s185 + $0x88] sm:$0xff]
        %v212 = vld [vmem:[%s185 + $0x90] sm:$0xff]
        %v213 = vld [vmem:[%s185 + $0x98] sm:$0xff]
        %v214 = vld [vmem:[%s185 + $0xa0] sm:$0xff]
        %v215 = vld [vmem:[%s185 + $0xa8] sm:$0xff]
        %v216 = vld [vmem:[%s185 + $0xb0] sm:$0xff]
        %v217 = vld [vmem:[%s185 + $0xb8] sm:$0xff]
        %v218 = vld [vmem:[%s185 + $0xc0] sm:$0xff]
        %v219 = vld [vmem:[%s185 + $0xc8] sm:$0xff]
        %v220 = vld [vmem:[%s185 + $0xd0] sm:$0xff]
        %v221 = vld [vmem:[%s185 + $0xd8] sm:$0xff]
        %v222 = vld [vmem:[%s185 + $0xe0] sm:$0xff]
        %v223 = vld [vmem:[%s185 + $0xe8] sm:$0xff]
        %v224 = vld [vmem:[%s185 + $0xf0] sm:$0xff]
        %v225 = vld [vmem:[%s185 + $0xf8] sm:$0xff]
        %v226 = vld [vmem:[%s2] sm:$0x7f]
        %v227 = vld [vmem:[%s3] sm:$0x1]
        %v229 = vlaneseq
        %v230 = vshrl.u32 %v229, 7
        %v231 = vsub.s32 0, %v230
        %v232 = vrot.slane %v227, %v231
        %vm234 = vcmask 56320
        %v236 = vsel %vm234, %v194, 0
        %v239 = vsel %vm234, %v195, 0
        %v242 = vsel %vm234, %v196, 0
        %v245 = vsel %vm234, %v197, 0
        %v248 = vsel %vm234, %v198, 0
        %v251 = vsel %vm234, %v199, 0
        %v254 = vsel %vm234, %v200, 0
        %v257 = vsel %vm234, %v201, 0
        %v260 = vsel %vm234, %v202, 0
        %v263 = vsel %vm234, %v203, 0
        %v266 = vsel %vm234, %v204, 0
        %v269 = vsel %vm234, %v205, 0
        %v272 = vsel %vm234, %v206, 0
        %v275 = vsel %vm234, %v207, 0
        %v278 = vsel %vm234, %v208, 0
        %v281 = vsel %vm234, %v209, 0
        %v284 = vsel %vm234, %v210, 0
        %v287 = vsel %vm234, %v211, 0
        %v290 = vsel %vm234, %v212, 0
        %v293 = vsel %vm234, %v213, 0
        %v296 = vsel %vm234, %v214, 0
        %v299 = vsel %vm234, %v215, 0
        %v302 = vsel %vm234, %v216, 0
        %v305 = vsel %vm234, %v217, 0
        %v308 = vsel %vm234, %v218, 0
        %v311 = vsel %vm234, %v219, 0
        %v314 = vsel %vm234, %v220, 0
        %v317 = vsel %vm234, %v221, 0
        %v320 = vsel %vm234, %v222, 0
        %v323 = vsel %vm234, %v223, 0
        %v326 = vsel %vm234, %v224, 0
        %v329 = vsel %vm234, %v225, 0
        %vm331 = vcmask 1046528
        %v333 = vsel %vm331, %v226, 0
        %335 = vmatprep.subr.mxu0 0.0
        %v336 = vand.u32 %v333, 4294901760
        %337 = vmatpush1.msra.mxu0 %v336
        %338 = vmatprep.subr.mxu0 0.0
        %339 = vmatpush1.msra.mxu0 0.0
        %340 = vmatprep.subr.mxu0 0.0
        %341 = vmatpush1.msra.mxu0 0.0
        %342 = vmatprep.subr.mxu0 0.0
        %343 = vmatpush1.msra.mxu0 0.0
        %344 = vmatprep.subr.mxu0 0.0
        %345 = vmatpush1.msra.mxu0 0.0
        %346 = vmatprep.subr.mxu0 0.0
        %347 = vmatpush1.msra.mxu0 0.0
        %348 = vmatprep.subr.mxu0 0.0
        %349 = vmatpush1.msra.mxu0 0.0
        %350 = vmatprep.subr.mxu0 0.0
        %351 = vmatpush1.msra.mxu0 0.0
        %352 = vmatprep.subr.mxu0 0.0
        %353 = vmatpush1.msra.mxu0 0.0
        %354 = vmatprep.subr.mxu0 0.0
        %355 = vmatpush1.msra.mxu0 0.0
        %356 = vmatprep.subr.mxu0 0.0
        %357 = vmatpush1.msra.mxu0 0.0
        %358 = vmatprep.subr.mxu0 0.0
        %359 = vmatpush1.msra.mxu0 0.0
        %360 = vmatprep.subr.mxu0 0.0
        %361 = vmatpush1.msra.mxu0 0.0
        %362 = vmatprep.subr.mxu0 0.0
        %363 = vmatpush1.msra.mxu0 0.0
        %364 = vmatprep.subr.mxu0 0.0
        %365 = vmatpush1.msra.mxu0 0.0
        %366 = vmatprep.subr.mxu0 0.0
        %367 = vmatpush1.msra.mxu0 0.0
        %368 = vmatprep.subr.mxu0 0.0
        %369 = vmatpush1.msra.mxu0 0.0
        %370 = vmatprep.subr.mxu0 0.0
        %371 = vmatpush1.msra.mxu0 0.0
        %372 = vmatprep.subr.mxu0 0.0
        %373 = vmatpush1.msra.mxu0 0.0
        %374 = vmatprep.subr.mxu0 0.0
        %375 = vmatpush1.msra.mxu0 0.0
        %376 = vmatprep.subr.mxu0 0.0
        %377 = vmatpush1.msra.mxu0 0.0
        %378 = vmatprep.subr.mxu0 0.0
        %379 = vmatpush1.msra.mxu0 0.0
        %380 = vmatprep.subr.mxu0 0.0
        %381 = vmatpush1.msra.mxu0 0.0
        %382 = vmatprep.subr.mxu0 0.0
        %383 = vmatpush1.msra.mxu0 0.0
        %384 = vmatprep.subr.mxu0 0.0
        %385 = vmatpush1.msra.mxu0 0.0
        %386 = vmatprep.subr.mxu0 0.0
        %387 = vmatpush1.msra.mxu0 0.0
        %388 = vmatprep.subr.mxu0 0.0
        %389 = vmatpush1.msra.mxu0 0.0
        %390 = vmatprep.subr.mxu0 0.0
        %391 = vmatpush1.msra.mxu0 0.0
        %392 = vmatprep.subr.mxu0 0.0
        %393 = vmatpush1.msra.mxu0 0.0
        %394 = vmatprep.subr.mxu0 0.0
        %395 = vmatpush1.msra.mxu0 0.0
        %396 = vmatprep.subr.mxu0 0.0
        %397 = vmatpush1.msra.mxu0 0.0
        %398 = vmatprep.subr.mxu0 0.0
        %399 = vmatpush1.msra.mxu0 0.0
        %400 = vmatprep.mubr.f32.mxu0 0.0
        %v401 = vand.u32 %v236, 4294901760
        %v402 = vsub.f32 %v236, %v401
        %v403 = vand.u32 %v402, 4294901760
        %v404 = vsub.f32 %v402, %v403
        %v405 = vand.u32 %v404, 4294901760
        %406 = vmatmul.mubr.f32.gmra.mrb[0].mxu0 %v405
        %v407 = vpop.f32.mrb[0].mxu0
        %v408 = vadd.f32 %v232, %v407
        %v409 = vpop.f32.mrb[0].mxu0
        %410 = vmatprep.mubr.f32.mxu0 0.0
        %v411 = vand.u32 %v239, 4294901760
        %v412 = vsub.f32 %v239, %v411
        %v413 = vand.u32 %v412, 4294901760
        %v414 = vsub.f32 %v412, %v413
        %v415 = vand.u32 %v414, 4294901760
        %416 = vmatmul.mubr.f32.gmra.mrb[0].mxu0 %v415
        %v417 = vpop.f32.mrb[0].mxu0
        %v418 = vadd.f32 %v232, %v417
        %v419 = vpop.f32.mrb[0].mxu0
        %420 = vmatprep.mubr.f32.mxu0 0.0
        %v421 = vand.u32 %v242, 4294901760
        %v422 = vsub.f32 %v242, %v421
        %v423 = vand.u32 %v422, 4294901760
        %v424 = vsub.f32 %v422, %v423
        %v425 = vand.u32 %v424, 4294901760
        %426 = vmatmul.mubr.f32.gmra.mrb[0].mxu0 %v425
        %v427 = vpop.f32.mrb[0].mxu0
        %v428 = vadd.f32 %v232, %v427
        %v429 = vpop.f32.mrb[0].mxu0
        %430 = vmatprep.mubr.f32.mxu0 0.0
        %v431 = vand.u32 %v245, 4294901760
        %v432 = vsub.f32 %v245, %v431
        %v433 = vand.u32 %v432, 4294901760
        %v434 = vsub.f32 %v432, %v433
        %v435 = vand.u32 %v434, 4294901760
        %436 = vmatmul.mubr.f32.gmra.mrb[0].mxu0 %v435
        %v437 = vpop.f32.mrb[0].mxu0
        %v438 = vadd.f32 %v232, %v437
        %v439 = vpop.f32.mrb[0].mxu0
        %440 = vmatprep.mubr.f32.mxu0 0.0
        %v441 = vand.u32 %v248, 4294901760
        %v442 = vsub.f32 %v248, %v441
        %v443 = vand.u32 %v442, 4294901760
        %v444 = vsub.f32 %v442, %v443
        %v445 = vand.u32 %v444, 4294901760
        %446 = vmatmul.mubr.f32.gmra.mrb[0].mxu0 %v445
        %v447 = vpop.f32.mrb[0].mxu0
        %v448 = vadd.f32 %v232, %v447
        %v449 = vpop.f32.mrb[0].mxu0
        %450 = vmatprep.mubr.f32.mxu0 0.0
        %v451 = vand.u32 %v251, 4294901760
        %v452 = vsub.f32 %v251, %v451
        %v453 = vand.u32 %v452, 4294901760
        %v454 = vsub.f32 %v452, %v453
        %v455 = vand.u32 %v454, 4294901760
        %456 = vmatmul.mubr.f32.gmra.mrb[0].mxu0 %v455
        %v457 = vpop.f32.mrb[0].mxu0
        %v458 = vadd.f32 %v232, %v457
        %v459 = vpop.f32.mrb[0].mxu0
        %460 = vmatprep.mubr.f32.mxu0 0.0
        %v461 = vand.u32 %v254, 4294901760
        %v462 = vsub.f32 %v254, %v461
        %v463 = vand.u32 %v462, 4294901760
        %v464 = vsub.f32 %v462, %v463
        %v465 = vand.u32 %v464, 4294901760
        %466 = vmatmul.mubr.f32.gmra.mrb[0].mxu0 %v465
        %v467 = vpop.f32.mrb[0].mxu0
        %v468 = vadd.f32 %v232, %v467
        %v469 = vpop.f32.mrb[0].mxu0
        %470 = vmatprep.mubr.f32.mxu0 0.0
        %v471 = vand.u32 %v257, 4294901760
        %v472 = vsub.f32 %v257, %v471
        %v473 = vand.u32 %v472, 4294901760
        %v474 = vsub.f32 %v472, %v473
        %v475 = vand.u32 %v474, 4294901760
        %476 = vmatmul.mubr.f32.gmra.mrb[0].mxu0 %v475
        %v477 = vpop.f32.mrb[0].mxu0
        %v478 = vadd.f32 %v232, %v477
        %v479 = vpop.f32.mrb[0].mxu0
        %480 = vmatprep.mubr.f32.mxu0 0.0
        %v481 = vand.u32 %v260, 4294901760
        %v482 = vsub.f32 %v260, %v481
        %v483 = vand.u32 %v482, 4294901760
        %v484 = vsub.f32 %v482, %v483
        %v485 = vand.u32 %v484, 4294901760
        %486 = vmatmul.mubr.f32.gmra.mrb[0].mxu0 %v485
        %v487 = vpop.f32.mrb[0].mxu0
        %v488 = vadd.f32 %v232, %v487
        %v489 = vpop.f32.mrb[0].mxu0
        %490 = vmatprep.mubr.f32.mxu0 0.0
        %v491 = vand.u32 %v263, 4294901760
        %v492 = vsub.f32 %v263, %v491
        %v493 = vand.u32 %v492, 4294901760
        %v494 = vsub.f32 %v492, %v493
        %v495 = vand.u32 %v494, 4294901760
        %496 = vmatmul.mubr.f32.gmra.mrb[0].mxu0 %v495
        %v497 = vpop.f32.mrb[0].mxu0
        %v498 = vadd.f32 %v232, %v497
        %v499 = vpop.f32.mrb[0].mxu0
        %500 = vmatprep.mubr.f32.mxu0 0.0
        %v501 = vand.u32 %v266, 4294901760
        %v502 = vsub.f32 %v266, %v501
        %v503 = vand.u32 %v502, 4294901760
        %v504 = vsub.f32 %v502, %v503
        %v505 = vand.u32 %v504, 4294901760
        %506 = vmatmul.mubr.f32.gmra.mrb[0].mxu0 %v505
        %v507 = vpop.f32.mrb[0].mxu0
        %v508 = vadd.f32 %v232, %v507
        %v509 = vpop.f32.mrb[0].mxu0
        %510 = vmatprep.mubr.f32.mxu0 0.0
        %v511 = vand.u32 %v269, 4294901760
        %v512 = vsub.f32 %v269, %v511
        %v513 = vand.u32 %v512, 4294901760
        %v514 = vsub.f32 %v512, %v513
        %v515 = vand.u32 %v514, 4294901760
        %516 = vmatmul.mubr.f32.gmra.mrb[0].mxu0 %v515
        %v517 = vpop.f32.mrb[0].mxu0
        %v518 = vadd.f32 %v232, %v517
        %v519 = vpop.f32.mrb[0].mxu0
        %520 = vmatprep.mubr.f32.mxu0 0.0
        %v521 = vand.u32 %v272, 4294901760
        %v522 = vsub.f32 %v272, %v521
        %v523 = vand.u32 %v522, 4294901760
        %v524 = vsub.f32 %v522, %v523
        %v525 = vand.u32 %v524, 4294901760
        %526 = vmatmul.mubr.f32.gmra.mrb[0].mxu0 %v525
        %v527 = vpop.f32.mrb[0].mxu0
        %v528 = vadd.f32 %v232, %v527
        %v529 = vpop.f32.mrb[0].mxu0
        %530 = vmatprep.mubr.f32.mxu0 0.0
        %v531 = vand.u32 %v275, 4294901760
        %v532 = vsub.f32 %v275, %v531
        %v533 = vand.u32 %v532, 4294901760
        %v534 = vsub.f32 %v532, %v533
        %v535 = vand.u32 %v534, 4294901760
        %536 = vmatmul.mubr.f32.gmra.mrb[0].mxu0 %v535
        %v537 = vpop.f32.mrb[0].mxu0
        %v538 = vadd.f32 %v232, %v537
        %v539 = vpop.f32.mrb[0].mxu0
        %540 = vmatprep.mubr.f32.mxu0 0.0
        %v541 = vand.u32 %v278, 4294901760
        %v542 = vsub.f32 %v278, %v541
        %v543 = vand.u32 %v542, 4294901760
        %v544 = vsub.f32 %v542, %v543
        %v545 = vand.u32 %v544, 4294901760
        %546 = vmatmul.mubr.f32.gmra.mrb[0].mxu0 %v545
        %v547 = vpop.f32.mrb[0].mxu0
        %v548 = vadd.f32 %v232, %v547
        %v549 = vpop.f32.mrb[0].mxu0
        %550 = vmatprep.mubr.f32.mxu0 0.0
        %v551 = vand.u32 %v281, 4294901760
        %v552 = vsub.f32 %v281, %v551
        %v553 = vand.u32 %v552, 4294901760
        %v554 = vsub.f32 %v552, %v553
        %v555 = vand.u32 %v554, 4294901760
        %556 = vmatmul.mubr.f32.gmra.mrb[0].mxu0 %v555
        %v557 = vpop.f32.mrb[0].mxu0
        %v558 = vadd.f32 %v232, %v557
        %v559 = vpop.f32.mrb[0].mxu0
        %560 = vmatprep.mubr.f32.mxu0 0.0
        %v561 = vand.u32 %v284, 4294901760
        %v562 = vsub.f32 %v284, %v561
        %v563 = vand.u32 %v562, 4294901760
        %v564 = vsub.f32 %v562, %v563
        %v565 = vand.u32 %v564, 4294901760
        %566 = vmatmul.mubr.f32.gmra.mrb[0].mxu0 %v565
        %v567 = vpop.f32.mrb[0].mxu0
        %v568 = vadd.f32 %v232, %v567
        %v569 = vpop.f32.mrb[0].mxu0
        %570 = vmatprep.mubr.f32.mxu0 0.0
        %v571 = vand.u32 %v287, 4294901760
        %v572 = vsub.f32 %v287, %v571
        %v573 = vand.u32 %v572, 4294901760
        %v574 = vsub.f32 %v572, %v573
        %v575 = vand.u32 %v574, 4294901760
        %576 = vmatmul.mubr.f32.gmra.mrb[0].mxu0 %v575
        %v577 = vpop.f32.mrb[0].mxu0
        %v578 = vadd.f32 %v232, %v577
        %v579 = vpop.f32.mrb[0].mxu0
        %580 = vmatprep.mubr.f32.mxu0 0.0
        %v581 = vand.u32 %v290, 4294901760
        %v582 = vsub.f32 %v290, %v581
        %v583 = vand.u32 %v582, 4294901760
        %v584 = vsub.f32 %v582, %v583
        %v585 = vand.u32 %v584, 4294901760
        %586 = vmatmul.mubr.f32.gmra.mrb[0].mxu0 %v585
        %v587 = vpop.f32.mrb[0].mxu0
        %v588 = vadd.f32 %v232, %v587
        %v589 = vpop.f32.mrb[0].mxu0
        %590 = vmatprep.mubr.f32.mxu0 0.0
        %v591 = vand.u32 %v293, 4294901760
        %v592 = vsub.f32 %v293, %v591
        %v593 = vand.u32 %v592, 4294901760
        %v594 = vsub.f32 %v592, %v593
        %v595 = vand.u32 %v594, 4294901760
        %596 = vmatmul.mubr.f32.gmra.mrb[0].mxu0 %v595
        %v597 = vpop.f32.mrb[0].mxu0
        %v598 = vadd.f32 %v232, %v597
        %v599 = vpop.f32.mrb[0].mxu0
        %600 = vmatprep.mubr.f32.mxu0 0.0
        %v601 = vand.u32 %v296, 4294901760
        %v602 = vsub.f32 %v296, %v601
        %v603 = vand.u32 %v602, 4294901760
        %v604 = vsub.f32 %v602, %v603
        %v605 = vand.u32 %v604, 4294901760
        %606 = vmatmul.mubr.f32.gmra.mrb[0].mxu0 %v605
        %v607 = vpop.f32.mrb[0].mxu0
        %v608 = vadd.f32 %v232, %v607
        %v609 = vpop.f32.mrb[0].mxu0
        %610 = vmatprep.mubr.f32.mxu0 0.0
        %v611 = vand.u32 %v299, 4294901760
        %v612 = vsub.f32 %v299, %v611
        %v613 = vand.u32 %v612, 4294901760
        %v614 = vsub.f32 %v612, %v613
        %v615 = vand.u32 %v614, 4294901760
        %616 = vmatmul.mubr.f32.gmra.mrb[0].mxu0 %v615
        %v617 = vpop.f32.mrb[0].mxu0
        %v618 = vadd.f32 %v232, %v617
        %v619 = vpop.f32.mrb[0].mxu0
        %620 = vmatprep.mubr.f32.mxu0 0.0
        %v621 = vand.u32 %v302, 4294901760
        %v622 = vsub.f32 %v302, %v621
        %v623 = vand.u32 %v622, 4294901760
        %v624 = vsub.f32 %v622, %v623
        %v625 = vand.u32 %v624, 4294901760
        %626 = vmatmul.mubr.f32.gmra.mrb[0].mxu0 %v625
        %v627 = vpop.f32.mrb[0].mxu0
        %v628 = vadd.f32 %v232, %v627
        %v629 = vpop.f32.mrb[0].mxu0
        %630 = vmatprep.mubr.f32.mxu0 0.0
        %v631 = vand.u32 %v305, 4294901760
        %v632 = vsub.f32 %v305, %v631
        %v633 = vand.u32 %v632, 4294901760
        %v634 = vsub.f32 %v632, %v633
        %v635 = vand.u32 %v634, 4294901760
        %636 = vmatmul.mubr.f32.gmra.mrb[0].mxu0 %v635
        %v637 = vpop.f32.mrb[0].mxu0
        %v638 = vadd.f32 %v232, %v637
        %v639 = vpop.f32.mrb[0].mxu0
        %640 = vmatprep.mubr.f32.mxu0 0.0
        %v641 = vand.u32 %v308, 4294901760
        %v642 = vsub.f32 %v308, %v641
        %v643 = vand.u32 %v642, 4294901760
        %v644 = vsub.f32 %v642, %v643
        %v645 = vand.u32 %v644, 4294901760
        %646 = vmatmul.mubr.f32.gmra.mrb[0].mxu0 %v645
        %v647 = vpop.f32.mrb[0].mxu0
        %v648 = vadd.f32 %v232, %v647
        %v649 = vpop.f32.mrb[0].mxu0
        %650 = vmatprep.mubr.f32.mxu0 0.0
        %v651 = vand.u32 %v311, 4294901760
        %v652 = vsub.f32 %v311, %v651
        %v653 = vand.u32 %v652, 4294901760
        %v654 = vsub.f32 %v652, %v653
        %v655 = vand.u32 %v654, 4294901760
        %656 = vmatmul.mubr.f32.gmra.mrb[0].mxu0 %v655
        %v657 = vpop.f32.mrb[0].mxu0
        %v658 = vadd.f32 %v232, %v657
        %v659 = vpop.f32.mrb[0].mxu0
        %660 = vmatprep.mubr.f32.mxu0 0.0
        %v661 = vand.u32 %v314, 4294901760
        %v662 = vsub.f32 %v314, %v661
        %v663 = vand.u32 %v662, 4294901760
        %v664 = vsub.f32 %v662, %v663
        %v665 = vand.u32 %v664, 4294901760
        %666 = vmatmul.mubr.f32.gmra.mrb[0].mxu0 %v665
        %v667 = vpop.f32.mrb[0].mxu0
        %v668 = vadd.f32 %v232, %v667
        %v669 = vpop.f32.mrb[0].mxu0
        %670 = vmatprep.mubr.f32.mxu0 0.0
        %v671 = vand.u32 %v317, 4294901760
        %v672 = vsub.f32 %v317, %v671
        %v673 = vand.u32 %v672, 4294901760
        %v674 = vsub.f32 %v672, %v673
        %v675 = vand.u32 %v674, 4294901760
        %676 = vmatmul.mubr.f32.gmra.mrb[0].mxu0 %v675
        %v677 = vpop.f32.mrb[0].mxu0
        %v678 = vadd.f32 %v232, %v677
        %v679 = vpop.f32.mrb[0].mxu0
        %680 = vmatprep.mubr.f32.mxu0 0.0
        %v681 = vand.u32 %v320, 4294901760
        %v682 = vsub.f32 %v320, %v681
        %v683 = vand.u32 %v682, 4294901760
        %v684 = vsub.f32 %v682, %v683
        %v685 = vand.u32 %v684, 4294901760
        %686 = vmatmul.mubr.f32.gmra.mrb[0].mxu0 %v685
        %v687 = vpop.f32.mrb[0].mxu0
        %v688 = vadd.f32 %v232, %v687
        %v689 = vpop.f32.mrb[0].mxu0
        %690 = vmatprep.mubr.f32.mxu0 0.0
        %v691 = vand.u32 %v323, 4294901760
        %v692 = vsub.f32 %v323, %v691
        %v693 = vand.u32 %v692, 4294901760
        %v694 = vsub.f32 %v692, %v693
        %v695 = vand.u32 %v694, 4294901760
        %696 = vmatmul.mubr.f32.gmra.mrb[0].mxu0 %v695
        %v697 = vpop.f32.mrb[0].mxu0
        %v698 = vadd.f32 %v232, %v697
        %v699 = vpop.f32.mrb[0].mxu0
        %700 = vmatprep.mubr.f32.mxu0 0.0
        %v701 = vand.u32 %v326, 4294901760
        %v702 = vsub.f32 %v326, %v701
        %v703 = vand.u32 %v702, 4294901760
        %v704 = vsub.f32 %v702, %v703
        %v705 = vand.u32 %v704, 4294901760
        %706 = vmatmul.mubr.f32.gmra.mrb[0].mxu0 %v705
        %v707 = vpop.f32.mrb[0].mxu0
        %v708 = vadd.f32 %v232, %v707
        %v709 = vpop.f32.mrb[0].mxu0
        %710 = vmatprep.mubr.f32.mxu0 0.0
        %v711 = vand.u32 %v329, 4294901760
        %v712 = vsub.f32 %v329, %v711
        %v713 = vand.u32 %v712, 4294901760
        %v714 = vsub.f32 %v712, %v713
        %v715 = vand.u32 %v714, 4294901760
        %716 = vmatmul.mubr.f32.gmra.mrb[0].mxu0 %v715
        %v717 = vpop.f32.mrb[0].mxu0
        %v718 = vadd.f32 %v232, %v717
        %v719 = vpop.f32.mrb[0].mxu0
        %720 = vdwg.mxu0
        %721 = vmatprep.subr.mxu0 0.0
        %v722 = vand.u32 %v333, 4294901760
        %v723 = vsub.f32 %v333, %v722
        %v724 = vand.u32 %v723, 4294901760
        %v725 = vsub.f32 %v723, %v724
        %v726 = vand.u32 %v725, 4294901760
        %727 = vmatpush1.msra.mxu0 %v726
        %728 = vmatprep.subr.mxu0 0.0
        %729 = vmatpush1.msra.mxu0 0.0
        %730 = vmatprep.subr.mxu0 0.0
        %731 = vmatpush1.msra.mxu0 0.0
        %732 = vmatprep.subr.mxu0 0.0
        %733 = vmatpush1.msra.mxu0 0.0
        %734 = vmatprep.subr.mxu0 0.0
        %735 = vmatpush1.msra.mxu0 0.0
        %736 = vmatprep.subr.mxu0 0.0
        %737 = vmatpush1.msra.mxu0 0.0
        %738 = vmatprep.subr.mxu0 0.0
        %739 = vmatpush1.msra.mxu0 0.0
        %740 = vmatprep.subr.mxu0 0.0
        %741 = vmatpush1.msra.mxu0 0.0
        %742 = vmatprep.subr.mxu0 0.0
        %743 = vmatpush1.msra.mxu0 0.0
        %744 = vmatprep.subr.mxu0 0.0
        %745 = vmatpush1.msra.mxu0 0.0
        %746 = vmatprep.subr.mxu0 0.0
        %747 = vmatpush1.msra.mxu0 0.0
        %748 = vmatprep.subr.mxu0 0.0
        %749 = vmatpush1.msra.mxu0 0.0
        %750 = vmatprep.subr.mxu0 0.0
        %751 = vmatpush1.msra.mxu0 0.0
        %752 = vmatprep.subr.mxu0 0.0
        %753 = vmatpush1.msra.mxu0 0.0
        %754 = vmatprep.subr.mxu0 0.0
        %755 = vmatpush1.msra.mxu0 0.0
        %756 = vmatprep.subr.mxu0 0.0
        %757 = vmatpush1.msra.mxu0 0.0
        %758 = vmatprep.subr.mxu0 0.0
        %759 = vmatpush1.msra.mxu0 0.0
        %760 = vmatprep.subr.mxu0 0.0
        %761 = vmatpush1.msra.mxu0 0.0
        %762 = vmatprep.subr.mxu0 0.0
        %763 = vmatpush1.msra.mxu0 0.0
        %764 = vmatprep.subr.mxu0 0.0
        %765 = vmatpush1.msra.mxu0 0.0
        %766 = vmatprep.subr.mxu0 0.0
        %767 = vmatpush1.msra.mxu0 0.0
        %768 = vmatprep.subr.mxu0 0.0
        %769 = vmatpush1.msra.mxu0 0.0
        %770 = vmatprep.subr.mxu0 0.0
        %771 = vmatpush1.msra.mxu0 0.0
        %772 = vmatprep.subr.mxu0 0.0
        %773 = vmatpush1.msra.mxu0 0.0
        %774 = vmatprep.subr.mxu0 0.0
        %775 = vmatpush1.msra.mxu0 0.0
        %776 = vmatprep.subr.mxu0 0.0
        %777 = vmatpush1.msra.mxu0 0.0
        %778 = vmatprep.subr.mxu0 0.0
        %779 = vmatpush1.msra.mxu0 0.0
        %780 = vmatprep.subr.mxu0 0.0
        %781 = vmatpush1.msra.mxu0 0.0
        %782 = vmatprep.subr.mxu0 0.0
        %783 = vmatpush1.msra.mxu0 0.0
        %784 = vmatprep.subr.mxu0 0.0
        %785 = vmatpush1.msra.mxu0 0.0
        %786 = vmatprep.subr.mxu0 0.0
        %787 = vmatpush1.msra.mxu0 0.0
        %788 = vmatprep.subr.mxu0 0.0
        %789 = vmatpush1.msra.mxu0 0.0
        %790 = vmatprep.mubr.f32.mxu0 0.0
        %v791 = vand.u32 %v236, 4294901760
        %792 = vmatmul.mubr.f32.gmra.mrb[0].mxu0 %v791
        %v793 = vpop.f32.mrb[0].mxu0
        %v794 = vadd.f32 %v408, %v793
        %v795 = vpop.f32.mrb[0].mxu0
        %796 = vmatprep.mubr.f32.mxu0 0.0
        %v797 = vand.u32 %v239, 4294901760
        %798 = vmatmul.mubr.f32.gmra.mrb[0].mxu0 %v797
        %v799 = vpop.f32.mrb[0].mxu0
        %v800 = vadd.f32 %v418, %v799
        %v801 = vpop.f32.mrb[0].mxu0
        %802 = vmatprep.mubr.f32.mxu0 0.0
        %v803 = vand.u32 %v242, 4294901760
        %804 = vmatmul.mubr.f32.gmra.mrb[0].mxu0 %v803
        %v805 = vpop.f32.mrb[0].mxu0
        %v806 = vadd.f32 %v428, %v805
        %v807 = vpop.f32.mrb[0].mxu0
        %808 = vmatprep.mubr.f32.mxu0 0.0
        %v809 = vand.u32 %v245, 4294901760
        %810 = vmatmul.mubr.f32.gmra.mrb[0].mxu0 %v809
        %v811 = vpop.f32.mrb[0].mxu0
        %v812 = vadd.f32 %v438, %v811
        %v813 = vpop.f32.mrb[0].mxu0
        %814 = vmatprep.mubr.f32.mxu0 0.0
        %v815 = vand.u32 %v248, 4294901760
        %816 = vmatmul.mubr.f32.gmra.mrb[0].mxu0 %v815
        %v817 = vpop.f32.mrb[0].mxu0
        %v818 = vadd.f32 %v448, %v817
        %v819 = vpop.f32.mrb[0].mxu0
        %820 = vmatprep.mubr.f32.mxu0 0.0
        %v821 = vand.u32 %v251, 4294901760
        %822 = vmatmul.mubr.f32.gmra.mrb[0].mxu0 %v821
        %v823 = vpop.f32.mrb[0].mxu0
        %v824 = vadd.f32 %v458, %v823
        %v825 = vpop.f32.mrb[0].mxu0
        %826 = vmatprep.mubr.f32.mxu0 0.0
        %v827 = vand.u32 %v254, 4294901760
        %828 = vmatmul.mubr.f32.gmra.mrb[0].mxu0 %v827
        %v829 = vpop.f32.mrb[0].mxu0
        %v830 = vadd.f32 %v468, %v829
        %v831 = vpop.f32.mrb[0].mxu0
        %832 = vmatprep.mubr.f32.mxu0 0.0
        %v833 = vand.u32 %v257, 4294901760
        %834 = vmatmul.mubr.f32.gmra.mrb[0].mxu0 %v833
        %v835 = vpop.f32.mrb[0].mxu0
        %v836 = vadd.f32 %v478, %v835
        %v837 = vpop.f32.mrb[0].mxu0
        %838 = vmatprep.mubr.f32.mxu0 0.0
        %v839 = vand.u32 %v260, 4294901760
        %840 = vmatmul.mubr.f32.gmra.mrb[0].mxu0 %v839
        %v841 = vpop.f32.mrb[0].mxu0
        %v842 = vadd.f32 %v488, %v841
        %v843 = vpop.f32.mrb[0].mxu0
        %844 = vmatprep.mubr.f32.mxu0 0.0
        %v845 = vand.u32 %v263, 4294901760
        %846 = vmatmul.mubr.f32.gmra.mrb[0].mxu0 %v845
        %v847 = vpop.f32.mrb[0].mxu0
        %v848 = vadd.f32 %v498, %v847
        %v849 = vpop.f32.mrb[0].mxu0
        %850 = vmatprep.mubr.f32.mxu0 0.0
        %v851 = vand.u32 %v266, 4294901760
        %852 = vmatmul.mubr.f32.gmra.mrb[0].mxu0 %v851
        %v853 = vpop.f32.mrb[0].mxu0
        %v854 = vadd.f32 %v508, %v853
        %v855 = vpop.f32.mrb[0].mxu0
        %856 = vmatprep.mubr.f32.mxu0 0.0
        %v857 = vand.u32 %v269, 4294901760
        %858 = vmatmul.mubr.f32.gmra.mrb[0].mxu0 %v857
        %v859 = vpop.f32.mrb[0].mxu0
        %v860 = vadd.f32 %v518, %v859
        %v861 = vpop.f32.mrb[0].mxu0
        %862 = vmatprep.mubr.f32.mxu0 0.0
        %v863 = vand.u32 %v272, 4294901760
        %864 = vmatmul.mubr.f32.gmra.mrb[0].mxu0 %v863
        %v865 = vpop.f32.mrb[0].mxu0
        %v866 = vadd.f32 %v528, %v865
        %v867 = vpop.f32.mrb[0].mxu0
        %868 = vmatprep.mubr.f32.mxu0 0.0
        %v869 = vand.u32 %v275, 4294901760
        %870 = vmatmul.mubr.f32.gmra.mrb[0].mxu0 %v869
        %v871 = vpop.f32.mrb[0].mxu0
        %v872 = vadd.f32 %v538, %v871
        %v873 = vpop.f32.mrb[0].mxu0
        %874 = vmatprep.mubr.f32.mxu0 0.0
        %v875 = vand.u32 %v278, 4294901760
        %876 = vmatmul.mubr.f32.gmra.mrb[0].mxu0 %v875
        %v877 = vpop.f32.mrb[0].mxu0
        %v878 = vadd.f32 %v548, %v877
        %v879 = vpop.f32.mrb[0].mxu0
        %880 = vmatprep.mubr.f32.mxu0 0.0
        %v881 = vand.u32 %v281, 4294901760
        %882 = vmatmul.mubr.f32.gmra.mrb[0].mxu0 %v881
        %v883 = vpop.f32.mrb[0].mxu0
        %v884 = vadd.f32 %v558, %v883
        %v885 = vpop.f32.mrb[0].mxu0
        %886 = vmatprep.mubr.f32.mxu0 0.0
        %v887 = vand.u32 %v284, 4294901760
        %888 = vmatmul.mubr.f32.gmra.mrb[0].mxu0 %v887
        %v889 = vpop.f32.mrb[0].mxu0
        %v890 = vadd.f32 %v568, %v889
        %v891 = vpop.f32.mrb[0].mxu0
        %892 = vmatprep.mubr.f32.mxu0 0.0
        %v893 = vand.u32 %v287, 4294901760
        %894 = vmatmul.mubr.f32.gmra.mrb[0].mxu0 %v893
        %v895 = vpop.f32.mrb[0].mxu0
        %v896 = vadd.f32 %v578, %v895
        %v897 = vpop.f32.mrb[0].mxu0
        %898 = vmatprep.mubr.f32.mxu0 0.0
        %v899 = vand.u32 %v290, 4294901760
        %900 = vmatmul.mubr.f32.gmra.mrb[0].mxu0 %v899
        %v901 = vpop.f32.mrb[0].mxu0
        %v902 = vadd.f32 %v588, %v901
        %v903 = vpop.f32.mrb[0].mxu0
        %904 = vmatprep.mubr.f32.mxu0 0.0
        %v905 = vand.u32 %v293, 4294901760
        %906 = vmatmul.mubr.f32.gmra.mrb[0].mxu0 %v905
        %v907 = vpop.f32.mrb[0].mxu0
        %v908 = vadd.f32 %v598, %v907
        %v909 = vpop.f32.mrb[0].mxu0
        %910 = vmatprep.mubr.f32.mxu0 0.0
        %v911 = vand.u32 %v296, 4294901760
        %912 = vmatmul.mubr.f32.gmra.mrb[0].mxu0 %v911
        %v913 = vpop.f32.mrb[0].mxu0
        %v914 = vadd.f32 %v608, %v913
        %v915 = vpop.f32.mrb[0].mxu0
        %916 = vmatprep.mubr.f32.mxu0 0.0
        %v917 = vand.u32 %v299, 4294901760
        %918 = vmatmul.mubr.f32.gmra.mrb[0].mxu0 %v917
        %v919 = vpop.f32.mrb[0].mxu0
        %v920 = vadd.f32 %v618, %v919
        %v921 = vpop.f32.mrb[0].mxu0
        %922 = vmatprep.mubr.f32.mxu0 0.0
        %v923 = vand.u32 %v302, 4294901760
        %924 = vmatmul.mubr.f32.gmra.mrb[0].mxu0 %v923
        %v925 = vpop.f32.mrb[0].mxu0
        %v926 = vadd.f32 %v628, %v925
        %v927 = vpop.f32.mrb[0].mxu0
        %928 = vmatprep.mubr.f32.mxu0 0.0
        %v929 = vand.u32 %v305, 4294901760
        %930 = vmatmul.mubr.f32.gmra.mrb[0].mxu0 %v929
        %v931 = vpop.f32.mrb[0].mxu0
        %v932 = vadd.f32 %v638, %v931
        %v933 = vpop.f32.mrb[0].mxu0
        %934 = vmatprep.mubr.f32.mxu0 0.0
        %v935 = vand.u32 %v308, 4294901760
        %936 = vmatmul.mubr.f32.gmra.mrb[0].mxu0 %v935
        %v937 = vpop.f32.mrb[0].mxu0
        %v938 = vadd.f32 %v648, %v937
        %v939 = vpop.f32.mrb[0].mxu0
        %940 = vmatprep.mubr.f32.mxu0 0.0
        %v941 = vand.u32 %v311, 4294901760
        %942 = vmatmul.mubr.f32.gmra.mrb[0].mxu0 %v941
        %v943 = vpop.f32.mrb[0].mxu0
        %v944 = vadd.f32 %v658, %v943
        %v945 = vpop.f32.mrb[0].mxu0
        %946 = vmatprep.mubr.f32.mxu0 0.0
        %v947 = vand.u32 %v314, 4294901760
        %948 = vmatmul.mubr.f32.gmra.mrb[0].mxu0 %v947
        %v949 = vpop.f32.mrb[0].mxu0
        %v950 = vadd.f32 %v668, %v949
        %v951 = vpop.f32.mrb[0].mxu0
        %952 = vmatprep.mubr.f32.mxu0 0.0
        %v953 = vand.u32 %v317, 4294901760
        %954 = vmatmul.mubr.f32.gmra.mrb[0].mxu0 %v953
        %v955 = vpop.f32.mrb[0].mxu0
        %v956 = vadd.f32 %v678, %v955
        %v957 = vpop.f32.mrb[0].mxu0
        %958 = vmatprep.mubr.f32.mxu0 0.0
        %v959 = vand.u32 %v320, 4294901760
        %960 = vmatmul.mubr.f32.gmra.mrb[0].mxu0 %v959
        %v961 = vpop.f32.mrb[0].mxu0
        %v962 = vadd.f32 %v688, %v961
        %v963 = vpop.f32.mrb[0].mxu0
        %964 = vmatprep.mubr.f32.mxu0 0.0
        %v965 = vand.u32 %v323, 4294901760
        %966 = vmatmul.mubr.f32.gmra.mrb[0].mxu0 %v965
        %v967 = vpop.f32.mrb[0].mxu0
        %v968 = vadd.f32 %v698, %v967
        %v969 = vpop.f32.mrb[0].mxu0
        %970 = vmatprep.mubr.f32.mxu0 0.0
        %v971 = vand.u32 %v326, 4294901760
        %972 = vmatmul.mubr.f32.gmra.mrb[0].mxu0 %v971
        %v973 = vpop.f32.mrb[0].mxu0
        %v974 = vadd.f32 %v708, %v973
        %v975 = vpop.f32.mrb[0].mxu0
        %976 = vmatprep.mubr.f32.mxu0 0.0
        %v977 = vand.u32 %v329, 4294901760
        %978 = vmatmul.mubr.f32.gmra.mrb[0].mxu0 %v977
        %v979 = vpop.f32.mrb[0].mxu0
        %v980 = vadd.f32 %v718, %v979
        %v981 = vpop.f32.mrb[0].mxu0
        %982 = vdwg.mxu0
        %983 = vmatprep.subr.mxu0 0.0
        %v984 = vand.u32 %v333, 4294901760
        %v985 = vsub.f32 %v333, %v984
        %986 = vmatpush1.msra.mxu0 %v985
        %987 = vmatprep.subr.mxu0 0.0
        %988 = vmatpush1.msra.mxu0 0.0
        %989 = vmatprep.subr.mxu0 0.0
        %990 = vmatpush1.msra.mxu0 0.0
        %991 = vmatprep.subr.mxu0 0.0
        %992 = vmatpush1.msra.mxu0 0.0
        %993 = vmatprep.subr.mxu0 0.0
        %994 = vmatpush1.msra.mxu0 0.0
        %995 = vmatprep.subr.mxu0 0.0
        %996 = vmatpush1.msra.mxu0 0.0
        %997 = vmatprep.subr.mxu0 0.0
        %998 = vmatpush1.msra.mxu0 0.0
        %999 = vmatprep.subr.mxu0 0.0
        %1000 = vmatpush1.msra.mxu0 0.0
        %1001 = vmatprep.subr.mxu0 0.0
        %1002 = vmatpush1.msra.mxu0 0.0
        %1003 = vmatprep.subr.mxu0 0.0
        %1004 = vmatpush1.msra.mxu0 0.0
        %1005 = vmatprep.subr.mxu0 0.0
        %1006 = vmatpush1.msra.mxu0 0.0
        %1007 = vmatprep.subr.mxu0 0.0
        %1008 = vmatpush1.msra.mxu0 0.0
        %1009 = vmatprep.subr.mxu0 0.0
        %1010 = vmatpush1.msra.mxu0 0.0
        %1011 = vmatprep.subr.mxu0 0.0
        %1012 = vmatpush1.msra.mxu0 0.0
        %1013 = vmatprep.subr.mxu0 0.0
        %1014 = vmatpush1.msra.mxu0 0.0
        %1015 = vmatprep.subr.mxu0 0.0
        %1016 = vmatpush1.msra.mxu0 0.0
        %1017 = vmatprep.subr.mxu0 0.0
        %1018 = vmatpush1.msra.mxu0 0.0
        %1019 = vmatprep.subr.mxu0 0.0
        %1020 = vmatpush1.msra.mxu0 0.0
        %1021 = vmatprep.subr.mxu0 0.0
        %1022 = vmatpush1.msra.mxu0 0.0
        %1023 = vmatprep.subr.mxu0 0.0
        %1024 = vmatpush1.msra.mxu0 0.0
        %1025 = vmatprep.subr.mxu0 0.0
        %1026 = vmatpush1.msra.mxu0 0.0
        %1027 = vmatprep.subr.mxu0 0.0
        %1028 = vmatpush1.msra.mxu0 0.0
        %1029 = vmatprep.subr.mxu0 0.0
        %1030 = vmatpush1.msra.mxu0 0.0
        %1031 = vmatprep.subr.mxu0 0.0
        %1032 = vmatpush1.msra.mxu0 0.0
        %1033 = vmatprep.subr.mxu0 0.0
        %1034 = vmatpush1.msra.mxu0 0.0
        %1035 = vmatprep.subr.mxu0 0.0
        %1036 = vmatpush1.msra.mxu0 0.0
        %1037 = vmatprep.subr.mxu0 0.0
        %1038 = vmatpush1.msra.mxu0 0.0
        %1039 = vmatprep.subr.mxu0 0.0
        %1040 = vmatpush1.msra.mxu0 0.0
        %1041 = vmatprep.subr.mxu0 0.0
        %1042 = vmatpush1.msra.mxu0 0.0
        %1043 = vmatprep.subr.mxu0 0.0
        %1044 = vmatpush1.msra.mxu0 0.0
        %1045 = vmatprep.subr.mxu0 0.0
        %1046 = vmatpush1.msra.mxu0 0.0
        %1047 = vmatprep.subr.mxu0 0.0
        %1048 = vmatpush1.msra.mxu0 0.0
        %1049 = vmatprep.mubr.f32.mxu0 0.0
        %v1050 = vand.u32 %v236, 4294901760
        %v1051 = vsub.f32 %v236, %v1050
        %1052 = vmatmul.mubr.f32.gmra.mrb[0].mxu0 %v1051
        %v1053 = vpop.f32.mrb[0].mxu0
        %v1054 = vadd.f32 %v794, %v1053
        %v1055 = vpop.f32.mrb[0].mxu0
        %1056 = vmatprep.mubr.f32.mxu0 0.0
        %v1057 = vand.u32 %v239, 4294901760
        %v1058 = vsub.f32 %v239, %v1057
        %1059 = vmatmul.mubr.f32.gmra.mrb[0].mxu0 %v1058
        %v1060 = vpop.f32.mrb[0].mxu0
        %v1061 = vadd.f32 %v800, %v1060
        %v1062 = vpop.f32.mrb[0].mxu0
        %1063 = vmatprep.mubr.f32.mxu0 0.0
        %v1064 = vand.u32 %v242, 4294901760
        %v1065 = vsub.f32 %v242, %v1064
        %1066 = vmatmul.mubr.f32.gmra.mrb[0].mxu0 %v1065
        %v1067 = vpop.f32.mrb[0].mxu0
        %v1068 = vadd.f32 %v806, %v1067
        %v1069 = vpop.f32.mrb[0].mxu0
        %1070 = vmatprep.mubr.f32.mxu0 0.0
        %v1071 = vand.u32 %v245, 4294901760
        %v1072 = vsub.f32 %v245, %v1071
        %1073 = vmatmul.mubr.f32.gmra.mrb[0].mxu0 %v1072
        %v1074 = vpop.f32.mrb[0].mxu0
        %v1075 = vadd.f32 %v812, %v1074
        %v1076 = vpop.f32.mrb[0].mxu0
        %1077 = vmatprep.mubr.f32.mxu0 0.0
        %v1078 = vand.u32 %v248, 4294901760
        %v1079 = vsub.f32 %v248, %v1078
        %1080 = vmatmul.mubr.f32.gmra.mrb[0].mxu0 %v1079
        %v1081 = vpop.f32.mrb[0].mxu0
        %v1082 = vadd.f32 %v818, %v1081
        %v1083 = vpop.f32.mrb[0].mxu0
        %1084 = vmatprep.mubr.f32.mxu0 0.0
        %v1085 = vand.u32 %v251, 4294901760
        %v1086 = vsub.f32 %v251, %v1085
        %1087 = vmatmul.mubr.f32.gmra.mrb[0].mxu0 %v1086
        %v1088 = vpop.f32.mrb[0].mxu0
        %v1089 = vadd.f32 %v824, %v1088
        %v1090 = vpop.f32.mrb[0].mxu0
        %1091 = vmatprep.mubr.f32.mxu0 0.0
        %v1092 = vand.u32 %v254, 4294901760
        %v1093 = vsub.f32 %v254, %v1092
        %1094 = vmatmul.mubr.f32.gmra.mrb[0].mxu0 %v1093
        %v1095 = vpop.f32.mrb[0].mxu0
        %v1096 = vadd.f32 %v830, %v1095
        %v1097 = vpop.f32.mrb[0].mxu0
        %1098 = vmatprep.mubr.f32.mxu0 0.0
        %v1099 = vand.u32 %v257, 4294901760
        %v1100 = vsub.f32 %v257, %v1099
        %1101 = vmatmul.mubr.f32.gmra.mrb[0].mxu0 %v1100
        %v1102 = vpop.f32.mrb[0].mxu0
        %v1103 = vadd.f32 %v836, %v1102
        %v1104 = vpop.f32.mrb[0].mxu0
        %1105 = vmatprep.mubr.f32.mxu0 0.0
        %v1106 = vand.u32 %v260, 4294901760
        %v1107 = vsub.f32 %v260, %v1106
        %1108 = vmatmul.mubr.f32.gmra.mrb[0].mxu0 %v1107
        %v1109 = vpop.f32.mrb[0].mxu0
        %v1110 = vadd.f32 %v842, %v1109
        %v1111 = vpop.f32.mrb[0].mxu0
        %1112 = vmatprep.mubr.f32.mxu0 0.0
        %v1113 = vand.u32 %v263, 4294901760
        %v1114 = vsub.f32 %v263, %v1113
        %1115 = vmatmul.mubr.f32.gmra.mrb[0].mxu0 %v1114
        %v1116 = vpop.f32.mrb[0].mxu0
        %v1117 = vadd.f32 %v848, %v1116
        %v1118 = vpop.f32.mrb[0].mxu0
        %1119 = vmatprep.mubr.f32.mxu0 0.0
        %v1120 = vand.u32 %v266, 4294901760
        %v1121 = vsub.f32 %v266, %v1120
        %1122 = vmatmul.mubr.f32.gmra.mrb[0].mxu0 %v1121
        %v1123 = vpop.f32.mrb[0].mxu0
        %v1124 = vadd.f32 %v854, %v1123
        %v1125 = vpop.f32.mrb[0].mxu0
        %1126 = vmatprep.mubr.f32.mxu0 0.0
        %v1127 = vand.u32 %v269, 4294901760
        %v1128 = vsub.f32 %v269, %v1127
        %1129 = vmatmul.mubr.f32.gmra.mrb[0].mxu0 %v1128
        %v1130 = vpop.f32.mrb[0].mxu0
        %v1131 = vadd.f32 %v860, %v1130
        %v1132 = vpop.f32.mrb[0].mxu0
        %1133 = vmatprep.mubr.f32.mxu0 0.0
        %v1134 = vand.u32 %v272, 4294901760
        %v1135 = vsub.f32 %v272, %v1134
        %1136 = vmatmul.mubr.f32.gmra.mrb[0].mxu0 %v1135
        %v1137 = vpop.f32.mrb[0].mxu0
        %v1138 = vadd.f32 %v866, %v1137
        %v1139 = vpop.f32.mrb[0].mxu0
        %1140 = vmatprep.mubr.f32.mxu0 0.0
        %v1141 = vand.u32 %v275, 4294901760
        %v1142 = vsub.f32 %v275, %v1141
        %1143 = vmatmul.mubr.f32.gmra.mrb[0].mxu0 %v1142
        %v1144 = vpop.f32.mrb[0].mxu0
        %v1145 = vadd.f32 %v872, %v1144
        %v1146 = vpop.f32.mrb[0].mxu0
        %1147 = vmatprep.mubr.f32.mxu0 0.0
        %v1148 = vand.u32 %v278, 4294901760
        %v1149 = vsub.f32 %v278, %v1148
        %1150 = vmatmul.mubr.f32.gmra.mrb[0].mxu0 %v1149
        %v1151 = vpop.f32.mrb[0].mxu0
        %v1152 = vadd.f32 %v878, %v1151
        %v1153 = vpop.f32.mrb[0].mxu0
        %1154 = vmatprep.mubr.f32.mxu0 0.0
        %v1155 = vand.u32 %v281, 4294901760
        %v1156 = vsub.f32 %v281, %v1155
        %1157 = vmatmul.mubr.f32.gmra.mrb[0].mxu0 %v1156
        %v1158 = vpop.f32.mrb[0].mxu0
        %v1159 = vadd.f32 %v884, %v1158
        %v1160 = vpop.f32.mrb[0].mxu0
        %1161 = vmatprep.mubr.f32.mxu0 0.0
        %v1162 = vand.u32 %v284, 4294901760
        %v1163 = vsub.f32 %v284, %v1162
        %1164 = vmatmul.mubr.f32.gmra.mrb[0].mxu0 %v1163
        %v1165 = vpop.f32.mrb[0].mxu0
        %v1166 = vadd.f32 %v890, %v1165
        %v1167 = vpop.f32.mrb[0].mxu0
        %1168 = vmatprep.mubr.f32.mxu0 0.0
        %v1169 = vand.u32 %v287, 4294901760
        %v1170 = vsub.f32 %v287, %v1169
        %1171 = vmatmul.mubr.f32.gmra.mrb[0].mxu0 %v1170
        %v1172 = vpop.f32.mrb[0].mxu0
        %v1173 = vadd.f32 %v896, %v1172
        %v1174 = vpop.f32.mrb[0].mxu0
        %1175 = vmatprep.mubr.f32.mxu0 0.0
        %v1176 = vand.u32 %v290, 4294901760
        %v1177 = vsub.f32 %v290, %v1176
        %1178 = vmatmul.mubr.f32.gmra.mrb[0].mxu0 %v1177
        %v1179 = vpop.f32.mrb[0].mxu0
        %v1180 = vadd.f32 %v902, %v1179
        %v1181 = vpop.f32.mrb[0].mxu0
        %1182 = vmatprep.mubr.f32.mxu0 0.0
        %v1183 = vand.u32 %v293, 4294901760
        %v1184 = vsub.f32 %v293, %v1183
        %1185 = vmatmul.mubr.f32.gmra.mrb[0].mxu0 %v1184
        %v1186 = vpop.f32.mrb[0].mxu0
        %v1187 = vadd.f32 %v908, %v1186
        %v1188 = vpop.f32.mrb[0].mxu0
        %1189 = vmatprep.mubr.f32.mxu0 0.0
        %v1190 = vand.u32 %v296, 4294901760
        %v1191 = vsub.f32 %v296, %v1190
        %1192 = vmatmul.mubr.f32.gmra.mrb[0].mxu0 %v1191
        %v1193 = vpop.f32.mrb[0].mxu0
        %v1194 = vadd.f32 %v914, %v1193
        %v1195 = vpop.f32.mrb[0].mxu0
        %1196 = vmatprep.mubr.f32.mxu0 0.0
        %v1197 = vand.u32 %v299, 4294901760
        %v1198 = vsub.f32 %v299, %v1197
        %1199 = vmatmul.mubr.f32.gmra.mrb[0].mxu0 %v1198
        %v1200 = vpop.f32.mrb[0].mxu0
        %v1201 = vadd.f32 %v920, %v1200
        %v1202 = vpop.f32.mrb[0].mxu0
        %1203 = vmatprep.mubr.f32.mxu0 0.0
        %v1204 = vand.u32 %v302, 4294901760
        %v1205 = vsub.f32 %v302, %v1204
        %1206 = vmatmul.mubr.f32.gmra.mrb[0].mxu0 %v1205
        %v1207 = vpop.f32.mrb[0].mxu0
        %v1208 = vadd.f32 %v926, %v1207
        %v1209 = vpop.f32.mrb[0].mxu0
        %1210 = vmatprep.mubr.f32.mxu0 0.0
        %v1211 = vand.u32 %v305, 4294901760
        %v1212 = vsub.f32 %v305, %v1211
        %1213 = vmatmul.mubr.f32.gmra.mrb[0].mxu0 %v1212
        %v1214 = vpop.f32.mrb[0].mxu0
        %v1215 = vadd.f32 %v932, %v1214
        %v1216 = vpop.f32.mrb[0].mxu0
        %1217 = vmatprep.mubr.f32.mxu0 0.0
        %v1218 = vand.u32 %v308, 4294901760
        %v1219 = vsub.f32 %v308, %v1218
        %1220 = vmatmul.mubr.f32.gmra.mrb[0].mxu0 %v1219
        %v1221 = vpop.f32.mrb[0].mxu0
        %v1222 = vadd.f32 %v938, %v1221
        %v1223 = vpop.f32.mrb[0].mxu0
        %1224 = vmatprep.mubr.f32.mxu0 0.0
        %v1225 = vand.u32 %v311, 4294901760
        %v1226 = vsub.f32 %v311, %v1225
        %1227 = vmatmul.mubr.f32.gmra.mrb[0].mxu0 %v1226
        %v1228 = vpop.f32.mrb[0].mxu0
        %v1229 = vadd.f32 %v944, %v1228
        %v1230 = vpop.f32.mrb[0].mxu0
        %1231 = vmatprep.mubr.f32.mxu0 0.0
        %v1232 = vand.u32 %v314, 4294901760
        %v1233 = vsub.f32 %v314, %v1232
        %1234 = vmatmul.mubr.f32.gmra.mrb[0].mxu0 %v1233
        %v1235 = vpop.f32.mrb[0].mxu0
        %v1236 = vadd.f32 %v950, %v1235
        %v1237 = vpop.f32.mrb[0].mxu0
        %1238 = vmatprep.mubr.f32.mxu0 0.0
        %v1239 = vand.u32 %v317, 4294901760
        %v1240 = vsub.f32 %v317, %v1239
        %1241 = vmatmul.mubr.f32.gmra.mrb[0].mxu0 %v1240
        %v1242 = vpop.f32.mrb[0].mxu0
        %v1243 = vadd.f32 %v956, %v1242
        %v1244 = vpop.f32.mrb[0].mxu0
        %1245 = vmatprep.mubr.f32.mxu0 0.0
        %v1246 = vand.u32 %v320, 4294901760
        %v1247 = vsub.f32 %v320, %v1246
        %1248 = vmatmul.mubr.f32.gmra.mrb[0].mxu0 %v1247
        %v1249 = vpop.f32.mrb[0].mxu0
        %v1250 = vadd.f32 %v962, %v1249
        %v1251 = vpop.f32.mrb[0].mxu0
        %1252 = vmatprep.mubr.f32.mxu0 0.0
        %v1253 = vand.u32 %v323, 4294901760
        %v1254 = vsub.f32 %v323, %v1253
        %1255 = vmatmul.mubr.f32.gmra.mrb[0].mxu0 %v1254
        %v1256 = vpop.f32.mrb[0].mxu0
        %v1257 = vadd.f32 %v968, %v1256
        %v1258 = vpop.f32.mrb[0].mxu0
        %1259 = vmatprep.mubr.f32.mxu0 0.0
        %v1260 = vand.u32 %v326, 4294901760
        %v1261 = vsub.f32 %v326, %v1260
        %1262 = vmatmul.mubr.f32.gmra.mrb[0].mxu0 %v1261
        %v1263 = vpop.f32.mrb[0].mxu0
        %v1264 = vadd.f32 %v974, %v1263
        %v1265 = vpop.f32.mrb[0].mxu0
        %1266 = vmatprep.mubr.f32.mxu0 0.0
        %v1267 = vand.u32 %v329, 4294901760
        %v1268 = vsub.f32 %v329, %v1267
        %1269 = vmatmul.mubr.f32.gmra.mrb[0].mxu0 %v1268
        %v1270 = vpop.f32.mrb[0].mxu0
        %v1271 = vadd.f32 %v980, %v1270
        %v1272 = vpop.f32.mrb[0].mxu0
        %1273 = vdwg.mxu0
        %1274 = vmatprep.subr.mxu0 0.0
        %v1275 = vand.u32 %v333, 4294901760
        %1276 = vmatpush1.msra.mxu0 %v1275
        %1277 = vmatprep.subr.mxu0 0.0
        %1278 = vmatpush1.msra.mxu0 0.0
        %1279 = vmatprep.subr.mxu0 0.0
        %1280 = vmatpush1.msra.mxu0 0.0
        %1281 = vmatprep.subr.mxu0 0.0
        %1282 = vmatpush1.msra.mxu0 0.0
        %1283 = vmatprep.subr.mxu0 0.0
        %1284 = vmatpush1.msra.mxu0 0.0
        %1285 = vmatprep.subr.mxu0 0.0
        %1286 = vmatpush1.msra.mxu0 0.0
        %1287 = vmatprep.subr.mxu0 0.0
        %1288 = vmatpush1.msra.mxu0 0.0
        %1289 = vmatprep.subr.mxu0 0.0
        %1290 = vmatpush1.msra.mxu0 0.0
        %1291 = vmatprep.subr.mxu0 0.0
        %1292 = vmatpush1.msra.mxu0 0.0
        %1293 = vmatprep.subr.mxu0 0.0
        %1294 = vmatpush1.msra.mxu0 0.0
        %1295 = vmatprep.subr.mxu0 0.0
        %1296 = vmatpush1.msra.mxu0 0.0
        %1297 = vmatprep.subr.mxu0 0.0
        %1298 = vmatpush1.msra.mxu0 0.0
        %1299 = vmatprep.subr.mxu0 0.0
        %1300 = vmatpush1.msra.mxu0 0.0
        %1301 = vmatprep.subr.mxu0 0.0
        %1302 = vmatpush1.msra.mxu0 0.0
        %1303 = vmatprep.subr.mxu0 0.0
        %1304 = vmatpush1.msra.mxu0 0.0
        %1305 = vmatprep.subr.mxu0 0.0
        %1306 = vmatpush1.msra.mxu0 0.0
        %1307 = vmatprep.subr.mxu0 0.0
        %1308 = vmatpush1.msra.mxu0 0.0
        %1309 = vmatprep.subr.mxu0 0.0
        %1310 = vmatpush1.msra.mxu0 0.0
        %1311 = vmatprep.subr.mxu0 0.0
        %1312 = vmatpush1.msra.mxu0 0.0
        %1313 = vmatprep.subr.mxu0 0.0
        %1314 = vmatpush1.msra.mxu0 0.0
        %1315 = vmatprep.subr.mxu0 0.0
        %1316 = vmatpush1.msra.mxu0 0.0
        %1317 = vmatprep.subr.mxu0 0.0
        %1318 = vmatpush1.msra.mxu0 0.0
        %1319 = vmatprep.subr.mxu0 0.0
        %1320 = vmatpush1.msra.mxu0 0.0
        %1321 = vmatprep.subr.mxu0 0.0
        %1322 = vmatpush1.msra.mxu0 0.0
        %1323 = vmatprep.subr.mxu0 0.0
        %1324 = vmatpush1.msra.mxu0 0.0
        %1325 = vmatprep.subr.mxu0 0.0
        %1326 = vmatpush1.msra.mxu0 0.0
        %1327 = vmatprep.subr.mxu0 0.0
        %1328 = vmatpush1.msra.mxu0 0.0
        %1329 = vmatprep.subr.mxu0 0.0
        %1330 = vmatpush1.msra.mxu0 0.0
        %1331 = vmatprep.subr.mxu0 0.0
        %1332 = vmatpush1.msra.mxu0 0.0
        %1333 = vmatprep.subr.mxu0 0.0
        %1334 = vmatpush1.msra.mxu0 0.0
        %1335 = vmatprep.subr.mxu0 0.0
        %1336 = vmatpush1.msra.mxu0 0.0
        %1337 = vmatprep.subr.mxu0 0.0
        %1338 = vmatpush1.msra.mxu0 0.0
        %1339 = vmatprep.mubr.f32.mxu0 0.0
        %v1340 = vand.u32 %v236, 4294901760
        %v1341 = vsub.f32 %v236, %v1340
        %v1342 = vand.u32 %v1341, 4294901760
        %1343 = vmatmul.mubr.f32.gmra.mrb[0].mxu0 %v1342
        %v1344 = vpop.f32.mrb[0].mxu0
        %v1345 = vadd.f32 %v1054, %v1344
        %v1346 = vpop.f32.mrb[0].mxu0
        %1347 = vmatprep.mubr.f32.mxu0 0.0
        %v1348 = vand.u32 %v239, 4294901760
        %v1349 = vsub.f32 %v239, %v1348
        %v1350 = vand.u32 %v1349, 4294901760
        %1351 = vmatmul.mubr.f32.gmra.mrb[0].mxu0 %v1350
        %v1352 = vpop.f32.mrb[0].mxu0
        %v1353 = vadd.f32 %v1061, %v1352
        %v1354 = vpop.f32.mrb[0].mxu0
        %1355 = vmatprep.mubr.f32.mxu0 0.0
        %v1356 = vand.u32 %v242, 4294901760
        %v1357 = vsub.f32 %v242, %v1356
        %v1358 = vand.u32 %v1357, 4294901760
        %1359 = vmatmul.mubr.f32.gmra.mrb[0].mxu0 %v1358
        %v1360 = vpop.f32.mrb[0].mxu0
        %v1361 = vadd.f32 %v1068, %v1360
        %v1362 = vpop.f32.mrb[0].mxu0
        %1363 = vmatprep.mubr.f32.mxu0 0.0
        %v1364 = vand.u32 %v245, 4294901760
        %v1365 = vsub.f32 %v245, %v1364
        %v1366 = vand.u32 %v1365, 4294901760
        %1367 = vmatmul.mubr.f32.gmra.mrb[0].mxu0 %v1366
        %v1368 = vpop.f32.mrb[0].mxu0
        %v1369 = vadd.f32 %v1075, %v1368
        %v1370 = vpop.f32.mrb[0].mxu0
        %1371 = vmatprep.mubr.f32.mxu0 0.0
        %v1372 = vand.u32 %v248, 4294901760
        %v1373 = vsub.f32 %v248, %v1372
        %v1374 = vand.u32 %v1373, 4294901760
        %1375 = vmatmul.mubr.f32.gmra.mrb[0].mxu0 %v1374
        %v1376 = vpop.f32.mrb[0].mxu0
        %v1377 = vadd.f32 %v1082, %v1376
        %v1378 = vpop.f32.mrb[0].mxu0
        %1379 = vmatprep.mubr.f32.mxu0 0.0
        %v1380 = vand.u32 %v251, 4294901760
        %v1381 = vsub.f32 %v251, %v1380
        %v1382 = vand.u32 %v1381, 4294901760
        %1383 = vmatmul.mubr.f32.gmra.mrb[0].mxu0 %v1382
        %v1384 = vpop.f32.mrb[0].mxu0
        %v1385 = vadd.f32 %v1089, %v1384
        %v1386 = vpop.f32.mrb[0].mxu0
        %1387 = vmatprep.mubr.f32.mxu0 0.0
        %v1388 = vand.u32 %v254, 4294901760
        %v1389 = vsub.f32 %v254, %v1388
        %v1390 = vand.u32 %v1389, 4294901760
        %1391 = vmatmul.mubr.f32.gmra.mrb[0].mxu0 %v1390
        %v1392 = vpop.f32.mrb[0].mxu0
        %v1393 = vadd.f32 %v1096, %v1392
        %v1394 = vpop.f32.mrb[0].mxu0
        %1395 = vmatprep.mubr.f32.mxu0 0.0
        %v1396 = vand.u32 %v257, 4294901760
        %v1397 = vsub.f32 %v257, %v1396
        %v1398 = vand.u32 %v1397, 4294901760
        %1399 = vmatmul.mubr.f32.gmra.mrb[0].mxu0 %v1398
        %v1400 = vpop.f32.mrb[0].mxu0
        %v1401 = vadd.f32 %v1103, %v1400
        %v1402 = vpop.f32.mrb[0].mxu0
        %1403 = vmatprep.mubr.f32.mxu0 0.0
        %v1404 = vand.u32 %v260, 4294901760
        %v1405 = vsub.f32 %v260, %v1404
        %v1406 = vand.u32 %v1405, 4294901760
        %1407 = vmatmul.mubr.f32.gmra.mrb[0].mxu0 %v1406
        %v1408 = vpop.f32.mrb[0].mxu0
        %v1409 = vadd.f32 %v1110, %v1408
        %v1410 = vpop.f32.mrb[0].mxu0
        %1411 = vmatprep.mubr.f32.mxu0 0.0
        %v1412 = vand.u32 %v263, 4294901760
        %v1413 = vsub.f32 %v263, %v1412
        %v1414 = vand.u32 %v1413, 4294901760
        %1415 = vmatmul.mubr.f32.gmra.mrb[0].mxu0 %v1414
        %v1416 = vpop.f32.mrb[0].mxu0
        %v1417 = vadd.f32 %v1117, %v1416
        %v1418 = vpop.f32.mrb[0].mxu0
        %1419 = vmatprep.mubr.f32.mxu0 0.0
        %v1420 = vand.u32 %v266, 4294901760
        %v1421 = vsub.f32 %v266, %v1420
        %v1422 = vand.u32 %v1421, 4294901760
        %1423 = vmatmul.mubr.f32.gmra.mrb[0].mxu0 %v1422
        %v1424 = vpop.f32.mrb[0].mxu0
        %v1425 = vadd.f32 %v1124, %v1424
        %v1426 = vpop.f32.mrb[0].mxu0
        %1427 = vmatprep.mubr.f32.mxu0 0.0
        %v1428 = vand.u32 %v269, 4294901760
        %v1429 = vsub.f32 %v269, %v1428
        %v1430 = vand.u32 %v1429, 4294901760
        %1431 = vmatmul.mubr.f32.gmra.mrb[0].mxu0 %v1430
        %v1432 = vpop.f32.mrb[0].mxu0
        %v1433 = vadd.f32 %v1131, %v1432
        %v1434 = vpop.f32.mrb[0].mxu0
        %1435 = vmatprep.mubr.f32.mxu0 0.0
        %v1436 = vand.u32 %v272, 4294901760
        %v1437 = vsub.f32 %v272, %v1436
        %v1438 = vand.u32 %v1437, 4294901760
        %1439 = vmatmul.mubr.f32.gmra.mrb[0].mxu0 %v1438
        %v1440 = vpop.f32.mrb[0].mxu0
        %v1441 = vadd.f32 %v1138, %v1440
        %v1442 = vpop.f32.mrb[0].mxu0
        %1443 = vmatprep.mubr.f32.mxu0 0.0
        %v1444 = vand.u32 %v275, 4294901760
        %v1445 = vsub.f32 %v275, %v1444
        %v1446 = vand.u32 %v1445, 4294901760
        %1447 = vmatmul.mubr.f32.gmra.mrb[0].mxu0 %v1446
        %v1448 = vpop.f32.mrb[0].mxu0
        %v1449 = vadd.f32 %v1145, %v1448
        %v1450 = vpop.f32.mrb[0].mxu0
        %1451 = vmatprep.mubr.f32.mxu0 0.0
        %v1452 = vand.u32 %v278, 4294901760
        %v1453 = vsub.f32 %v278, %v1452
        %v1454 = vand.u32 %v1453, 4294901760
        %1455 = vmatmul.mubr.f32.gmra.mrb[0].mxu0 %v1454
        %v1456 = vpop.f32.mrb[0].mxu0
        %v1457 = vadd.f32 %v1152, %v1456
        %v1458 = vpop.f32.mrb[0].mxu0
        %1459 = vmatprep.mubr.f32.mxu0 0.0
        %v1460 = vand.u32 %v281, 4294901760
        %v1461 = vsub.f32 %v281, %v1460
        %v1462 = vand.u32 %v1461, 4294901760
        %1463 = vmatmul.mubr.f32.gmra.mrb[0].mxu0 %v1462
        %v1464 = vpop.f32.mrb[0].mxu0
        %v1465 = vadd.f32 %v1159, %v1464
        %v1466 = vpop.f32.mrb[0].mxu0
        %1467 = vmatprep.mubr.f32.mxu0 0.0
        %v1468 = vand.u32 %v284, 4294901760
        %v1469 = vsub.f32 %v284, %v1468
        %v1470 = vand.u32 %v1469, 4294901760
        %1471 = vmatmul.mubr.f32.gmra.mrb[0].mxu0 %v1470
        %v1472 = vpop.f32.mrb[0].mxu0
        %v1473 = vadd.f32 %v1166, %v1472
        %v1474 = vpop.f32.mrb[0].mxu0
        %1475 = vmatprep.mubr.f32.mxu0 0.0
        %v1476 = vand.u32 %v287, 4294901760
        %v1477 = vsub.f32 %v287, %v1476
        %v1478 = vand.u32 %v1477, 4294901760
        %1479 = vmatmul.mubr.f32.gmra.mrb[0].mxu0 %v1478
        %v1480 = vpop.f32.mrb[0].mxu0
        %v1481 = vadd.f32 %v1173, %v1480
        %v1482 = vpop.f32.mrb[0].mxu0
        %1483 = vmatprep.mubr.f32.mxu0 0.0
        %v1484 = vand.u32 %v290, 4294901760
        %v1485 = vsub.f32 %v290, %v1484
        %v1486 = vand.u32 %v1485, 4294901760
        %1487 = vmatmul.mubr.f32.gmra.mrb[0].mxu0 %v1486
        %v1488 = vpop.f32.mrb[0].mxu0
        %v1489 = vadd.f32 %v1180, %v1488
        %v1490 = vpop.f32.mrb[0].mxu0
        %1491 = vmatprep.mubr.f32.mxu0 0.0
        %v1492 = vand.u32 %v293, 4294901760
        %v1493 = vsub.f32 %v293, %v1492
        %v1494 = vand.u32 %v1493, 4294901760
        %1495 = vmatmul.mubr.f32.gmra.mrb[0].mxu0 %v1494
        %v1496 = vpop.f32.mrb[0].mxu0
        %v1497 = vadd.f32 %v1187, %v1496
        %v1498 = vpop.f32.mrb[0].mxu0
        %1499 = vmatprep.mubr.f32.mxu0 0.0
        %v1500 = vand.u32 %v296, 4294901760
        %v1501 = vsub.f32 %v296, %v1500
        %v1502 = vand.u32 %v1501, 4294901760
        %1503 = vmatmul.mubr.f32.gmra.mrb[0].mxu0 %v1502
        %v1504 = vpop.f32.mrb[0].mxu0
        %v1505 = vadd.f32 %v1194, %v1504
        %v1506 = vpop.f32.mrb[0].mxu0
        %1507 = vmatprep.mubr.f32.mxu0 0.0
        %v1508 = vand.u32 %v299, 4294901760
        %v1509 = vsub.f32 %v299, %v1508
        %v1510 = vand.u32 %v1509, 4294901760
        %1511 = vmatmul.mubr.f32.gmra.mrb[0].mxu0 %v1510
        %v1512 = vpop.f32.mrb[0].mxu0
        %v1513 = vadd.f32 %v1201, %v1512
        %v1514 = vpop.f32.mrb[0].mxu0
        %1515 = vmatprep.mubr.f32.mxu0 0.0
        %v1516 = vand.u32 %v302, 4294901760
        %v1517 = vsub.f32 %v302, %v1516
        %v1518 = vand.u32 %v1517, 4294901760
        %1519 = vmatmul.mubr.f32.gmra.mrb[0].mxu0 %v1518
        %v1520 = vpop.f32.mrb[0].mxu0
        %v1521 = vadd.f32 %v1208, %v1520
        %v1522 = vpop.f32.mrb[0].mxu0
        %1523 = vmatprep.mubr.f32.mxu0 0.0
        %v1524 = vand.u32 %v305, 4294901760
        %v1525 = vsub.f32 %v305, %v1524
        %v1526 = vand.u32 %v1525, 4294901760
        %1527 = vmatmul.mubr.f32.gmra.mrb[0].mxu0 %v1526
        %v1528 = vpop.f32.mrb[0].mxu0
        %v1529 = vadd.f32 %v1215, %v1528
        %v1530 = vpop.f32.mrb[0].mxu0
        %1531 = vmatprep.mubr.f32.mxu0 0.0
        %v1532 = vand.u32 %v308, 4294901760
        %v1533 = vsub.f32 %v308, %v1532
        %v1534 = vand.u32 %v1533, 4294901760
        %1535 = vmatmul.mubr.f32.gmra.mrb[0].mxu0 %v1534
        %v1536 = vpop.f32.mrb[0].mxu0
        %v1537 = vadd.f32 %v1222, %v1536
        %v1538 = vpop.f32.mrb[0].mxu0
        %1539 = vmatprep.mubr.f32.mxu0 0.0
        %v1540 = vand.u32 %v311, 4294901760
        %v1541 = vsub.f32 %v311, %v1540
        %v1542 = vand.u32 %v1541, 4294901760
        %1543 = vmatmul.mubr.f32.gmra.mrb[0].mxu0 %v1542
        %v1544 = vpop.f32.mrb[0].mxu0
        %v1545 = vadd.f32 %v1229, %v1544
        %v1546 = vpop.f32.mrb[0].mxu0
        %1547 = vmatprep.mubr.f32.mxu0 0.0
        %v1548 = vand.u32 %v314, 4294901760
        %v1549 = vsub.f32 %v314, %v1548
        %v1550 = vand.u32 %v1549, 4294901760
        %1551 = vmatmul.mubr.f32.gmra.mrb[0].mxu0 %v1550
        %v1552 = vpop.f32.mrb[0].mxu0
        %v1553 = vadd.f32 %v1236, %v1552
        %v1554 = vpop.f32.mrb[0].mxu0
        %1555 = vmatprep.mubr.f32.mxu0 0.0
        %v1556 = vand.u32 %v317, 4294901760
        %v1557 = vsub.f32 %v317, %v1556
        %v1558 = vand.u32 %v1557, 4294901760
        %1559 = vmatmul.mubr.f32.gmra.mrb[0].mxu0 %v1558
        %v1560 = vpop.f32.mrb[0].mxu0
        %v1561 = vadd.f32 %v1243, %v1560
        %v1562 = vpop.f32.mrb[0].mxu0
        %1563 = vmatprep.mubr.f32.mxu0 0.0
        %v1564 = vand.u32 %v320, 4294901760
        %v1565 = vsub.f32 %v320, %v1564
        %v1566 = vand.u32 %v1565, 4294901760
        %1567 = vmatmul.mubr.f32.gmra.mrb[0].mxu0 %v1566
        %v1568 = vpop.f32.mrb[0].mxu0
        %v1569 = vadd.f32 %v1250, %v1568
        %v1570 = vpop.f32.mrb[0].mxu0
        %1571 = vmatprep.mubr.f32.mxu0 0.0
        %v1572 = vand.u32 %v323, 4294901760
        %v1573 = vsub.f32 %v323, %v1572
        %v1574 = vand.u32 %v1573, 4294901760
        %1575 = vmatmul.mubr.f32.gmra.mrb[0].mxu0 %v1574
        %v1576 = vpop.f32.mrb[0].mxu0
        %v1577 = vadd.f32 %v1257, %v1576
        %v1578 = vpop.f32.mrb[0].mxu0
        %1579 = vmatprep.mubr.f32.mxu0 0.0
        %v1580 = vand.u32 %v326, 4294901760
        %v1581 = vsub.f32 %v326, %v1580
        %v1582 = vand.u32 %v1581, 4294901760
        %1583 = vmatmul.mubr.f32.gmra.mrb[0].mxu0 %v1582
        %v1584 = vpop.f32.mrb[0].mxu0
        %v1585 = vadd.f32 %v1264, %v1584
        %v1586 = vpop.f32.mrb[0].mxu0
        %1587 = vmatprep.mubr.f32.mxu0 0.0
        %v1588 = vand.u32 %v329, 4294901760
        %v1589 = vsub.f32 %v329, %v1588
        %v1590 = vand.u32 %v1589, 4294901760
        %1591 = vmatmul.mubr.f32.gmra.mrb[0].mxu0 %v1590
        %v1592 = vpop.f32.mrb[0].mxu0
        %v1593 = vadd.f32 %v1271, %v1592
        %v1594 = vpop.f32.mrb[0].mxu0
        %1595 = vdwg.mxu0
        %1596 = vmatprep.subr.mxu0 0.0
        %v1597 = vand.u32 %v333, 4294901760
        %v1598 = vsub.f32 %v333, %v1597
        %v1599 = vand.u32 %v1598, 4294901760
        %1600 = vmatpush1.msra.mxu0 %v1599
        %1601 = vmatprep.subr.mxu0 0.0
        %1602 = vmatpush1.msra.mxu0 0.0
        %1603 = vmatprep.subr.mxu0 0.0
        %1604 = vmatpush1.msra.mxu0 0.0
        %1605 = vmatprep.subr.mxu0 0.0
        %1606 = vmatpush1.msra.mxu0 0.0
        %1607 = vmatprep.subr.mxu0 0.0
        %1608 = vmatpush1.msra.mxu0 0.0
        %1609 = vmatprep.subr.mxu0 0.0
        %1610 = vmatpush1.msra.mxu0 0.0
        %1611 = vmatprep.subr.mxu0 0.0
        %1612 = vmatpush1.msra.mxu0 0.0
        %1613 = vmatprep.subr.mxu0 0.0
        %1614 = vmatpush1.msra.mxu0 0.0
        %1615 = vmatprep.subr.mxu0 0.0
        %1616 = vmatpush1.msra.mxu0 0.0
        %1617 = vmatprep.subr.mxu0 0.0
        %1618 = vmatpush1.msra.mxu0 0.0
        %1619 = vmatprep.subr.mxu0 0.0
        %1620 = vmatpush1.msra.mxu0 0.0
        %1621 = vmatprep.subr.mxu0 0.0
        %1622 = vmatpush1.msra.mxu0 0.0
        %1623 = vmatprep.subr.mxu0 0.0
        %1624 = vmatpush1.msra.mxu0 0.0
        %1625 = vmatprep.subr.mxu0 0.0
        %1626 = vmatpush1.msra.mxu0 0.0
        %1627 = vmatprep.subr.mxu0 0.0
        %1628 = vmatpush1.msra.mxu0 0.0
        %1629 = vmatprep.subr.mxu0 0.0
        %1630 = vmatpush1.msra.mxu0 0.0
        %1631 = vmatprep.subr.mxu0 0.0
        %1632 = vmatpush1.msra.mxu0 0.0
        %1633 = vmatprep.subr.mxu0 0.0
        %1634 = vmatpush1.msra.mxu0 0.0
        %1635 = vmatprep.subr.mxu0 0.0
        %1636 = vmatpush1.msra.mxu0 0.0
        %1637 = vmatprep.subr.mxu0 0.0
        %1638 = vmatpush1.msra.mxu0 0.0
        %1639 = vmatprep.subr.mxu0 0.0
        %1640 = vmatpush1.msra.mxu0 0.0
        %1641 = vmatprep.subr.mxu0 0.0
        %1642 = vmatpush1.msra.mxu0 0.0
        %1643 = vmatprep.subr.mxu0 0.0
        %1644 = vmatpush1.msra.mxu0 0.0
        %1645 = vmatprep.subr.mxu0 0.0
        %1646 = vmatpush1.msra.mxu0 0.0
        %1647 = vmatprep.subr.mxu0 0.0
        %1648 = vmatpush1.msra.mxu0 0.0
        %1649 = vmatprep.subr.mxu0 0.0
        %1650 = vmatpush1.msra.mxu0 0.0
        %1651 = vmatprep.subr.mxu0 0.0
        %1652 = vmatpush1.msra.mxu0 0.0
        %1653 = vmatprep.subr.mxu0 0.0
        %1654 = vmatpush1.msra.mxu0 0.0
        %1655 = vmatprep.subr.mxu0 0.0
        %1656 = vmatpush1.msra.mxu0 0.0
        %1657 = vmatprep.subr.mxu0 0.0
        %1658 = vmatpush1.msra.mxu0 0.0
        %1659 = vmatprep.subr.mxu0 0.0
        %1660 = vmatpush1.msra.mxu0 0.0
        %1661 = vmatprep.subr.mxu0 0.0
        %1662 = vmatpush1.msra.mxu0 0.0
        %1663 = vmatprep.mubr.f32.mxu0 0.0
        %v1664 = vand.u32 %v236, 4294901760
        %1665 = vmatmul.mubr.f32.gmra.mrb[0].mxu0 %v1664
        %v1666 = vpop.f32.mrb[0].mxu0
        %v1667 = vadd.f32 %v1345, %v1666
        %v1668 = vpop.f32.mrb[0].mxu0
        %1669 = vmatprep.mubr.f32.mxu0 0.0
        %v1670 = vand.u32 %v239, 4294901760
        %1671 = vmatmul.mubr.f32.gmra.mrb[0].mxu0 %v1670
        %v1672 = vpop.f32.mrb[0].mxu0
        %v1673 = vadd.f32 %v1353, %v1672
        %v1674 = vpop.f32.mrb[0].mxu0
        %1675 = vmatprep.mubr.f32.mxu0 0.0
        %v1676 = vand.u32 %v242, 4294901760
        %1677 = vmatmul.mubr.f32.gmra.mrb[0].mxu0 %v1676
        %v1678 = vpop.f32.mrb[0].mxu0
        %v1679 = vadd.f32 %v1361, %v1678
        %v1680 = vpop.f32.mrb[0].mxu0
        %1681 = vmatprep.mubr.f32.mxu0 0.0
        %v1682 = vand.u32 %v245, 4294901760
        %1683 = vmatmul.mubr.f32.gmra.mrb[0].mxu0 %v1682
        %v1684 = vpop.f32.mrb[0].mxu0
        %v1685 = vadd.f32 %v1369, %v1684
        %v1686 = vpop.f32.mrb[0].mxu0
        %1687 = vmatprep.mubr.f32.mxu0 0.0
        %v1688 = vand.u32 %v248, 4294901760
        %1689 = vmatmul.mubr.f32.gmra.mrb[0].mxu0 %v1688
        %v1690 = vpop.f32.mrb[0].mxu0
        %v1691 = vadd.f32 %v1377, %v1690
        %v1692 = vpop.f32.mrb[0].mxu0
        %1693 = vmatprep.mubr.f32.mxu0 0.0
        %v1694 = vand.u32 %v251, 4294901760
        %1695 = vmatmul.mubr.f32.gmra.mrb[0].mxu0 %v1694
        %v1696 = vpop.f32.mrb[0].mxu0
        %v1697 = vadd.f32 %v1385, %v1696
        %v1698 = vpop.f32.mrb[0].mxu0
        %1699 = vmatprep.mubr.f32.mxu0 0.0
        %v1700 = vand.u32 %v254, 4294901760
        %1701 = vmatmul.mubr.f32.gmra.mrb[0].mxu0 %v1700
        %v1702 = vpop.f32.mrb[0].mxu0
        %v1703 = vadd.f32 %v1393, %v1702
        %v1704 = vpop.f32.mrb[0].mxu0
        %1705 = vmatprep.mubr.f32.mxu0 0.0
        %v1706 = vand.u32 %v257, 4294901760
        %1707 = vmatmul.mubr.f32.gmra.mrb[0].mxu0 %v1706
        %v1708 = vpop.f32.mrb[0].mxu0
        %v1709 = vadd.f32 %v1401, %v1708
        %v1710 = vpop.f32.mrb[0].mxu0
        %1711 = vmatprep.mubr.f32.mxu0 0.0
        %v1712 = vand.u32 %v260, 4294901760
        %1713 = vmatmul.mubr.f32.gmra.mrb[0].mxu0 %v1712
        %v1714 = vpop.f32.mrb[0].mxu0
        %v1715 = vadd.f32 %v1409, %v1714
        %v1716 = vpop.f32.mrb[0].mxu0
        %1717 = vmatprep.mubr.f32.mxu0 0.0
        %v1718 = vand.u32 %v263, 4294901760
        %1719 = vmatmul.mubr.f32.gmra.mrb[0].mxu0 %v1718
        %v1720 = vpop.f32.mrb[0].mxu0
        %v1721 = vadd.f32 %v1417, %v1720
        %v1722 = vpop.f32.mrb[0].mxu0
        %1723 = vmatprep.mubr.f32.mxu0 0.0
        %v1724 = vand.u32 %v266, 4294901760
        %1725 = vmatmul.mubr.f32.gmra.mrb[0].mxu0 %v1724
        %v1726 = vpop.f32.mrb[0].mxu0
        %v1727 = vadd.f32 %v1425, %v1726
        %v1728 = vpop.f32.mrb[0].mxu0
        %1729 = vmatprep.mubr.f32.mxu0 0.0
        %v1730 = vand.u32 %v269, 4294901760
        %1731 = vmatmul.mubr.f32.gmra.mrb[0].mxu0 %v1730
        %v1732 = vpop.f32.mrb[0].mxu0
        %v1733 = vadd.f32 %v1433, %v1732
        %v1734 = vpop.f32.mrb[0].mxu0
        %1735 = vmatprep.mubr.f32.mxu0 0.0
        %v1736 = vand.u32 %v272, 4294901760
        %1737 = vmatmul.mubr.f32.gmra.mrb[0].mxu0 %v1736
        %v1738 = vpop.f32.mrb[0].mxu0
        %v1739 = vadd.f32 %v1441, %v1738
        %v1740 = vpop.f32.mrb[0].mxu0
        %1741 = vmatprep.mubr.f32.mxu0 0.0
        %v1742 = vand.u32 %v275, 4294901760
        %1743 = vmatmul.mubr.f32.gmra.mrb[0].mxu0 %v1742
        %v1744 = vpop.f32.mrb[0].mxu0
        %v1745 = vadd.f32 %v1449, %v1744
        %v1746 = vpop.f32.mrb[0].mxu0
        %1747 = vmatprep.mubr.f32.mxu0 0.0
        %v1748 = vand.u32 %v278, 4294901760
        %1749 = vmatmul.mubr.f32.gmra.mrb[0].mxu0 %v1748
        %v1750 = vpop.f32.mrb[0].mxu0
        %v1751 = vadd.f32 %v1457, %v1750
        %v1752 = vpop.f32.mrb[0].mxu0
        %1753 = vmatprep.mubr.f32.mxu0 0.0
        %v1754 = vand.u32 %v281, 4294901760
        %1755 = vmatmul.mubr.f32.gmra.mrb[0].mxu0 %v1754
        %v1756 = vpop.f32.mrb[0].mxu0
        %v1757 = vadd.f32 %v1465, %v1756
        %v1758 = vpop.f32.mrb[0].mxu0
        %1759 = vmatprep.mubr.f32.mxu0 0.0
        %v1760 = vand.u32 %v284, 4294901760
        %1761 = vmatmul.mubr.f32.gmra.mrb[0].mxu0 %v1760
        %v1762 = vpop.f32.mrb[0].mxu0
        %v1763 = vadd.f32 %v1473, %v1762
        %v1764 = vpop.f32.mrb[0].mxu0
        %1765 = vmatprep.mubr.f32.mxu0 0.0
        %v1766 = vand.u32 %v287, 4294901760
        %1767 = vmatmul.mubr.f32.gmra.mrb[0].mxu0 %v1766
        %v1768 = vpop.f32.mrb[0].mxu0
        %v1769 = vadd.f32 %v1481, %v1768
        %v1770 = vpop.f32.mrb[0].mxu0
        %1771 = vmatprep.mubr.f32.mxu0 0.0
        %v1772 = vand.u32 %v290, 4294901760
        %1773 = vmatmul.mubr.f32.gmra.mrb[0].mxu0 %v1772
        %v1774 = vpop.f32.mrb[0].mxu0
        %v1775 = vadd.f32 %v1489, %v1774
        %v1776 = vpop.f32.mrb[0].mxu0
        %1777 = vmatprep.mubr.f32.mxu0 0.0
        %v1778 = vand.u32 %v293, 4294901760
        %1779 = vmatmul.mubr.f32.gmra.mrb[0].mxu0 %v1778
        %v1780 = vpop.f32.mrb[0].mxu0
        %v1781 = vadd.f32 %v1497, %v1780
        %v1782 = vpop.f32.mrb[0].mxu0
        %1783 = vmatprep.mubr.f32.mxu0 0.0
        %v1784 = vand.u32 %v296, 4294901760
        %1785 = vmatmul.mubr.f32.gmra.mrb[0].mxu0 %v1784
        %v1786 = vpop.f32.mrb[0].mxu0
        %v1787 = vadd.f32 %v1505, %v1786
        %v1788 = vpop.f32.mrb[0].mxu0
        %1789 = vmatprep.mubr.f32.mxu0 0.0
        %v1790 = vand.u32 %v299, 4294901760
        %1791 = vmatmul.mubr.f32.gmra.mrb[0].mxu0 %v1790
        %v1792 = vpop.f32.mrb[0].mxu0
        %v1793 = vadd.f32 %v1513, %v1792
        %v1794 = vpop.f32.mrb[0].mxu0
        %1795 = vmatprep.mubr.f32.mxu0 0.0
        %v1796 = vand.u32 %v302, 4294901760
        %1797 = vmatmul.mubr.f32.gmra.mrb[0].mxu0 %v1796
        %v1798 = vpop.f32.mrb[0].mxu0
        %v1799 = vadd.f32 %v1521, %v1798
        %v1800 = vpop.f32.mrb[0].mxu0
        %1801 = vmatprep.mubr.f32.mxu0 0.0
        %v1802 = vand.u32 %v305, 4294901760
        %1803 = vmatmul.mubr.f32.gmra.mrb[0].mxu0 %v1802
        %v1804 = vpop.f32.mrb[0].mxu0
        %v1805 = vadd.f32 %v1529, %v1804
        %v1806 = vpop.f32.mrb[0].mxu0
        %1807 = vmatprep.mubr.f32.mxu0 0.0
        %v1808 = vand.u32 %v308, 4294901760
        %1809 = vmatmul.mubr.f32.gmra.mrb[0].mxu0 %v1808
        %v1810 = vpop.f32.mrb[0].mxu0
        %v1811 = vadd.f32 %v1537, %v1810
        %v1812 = vpop.f32.mrb[0].mxu0
        %1813 = vmatprep.mubr.f32.mxu0 0.0
        %v1814 = vand.u32 %v311, 4294901760
        %1815 = vmatmul.mubr.f32.gmra.mrb[0].mxu0 %v1814
        %v1816 = vpop.f32.mrb[0].mxu0
        %v1817 = vadd.f32 %v1545, %v1816
        %v1818 = vpop.f32.mrb[0].mxu0
        %1819 = vmatprep.mubr.f32.mxu0 0.0
        %v1820 = vand.u32 %v314, 4294901760
        %1821 = vmatmul.mubr.f32.gmra.mrb[0].mxu0 %v1820
        %v1822 = vpop.f32.mrb[0].mxu0
        %v1823 = vadd.f32 %v1553, %v1822
        %v1824 = vpop.f32.mrb[0].mxu0
        %1825 = vmatprep.mubr.f32.mxu0 0.0
        %v1826 = vand.u32 %v317, 4294901760
        %1827 = vmatmul.mubr.f32.gmra.mrb[0].mxu0 %v1826
        %v1828 = vpop.f32.mrb[0].mxu0
        %v1829 = vadd.f32 %v1561, %v1828
        %v1830 = vpop.f32.mrb[0].mxu0
        %1831 = vmatprep.mubr.f32.mxu0 0.0
        %v1832 = vand.u32 %v320, 4294901760
        %1833 = vmatmul.mubr.f32.gmra.mrb[0].mxu0 %v1832
        %v1834 = vpop.f32.mrb[0].mxu0
        %v1835 = vadd.f32 %v1569, %v1834
        %v1836 = vpop.f32.mrb[0].mxu0
        %1837 = vmatprep.mubr.f32.mxu0 0.0
        %v1838 = vand.u32 %v323, 4294901760
        %1839 = vmatmul.mubr.f32.gmra.mrb[0].mxu0 %v1838
        %v1840 = vpop.f32.mrb[0].mxu0
        %v1841 = vadd.f32 %v1577, %v1840
        %v1842 = vpop.f32.mrb[0].mxu0
        %1843 = vmatprep.mubr.f32.mxu0 0.0
        %v1844 = vand.u32 %v326, 4294901760
        %1845 = vmatmul.mubr.f32.gmra.mrb[0].mxu0 %v1844
        %v1846 = vpop.f32.mrb[0].mxu0
        %v1847 = vadd.f32 %v1585, %v1846
        %v1848 = vpop.f32.mrb[0].mxu0
        %1849 = vmatprep.mubr.f32.mxu0 0.0
        %v1850 = vand.u32 %v329, 4294901760
        %1851 = vmatmul.mubr.f32.gmra.mrb[0].mxu0 %v1850
        %v1852 = vpop.f32.mrb[0].mxu0
        %v1853 = vadd.f32 %v1593, %v1852
        %v1854 = vpop.f32.mrb[0].mxu0
        %1855 = vdwg.mxu0
        %1856 = vmatprep.subr.mxu0 0.0
        %v1857 = vand.u32 %v333, 4294901760
        %1858 = vmatpush1.msra.mxu0 %v1857
        %1859 = vmatprep.subr.mxu0 0.0
        %1860 = vmatpush1.msra.mxu0 0.0
        %1861 = vmatprep.subr.mxu0 0.0
        %1862 = vmatpush1.msra.mxu0 0.0
        %1863 = vmatprep.subr.mxu0 0.0
        %1864 = vmatpush1.msra.mxu0 0.0
        %1865 = vmatprep.subr.mxu0 0.0
        %1866 = vmatpush1.msra.mxu0 0.0
        %1867 = vmatprep.subr.mxu0 0.0
        %1868 = vmatpush1.msra.mxu0 0.0
        %1869 = vmatprep.subr.mxu0 0.0
        %1870 = vmatpush1.msra.mxu0 0.0
        %1871 = vmatprep.subr.mxu0 0.0
        %1872 = vmatpush1.msra.mxu0 0.0
        %1873 = vmatprep.subr.mxu0 0.0
        %1874 = vmatpush1.msra.mxu0 0.0
        %1875 = vmatprep.subr.mxu0 0.0
        %1876 = vmatpush1.msra.mxu0 0.0
        %1877 = vmatprep.subr.mxu0 0.0
        %1878 = vmatpush1.msra.mxu0 0.0
        %1879 = vmatprep.subr.mxu0 0.0
        %1880 = vmatpush1.msra.mxu0 0.0
        %1881 = vmatprep.subr.mxu0 0.0
        %1882 = vmatpush1.msra.mxu0 0.0
        %1883 = vmatprep.subr.mxu0 0.0
        %1884 = vmatpush1.msra.mxu0 0.0
        %1885 = vmatprep.subr.mxu0 0.0
        %1886 = vmatpush1.msra.mxu0 0.0
        %1887 = vmatprep.subr.mxu0 0.0
        %1888 = vmatpush1.msra.mxu0 0.0
        %1889 = vmatprep.subr.mxu0 0.0
        %1890 = vmatpush1.msra.mxu0 0.0
        %1891 = vmatprep.subr.mxu0 0.0
        %1892 = vmatpush1.msra.mxu0 0.0
        %1893 = vmatprep.subr.mxu0 0.0
        %1894 = vmatpush1.msra.mxu0 0.0
        %1895 = vmatprep.subr.mxu0 0.0
        %1896 = vmatpush1.msra.mxu0 0.0
        %1897 = vmatprep.subr.mxu0 0.0
        %1898 = vmatpush1.msra.mxu0 0.0
        %1899 = vmatprep.subr.mxu0 0.0
        %1900 = vmatpush1.msra.mxu0 0.0
        %1901 = vmatprep.subr.mxu0 0.0
        %1902 = vmatpush1.msra.mxu0 0.0
        %1903 = vmatprep.subr.mxu0 0.0
        %1904 = vmatpush1.msra.mxu0 0.0
        %1905 = vmatprep.subr.mxu0 0.0
        %1906 = vmatpush1.msra.mxu0 0.0
        %1907 = vmatprep.subr.mxu0 0.0
        %1908 = vmatpush1.msra.mxu0 0.0
        %1909 = vmatprep.subr.mxu0 0.0
        %1910 = vmatpush1.msra.mxu0 0.0
        %1911 = vmatprep.subr.mxu0 0.0
        %1912 = vmatpush1.msra.mxu0 0.0
        %1913 = vmatprep.subr.mxu0 0.0
        %1914 = vmatpush1.msra.mxu0 0.0
        %1915 = vmatprep.subr.mxu0 0.0
        %1916 = vmatpush1.msra.mxu0 0.0
        %1917 = vmatprep.subr.mxu0 0.0
        %1918 = vmatpush1.msra.mxu0 0.0
        %1919 = vmatprep.subr.mxu0 0.0
        %1920 = vmatpush1.msra.mxu0 0.0
        %1921 = vmatprep.mubr.f32.mxu0 0.0
        %v1922 = vand.u32 %v236, 4294901760
        %1923 = vmatmul.mubr.f32.gmra.mrb[0].mxu0 %v1922
        %v1924 = vpop.f32.mrb[0].mxu0
        %v1925 = vadd.f32 %v1667, %v1924
        %v1926 = vpop.f32.mrb[0].mxu0
        %1927 = vmatprep.mubr.f32.mxu0 0.0
        %v1928 = vand.u32 %v239, 4294901760
        %1929 = vmatmul.mubr.f32.gmra.mrb[0].mxu0 %v1928
        %v1930 = vpop.f32.mrb[0].mxu0
        %v1931 = vadd.f32 %v1673, %v1930
        %v1932 = vpop.f32.mrb[0].mxu0
        %1933 = vmatprep.mubr.f32.mxu0 0.0
        %v1934 = vand.u32 %v242, 4294901760
        %1935 = vmatmul.mubr.f32.gmra.mrb[0].mxu0 %v1934
        %v1936 = vpop.f32.mrb[0].mxu0
        %v1937 = vadd.f32 %v1679, %v1936
        %v1938 = vpop.f32.mrb[0].mxu0
        %1939 = vmatprep.mubr.f32.mxu0 0.0
        %v1940 = vand.u32 %v245, 4294901760
        %1941 = vmatmul.mubr.f32.gmra.mrb[0].mxu0 %v1940
        %v1942 = vpop.f32.mrb[0].mxu0
        %v1943 = vadd.f32 %v1685, %v1942
        %v1944 = vpop.f32.mrb[0].mxu0
        %1945 = vmatprep.mubr.f32.mxu0 0.0
        %v1946 = vand.u32 %v248, 4294901760
        %1947 = vmatmul.mubr.f32.gmra.mrb[0].mxu0 %v1946
        %v1948 = vpop.f32.mrb[0].mxu0
        %v1949 = vadd.f32 %v1691, %v1948
        %v1950 = vpop.f32.mrb[0].mxu0
        %1951 = vmatprep.mubr.f32.mxu0 0.0
        %v1952 = vand.u32 %v251, 4294901760
        %1953 = vmatmul.mubr.f32.gmra.mrb[0].mxu0 %v1952
        %v1954 = vpop.f32.mrb[0].mxu0
        %v1955 = vadd.f32 %v1697, %v1954
        %v1956 = vpop.f32.mrb[0].mxu0
        %1957 = vmatprep.mubr.f32.mxu0 0.0
        %v1958 = vand.u32 %v254, 4294901760
        %1959 = vmatmul.mubr.f32.gmra.mrb[0].mxu0 %v1958
        %v1960 = vpop.f32.mrb[0].mxu0
        %v1961 = vadd.f32 %v1703, %v1960
        %v1962 = vpop.f32.mrb[0].mxu0
        %1963 = vmatprep.mubr.f32.mxu0 0.0
        %v1964 = vand.u32 %v257, 4294901760
        %1965 = vmatmul.mubr.f32.gmra.mrb[0].mxu0 %v1964
        %v1966 = vpop.f32.mrb[0].mxu0
        %v1967 = vadd.f32 %v1709, %v1966
        %v1968 = vpop.f32.mrb[0].mxu0
        %1969 = vmatprep.mubr.f32.mxu0 0.0
        %v1970 = vand.u32 %v260, 4294901760
        %1971 = vmatmul.mubr.f32.gmra.mrb[0].mxu0 %v1970
        %v1972 = vpop.f32.mrb[0].mxu0
        %v1973 = vadd.f32 %v1715, %v1972
        %v1974 = vpop.f32.mrb[0].mxu0
        %1975 = vmatprep.mubr.f32.mxu0 0.0
        %v1976 = vand.u32 %v263, 4294901760
        %1977 = vmatmul.mubr.f32.gmra.mrb[0].mxu0 %v1976
        %v1978 = vpop.f32.mrb[0].mxu0
        %v1979 = vadd.f32 %v1721, %v1978
        %v1980 = vpop.f32.mrb[0].mxu0
        %1981 = vmatprep.mubr.f32.mxu0 0.0
        %v1982 = vand.u32 %v266, 4294901760
        %1983 = vmatmul.mubr.f32.gmra.mrb[0].mxu0 %v1982
        %v1984 = vpop.f32.mrb[0].mxu0
        %v1985 = vadd.f32 %v1727, %v1984
        %v1986 = vpop.f32.mrb[0].mxu0
        %1987 = vmatprep.mubr.f32.mxu0 0.0
        %v1988 = vand.u32 %v269, 4294901760
        %1989 = vmatmul.mubr.f32.gmra.mrb[0].mxu0 %v1988
        %v1990 = vpop.f32.mrb[0].mxu0
        %v1991 = vadd.f32 %v1733, %v1990
        %v1992 = vpop.f32.mrb[0].mxu0
        %1993 = vmatprep.mubr.f32.mxu0 0.0
        %v1994 = vand.u32 %v272, 4294901760
        %1995 = vmatmul.mubr.f32.gmra.mrb[0].mxu0 %v1994
        %v1996 = vpop.f32.mrb[0].mxu0
        %v1997 = vadd.f32 %v1739, %v1996
        %v1998 = vpop.f32.mrb[0].mxu0
        %1999 = vmatprep.mubr.f32.mxu0 0.0
        %v2000 = vand.u32 %v275, 4294901760
        %2001 = vmatmul.mubr.f32.gmra.mrb[0].mxu0 %v2000
        %v2002 = vpop.f32.mrb[0].mxu0
        %v2003 = vadd.f32 %v1745, %v2002
        %v2004 = vpop.f32.mrb[0].mxu0
        %2005 = vmatprep.mubr.f32.mxu0 0.0
        %v2006 = vand.u32 %v278, 4294901760
        %2007 = vmatmul.mubr.f32.gmra.mrb[0].mxu0 %v2006
        %v2008 = vpop.f32.mrb[0].mxu0
        %v2009 = vadd.f32 %v1751, %v2008
        %v2010 = vpop.f32.mrb[0].mxu0
        %2011 = vmatprep.mubr.f32.mxu0 0.0
        %v2012 = vand.u32 %v281, 4294901760
        %2013 = vmatmul.mubr.f32.gmra.mrb[0].mxu0 %v2012
        %v2014 = vpop.f32.mrb[0].mxu0
        %v2015 = vadd.f32 %v1757, %v2014
        %v2016 = vpop.f32.mrb[0].mxu0
        %2017 = vmatprep.mubr.f32.mxu0 0.0
        %v2018 = vand.u32 %v284, 4294901760
        %2019 = vmatmul.mubr.f32.gmra.mrb[0].mxu0 %v2018
        %v2020 = vpop.f32.mrb[0].mxu0
        %v2021 = vadd.f32 %v1763, %v2020
        %v2022 = vpop.f32.mrb[0].mxu0
        %2023 = vmatprep.mubr.f32.mxu0 0.0
        %v2024 = vand.u32 %v287, 4294901760
        %2025 = vmatmul.mubr.f32.gmra.mrb[0].mxu0 %v2024
        %v2026 = vpop.f32.mrb[0].mxu0
        %v2027 = vadd.f32 %v1769, %v2026
        %v2028 = vpop.f32.mrb[0].mxu0
        %2029 = vmatprep.mubr.f32.mxu0 0.0
        %v2030 = vand.u32 %v290, 4294901760
        %2031 = vmatmul.mubr.f32.gmra.mrb[0].mxu0 %v2030
        %v2032 = vpop.f32.mrb[0].mxu0
        %v2033 = vadd.f32 %v1775, %v2032
        %v2034 = vpop.f32.mrb[0].mxu0
        %2035 = vmatprep.mubr.f32.mxu0 0.0
        %v2036 = vand.u32 %v293, 4294901760
        %2037 = vmatmul.mubr.f32.gmra.mrb[0].mxu0 %v2036
        %v2038 = vpop.f32.mrb[0].mxu0
        %v2039 = vadd.f32 %v1781, %v2038
        %v2040 = vpop.f32.mrb[0].mxu0
        %2041 = vmatprep.mubr.f32.mxu0 0.0
        %v2042 = vand.u32 %v296, 4294901760
        %2043 = vmatmul.mubr.f32.gmra.mrb[0].mxu0 %v2042
        %v2044 = vpop.f32.mrb[0].mxu0
        %v2045 = vadd.f32 %v1787, %v2044
        %v2046 = vpop.f32.mrb[0].mxu0
        %2047 = vmatprep.mubr.f32.mxu0 0.0
        %v2048 = vand.u32 %v299, 4294901760
        %2049 = vmatmul.mubr.f32.gmra.mrb[0].mxu0 %v2048
        %v2050 = vpop.f32.mrb[0].mxu0
        %v2051 = vadd.f32 %v1793, %v2050
        %v2052 = vpop.f32.mrb[0].mxu0
        %2053 = vmatprep.mubr.f32.mxu0 0.0
        %v2054 = vand.u32 %v302, 4294901760
        %2055 = vmatmul.mubr.f32.gmra.mrb[0].mxu0 %v2054
        %v2056 = vpop.f32.mrb[0].mxu0
        %v2057 = vadd.f32 %v1799, %v2056
        %v2058 = vpop.f32.mrb[0].mxu0
        %2059 = vmatprep.mubr.f32.mxu0 0.0
        %v2060 = vand.u32 %v305, 4294901760
        %2061 = vmatmul.mubr.f32.gmra.mrb[0].mxu0 %v2060
        %v2062 = vpop.f32.mrb[0].mxu0
        %v2063 = vadd.f32 %v1805, %v2062
        %v2064 = vpop.f32.mrb[0].mxu0
        %2065 = vmatprep.mubr.f32.mxu0 0.0
        %v2066 = vand.u32 %v308, 4294901760
        %2067 = vmatmul.mubr.f32.gmra.mrb[0].mxu0 %v2066
        %v2068 = vpop.f32.mrb[0].mxu0
        %v2069 = vadd.f32 %v1811, %v2068
        %v2070 = vpop.f32.mrb[0].mxu0
        %2071 = vmatprep.mubr.f32.mxu0 0.0
        %v2072 = vand.u32 %v311, 4294901760
        %2073 = vmatmul.mubr.f32.gmra.mrb[0].mxu0 %v2072
        %v2074 = vpop.f32.mrb[0].mxu0
        %v2075 = vadd.f32 %v1817, %v2074
        %v2076 = vpop.f32.mrb[0].mxu0
        %2077 = vmatprep.mubr.f32.mxu0 0.0
        %v2078 = vand.u32 %v314, 4294901760
        %2079 = vmatmul.mubr.f32.gmra.mrb[0].mxu0 %v2078
        %v2080 = vpop.f32.mrb[0].mxu0
        %v2081 = vadd.f32 %v1823, %v2080
        %v2082 = vpop.f32.mrb[0].mxu0
        %2083 = vmatprep.mubr.f32.mxu0 0.0
        %v2084 = vand.u32 %v317, 4294901760
        %2085 = vmatmul.mubr.f32.gmra.mrb[0].mxu0 %v2084
        %v2086 = vpop.f32.mrb[0].mxu0
        %v2087 = vadd.f32 %v1829, %v2086
        %v2088 = vpop.f32.mrb[0].mxu0
        %2089 = vmatprep.mubr.f32.mxu0 0.0
        %v2090 = vand.u32 %v320, 4294901760
        %2091 = vmatmul.mubr.f32.gmra.mrb[0].mxu0 %v2090
        %v2092 = vpop.f32.mrb[0].mxu0
        %v2093 = vadd.f32 %v1835, %v2092
        %v2094 = vpop.f32.mrb[0].mxu0
        %2095 = vmatprep.mubr.f32.mxu0 0.0
        %v2096 = vand.u32 %v323, 4294901760
        %2097 = vmatmul.mubr.f32.gmra.mrb[0].mxu0 %v2096
        %v2098 = vpop.f32.mrb[0].mxu0
        %v2099 = vadd.f32 %v1841, %v2098
        %v2100 = vpop.f32.mrb[0].mxu0
        %2101 = vmatprep.mubr.f32.mxu0 0.0
        %v2102 = vand.u32 %v326, 4294901760
        %2103 = vmatmul.mubr.f32.gmra.mrb[0].mxu0 %v2102
        %v2104 = vpop.f32.mrb[0].mxu0
        %v2105 = vadd.f32 %v1847, %v2104
        %v2106 = vpop.f32.mrb[0].mxu0
        %2107 = vmatprep.mubr.f32.mxu0 0.0
        %v2108 = vand.u32 %v329, 4294901760
        %2109 = vmatmul.mubr.f32.gmra.mrb[0].mxu0 %v2108
        %v2110 = vpop.f32.mrb[0].mxu0
        %v2111 = vadd.f32 %v1853, %v2110
        %v2112 = vpop.f32.mrb[0].mxu0
        %2113 = vdwg.mxu0
        %s2114 = smul.u32 %s20, 256
        %v2115 = vlaneseq
        %v2116 = vand.u32 %v2115, 127
        %v2117 = vadd.s32 %v2116, 128
        %v2118 = vstv %s2114
        %v2119 = vadd.s32 %v2118, %v2116
        %v2120 = vadd.s32 %v2118, %v2117
        %s2121 = sld [smem:[#allocation3]]
        %v2122 = vstv %s2121
        %vm2123 = vcmp.lt.s32.totalorder %v2119, %v2122
        %vm2124 = vcmp.lt.s32.totalorder %v2120, %v2122
        %v2125 = vsel %vm2123, 1, 0
        %v2126 = vsel %vm2124, 1, 0
        %v2127 = vcvt.s32.f32 %v2125
        %v2128 = vcvt.s32.f32 %v2126
        %v2129 = vld [vmem:[#allocation4] sm:$0x1]
        %2130 = vmatprep.subr.mxu0 0.0
        %v2131 = vand.u32 %v1925, 4294901760
        %2132 = vmatpush1.msra.mxu0 %v2131
        %2133 = vmatprep.subr.mxu0 0.0
        %v2134 = vand.u32 %v1931, 4294901760
        %2135 = vmatpush1.msra.mxu0 %v2134
        %2136 = vmatprep.subr.mxu0 0.0
        %v2137 = vand.u32 %v1937, 4294901760
        %2138 = vmatpush1.msra.mxu0 %v2137
        %2139 = vmatprep.subr.mxu0 0.0
        %v2140 = vand.u32 %v1943, 4294901760
        %2141 = vmatpush1.msra.mxu0 %v2140
        %2142 = vmatprep.subr.mxu0 0.0
        %v2143 = vand.u32 %v1949, 4294901760
        %2144 = vmatpush1.msra.mxu0 %v2143
        %2145 = vmatprep.subr.mxu0 0.0
        %v2146 = vand.u32 %v1955, 4294901760
        %2147 = vmatpush1.msra.mxu0 %v2146
        %2148 = vmatprep.subr.mxu0 0.0
        %v2149 = vand.u32 %v1961, 4294901760
        %2150 = vmatpush1.msra.mxu0 %v2149
        %2151 = vmatprep.subr.mxu0 0.0
        %v2152 = vand.u32 %v1967, 4294901760
        %2153 = vmatpush1.msra.mxu0 %v2152
        %2154 = vmatprep.subr.mxu0 0.0
        %v2155 = vand.u32 %v1973, 4294901760
        %2156 = vmatpush1.msra.mxu0 %v2155
        %2157 = vmatprep.subr.mxu0 0.0
        %v2158 = vand.u32 %v1979, 4294901760
        %2159 = vmatpush1.msra.mxu0 %v2158
        %2160 = vmatprep.subr.mxu0 0.0
        %v2161 = vand.u32 %v1985, 4294901760
        %2162 = vmatpush1.msra.mxu0 %v2161
        %2163 = vmatprep.subr.mxu0 0.0
        %v2164 = vand.u32 %v1991, 4294901760
        %2165 = vmatpush1.msra.mxu0 %v2164
        %2166 = vmatprep.subr.mxu0 0.0
        %v2167 = vand.u32 %v1997, 4294901760
        %2168 = vmatpush1.msra.mxu0 %v2167
        %2169 = vmatprep.subr.mxu0 0.0
        %v2170 = vand.u32 %v2003, 4294901760
        %2171 = vmatpush1.msra.mxu0 %v2170
        %2172 = vmatprep.subr.mxu0 0.0
        %v2173 = vand.u32 %v2009, 4294901760
        %2174 = vmatpush1.msra.mxu0 %v2173
        %2175 = vmatprep.subr.mxu0 0.0
        %v2176 = vand.u32 %v2015, 4294901760
        %2177 = vmatpush1.msra.mxu0 %v2176
        %2178 = vmatprep.subr.mxu0 0.0
        %v2179 = vand.u32 %v2021, 4294901760
        %2180 = vmatpush1.msra.mxu0 %v2179
        %2181 = vmatprep.subr.mxu0 0.0
        %v2182 = vand.u32 %v2027, 4294901760
        %2183 = vmatpush1.msra.mxu0 %v2182
        %2184 = vmatprep.subr.mxu0 0.0
        %v2185 = vand.u32 %v2033, 4294901760
        %2186 = vmatpush1.msra.mxu0 %v2185
        %2187 = vmatprep.subr.mxu0 0.0
        %v2188 = vand.u32 %v2039, 4294901760
        %2189 = vmatpush1.msra.mxu0 %v2188
        %2190 = vmatprep.subr.mxu0 0.0
        %v2191 = vand.u32 %v2045, 4294901760
        %2192 = vmatpush1.msra.mxu0 %v2191
        %2193 = vmatprep.subr.mxu0 0.0
        %v2194 = vand.u32 %v2051, 4294901760
        %2195 = vmatpush1.msra.mxu0 %v2194
        %2196 = vmatprep.subr.mxu0 0.0
        %v2197 = vand.u32 %v2057, 4294901760
        %2198 = vmatpush1.msra.mxu0 %v2197
        %2199 = vmatprep.subr.mxu0 0.0
        %v2200 = vand.u32 %v2063, 4294901760
        %2201 = vmatpush1.msra.mxu0 %v2200
        %2202 = vmatprep.subr.mxu0 0.0
        %v2203 = vand.u32 %v2069, 4294901760
        %2204 = vmatpush1.msra.mxu0 %v2203
        %2205 = vmatprep.subr.mxu0 0.0
        %v2206 = vand.u32 %v2075, 4294901760
        %2207 = vmatpush1.msra.mxu0 %v2206
        %2208 = vmatprep.subr.mxu0 0.0
        %v2209 = vand.u32 %v2081, 4294901760
        %2210 = vmatpush1.msra.mxu0 %v2209
        %2211 = vmatprep.subr.mxu0 0.0
        %v2212 = vand.u32 %v2087, 4294901760
        %2213 = vmatpush1.msra.mxu0 %v2212
        %2214 = vmatprep.subr.mxu0 0.0
        %v2215 = vand.u32 %v2093, 4294901760
        %2216 = vmatpush1.msra.mxu0 %v2215
        %2217 = vmatprep.subr.mxu0 0.0
        %v2218 = vand.u32 %v2099, 4294901760
        %2219 = vmatpush1.msra.mxu0 %v2218
        %2220 = vmatprep.subr.mxu0 0.0
        %v2221 = vand.u32 %v2105, 4294901760
        %2222 = vmatpush1.msra.mxu0 %v2221
        %2223 = vmatprep.subr.mxu0 0.0
        %v2224 = vand.u32 %v2111, 4294901760
        %2225 = vmatpush1.msra.mxu0 %v2224
        %v2226 = vand.u32 %v2128, 4294901760
        %v2227 = vsub.f32 %v2128, %v2226
        %v2228 = vand.u32 %v2227, 4294901760
        %v2229 = vsub.f32 %v2227, %v2228
        %v2230 = vand.u32 %v2229, 4294901760
        %2231 = vmatprep.mubr.f32.mxu0 %v2230
        %v2232 = vand.u32 %v2127, 4294901760
        %v2233 = vsub.f32 %v2127, %v2232
        %v2234 = vand.u32 %v2233, 4294901760
        %v2235 = vsub.f32 %v2233, %v2234
        %v2236 = vand.u32 %v2235, 4294901760
        %2237 = vmatmul.mubr.f32.gmra.mrb[0].mxu0 %v2236
        %v2238 = vpop.f32.mrb[0].mxu0
        %v2239 = vadd.f32 0.0, %v2238
        %v2240 = vpop.f32.mrb[0].mxu0
        %2241 = vdwg.mxu0
        %2242 = vmatprep.subr.mxu0 0.0
        %v2243 = vand.u32 %v1925, 4294901760
        %v2244 = vsub.f32 %v1925, %v2243
        %v2245 = vand.u32 %v2244, 4294901760
        %v2246 = vsub.f32 %v2244, %v2245
        %v2247 = vand.u32 %v2246, 4294901760
        %2248 = vmatpush1.msra.mxu0 %v2247
        %2249 = vmatprep.subr.mxu0 0.0
        %v2250 = vand.u32 %v1931, 4294901760
        %v2251 = vsub.f32 %v1931, %v2250
        %v2252 = vand.u32 %v2251, 4294901760
        %v2253 = vsub.f32 %v2251, %v2252
        %v2254 = vand.u32 %v2253, 4294901760
        %2255 = vmatpush1.msra.mxu0 %v2254
        %2256 = vmatprep.subr.mxu0 0.0
        %v2257 = vand.u32 %v1937, 4294901760
        %v2258 = vsub.f32 %v1937, %v2257
        %v2259 = vand.u32 %v2258, 4294901760
        %v2260 = vsub.f32 %v2258, %v2259
        %v2261 = vand.u32 %v2260, 4294901760
        %2262 = vmatpush1.msra.mxu0 %v2261
        %2263 = vmatprep.subr.mxu0 0.0
        %v2264 = vand.u32 %v1943, 4294901760
        %v2265 = vsub.f32 %v1943, %v2264
        %v2266 = vand.u32 %v2265, 4294901760
        %v2267 = vsub.f32 %v2265, %v2266
        %v2268 = vand.u32 %v2267, 4294901760
        %2269 = vmatpush1.msra.mxu0 %v2268
        %2270 = vmatprep.subr.mxu0 0.0
        %v2271 = vand.u32 %v1949, 4294901760
        %v2272 = vsub.f32 %v1949, %v2271
        %v2273 = vand.u32 %v2272, 4294901760
        %v2274 = vsub.f32 %v2272, %v2273
        %v2275 = vand.u32 %v2274, 4294901760
        %2276 = vmatpush1.msra.mxu0 %v2275
        %2277 = vmatprep.subr.mxu0 0.0
        %v2278 = vand.u32 %v1955, 4294901760
        %v2279 = vsub.f32 %v1955, %v2278
        %v2280 = vand.u32 %v2279, 4294901760
        %v2281 = vsub.f32 %v2279, %v2280
        %v2282 = vand.u32 %v2281, 4294901760
        %2283 = vmatpush1.msra.mxu0 %v2282
        %2284 = vmatprep.subr.mxu0 0.0
        %v2285 = vand.u32 %v1961, 4294901760
        %v2286 = vsub.f32 %v1961, %v2285
        %v2287 = vand.u32 %v2286, 4294901760
        %v2288 = vsub.f32 %v2286, %v2287
        %v2289 = vand.u32 %v2288, 4294901760
        %2290 = vmatpush1.msra.mxu0 %v2289
        %2291 = vmatprep.subr.mxu0 0.0
        %v2292 = vand.u32 %v1967, 4294901760
        %v2293 = vsub.f32 %v1967, %v2292
        %v2294 = vand.u32 %v2293, 4294901760
        %v2295 = vsub.f32 %v2293, %v2294
        %v2296 = vand.u32 %v2295, 4294901760
        %2297 = vmatpush1.msra.mxu0 %v2296
        %2298 = vmatprep.subr.mxu0 0.0
        %v2299 = vand.u32 %v1973, 4294901760
        %v2300 = vsub.f32 %v1973, %v2299
        %v2301 = vand.u32 %v2300, 4294901760
        %v2302 = vsub.f32 %v2300, %v2301
        %v2303 = vand.u32 %v2302, 4294901760
        %2304 = vmatpush1.msra.mxu0 %v2303
        %2305 = vmatprep.subr.mxu0 0.0
        %v2306 = vand.u32 %v1979, 4294901760
        %v2307 = vsub.f32 %v1979, %v2306
        %v2308 = vand.u32 %v2307, 4294901760
        %v2309 = vsub.f32 %v2307, %v2308
        %v2310 = vand.u32 %v2309, 4294901760
        %2311 = vmatpush1.msra.mxu0 %v2310
        %2312 = vmatprep.subr.mxu0 0.0
        %v2313 = vand.u32 %v1985, 4294901760
        %v2314 = vsub.f32 %v1985, %v2313
        %v2315 = vand.u32 %v2314, 4294901760
        %v2316 = vsub.f32 %v2314, %v2315
        %v2317 = vand.u32 %v2316, 4294901760
        %2318 = vmatpush1.msra.mxu0 %v2317
        %2319 = vmatprep.subr.mxu0 0.0
        %v2320 = vand.u32 %v1991, 4294901760
        %v2321 = vsub.f32 %v1991, %v2320
        %v2322 = vand.u32 %v2321, 4294901760
        %v2323 = vsub.f32 %v2321, %v2322
        %v2324 = vand.u32 %v2323, 4294901760
        %2325 = vmatpush1.msra.mxu0 %v2324
        %2326 = vmatprep.subr.mxu0 0.0
        %v2327 = vand.u32 %v1997, 4294901760
        %v2328 = vsub.f32 %v1997, %v2327
        %v2329 = vand.u32 %v2328, 4294901760
        %v2330 = vsub.f32 %v2328, %v2329
        %v2331 = vand.u32 %v2330, 4294901760
        %2332 = vmatpush1.msra.mxu0 %v2331
        %2333 = vmatprep.subr.mxu0 0.0
        %v2334 = vand.u32 %v2003, 4294901760
        %v2335 = vsub.f32 %v2003, %v2334
        %v2336 = vand.u32 %v2335, 4294901760
        %v2337 = vsub.f32 %v2335, %v2336
        %v2338 = vand.u32 %v2337, 4294901760
        %2339 = vmatpush1.msra.mxu0 %v2338
        %2340 = vmatprep.subr.mxu0 0.0
        %v2341 = vand.u32 %v2009, 4294901760
        %v2342 = vsub.f32 %v2009, %v2341
        %v2343 = vand.u32 %v2342, 4294901760
        %v2344 = vsub.f32 %v2342, %v2343
        %v2345 = vand.u32 %v2344, 4294901760
        %2346 = vmatpush1.msra.mxu0 %v2345
        %2347 = vmatprep.subr.mxu0 0.0
        %v2348 = vand.u32 %v2015, 4294901760
        %v2349 = vsub.f32 %v2015, %v2348
        %v2350 = vand.u32 %v2349, 4294901760
        %v2351 = vsub.f32 %v2349, %v2350
        %v2352 = vand.u32 %v2351, 4294901760
        %2353 = vmatpush1.msra.mxu0 %v2352
        %2354 = vmatprep.subr.mxu0 0.0
        %v2355 = vand.u32 %v2021, 4294901760
        %v2356 = vsub.f32 %v2021, %v2355
        %v2357 = vand.u32 %v2356, 4294901760
        %v2358 = vsub.f32 %v2356, %v2357
        %v2359 = vand.u32 %v2358, 4294901760
        %2360 = vmatpush1.msra.mxu0 %v2359
        %2361 = vmatprep.subr.mxu0 0.0
        %v2362 = vand.u32 %v2027, 4294901760
        %v2363 = vsub.f32 %v2027, %v2362
        %v2364 = vand.u32 %v2363, 4294901760
        %v2365 = vsub.f32 %v2363, %v2364
        %v2366 = vand.u32 %v2365, 4294901760
        %2367 = vmatpush1.msra.mxu0 %v2366
        %2368 = vmatprep.subr.mxu0 0.0
        %v2369 = vand.u32 %v2033, 4294901760
        %v2370 = vsub.f32 %v2033, %v2369
        %v2371 = vand.u32 %v2370, 4294901760
        %v2372 = vsub.f32 %v2370, %v2371
        %v2373 = vand.u32 %v2372, 4294901760
        %2374 = vmatpush1.msra.mxu0 %v2373
        %2375 = vmatprep.subr.mxu0 0.0
        %v2376 = vand.u32 %v2039, 4294901760
        %v2377 = vsub.f32 %v2039, %v2376
        %v2378 = vand.u32 %v2377, 4294901760
        %v2379 = vsub.f32 %v2377, %v2378
        %v2380 = vand.u32 %v2379, 4294901760
        %2381 = vmatpush1.msra.mxu0 %v2380
        %2382 = vmatprep.subr.mxu0 0.0
        %v2383 = vand.u32 %v2045, 4294901760
        %v2384 = vsub.f32 %v2045, %v2383
        %v2385 = vand.u32 %v2384, 4294901760
        %v2386 = vsub.f32 %v2384, %v2385
        %v2387 = vand.u32 %v2386, 4294901760
        %2388 = vmatpush1.msra.mxu0 %v2387
        %2389 = vmatprep.subr.mxu0 0.0
        %v2390 = vand.u32 %v2051, 4294901760
        %v2391 = vsub.f32 %v2051, %v2390
        %v2392 = vand.u32 %v2391, 4294901760
        %v2393 = vsub.f32 %v2391, %v2392
        %v2394 = vand.u32 %v2393, 4294901760
        %2395 = vmatpush1.msra.mxu0 %v2394
        %2396 = vmatprep.subr.mxu0 0.0
        %v2397 = vand.u32 %v2057, 4294901760
        %v2398 = vsub.f32 %v2057, %v2397
        %v2399 = vand.u32 %v2398, 4294901760
        %v2400 = vsub.f32 %v2398, %v2399
        %v2401 = vand.u32 %v2400, 4294901760
        %2402 = vmatpush1.msra.mxu0 %v2401
        %2403 = vmatprep.subr.mxu0 0.0
        %v2404 = vand.u32 %v2063, 4294901760
        %v2405 = vsub.f32 %v2063, %v2404
        %v2406 = vand.u32 %v2405, 4294901760
        %v2407 = vsub.f32 %v2405, %v2406
        %v2408 = vand.u32 %v2407, 4294901760
        %2409 = vmatpush1.msra.mxu0 %v2408
        %2410 = vmatprep.subr.mxu0 0.0
        %v2411 = vand.u32 %v2069, 4294901760
        %v2412 = vsub.f32 %v2069, %v2411
        %v2413 = vand.u32 %v2412, 4294901760
        %v2414 = vsub.f32 %v2412, %v2413
        %v2415 = vand.u32 %v2414, 4294901760
        %2416 = vmatpush1.msra.mxu0 %v2415
        %2417 = vmatprep.subr.mxu0 0.0
        %v2418 = vand.u32 %v2075, 4294901760
        %v2419 = vsub.f32 %v2075, %v2418
        %v2420 = vand.u32 %v2419, 4294901760
        %v2421 = vsub.f32 %v2419, %v2420
        %v2422 = vand.u32 %v2421, 4294901760
        %2423 = vmatpush1.msra.mxu0 %v2422
        %2424 = vmatprep.subr.mxu0 0.0
        %v2425 = vand.u32 %v2081, 4294901760
        %v2426 = vsub.f32 %v2081, %v2425
        %v2427 = vand.u32 %v2426, 4294901760
        %v2428 = vsub.f32 %v2426, %v2427
        %v2429 = vand.u32 %v2428, 4294901760
        %2430 = vmatpush1.msra.mxu0 %v2429
        %2431 = vmatprep.subr.mxu0 0.0
        %v2432 = vand.u32 %v2087, 4294901760
        %v2433 = vsub.f32 %v2087, %v2432
        %v2434 = vand.u32 %v2433, 4294901760
        %v2435 = vsub.f32 %v2433, %v2434
        %v2436 = vand.u32 %v2435, 4294901760
        %2437 = vmatpush1.msra.mxu0 %v2436
        %2438 = vmatprep.subr.mxu0 0.0
        %v2439 = vand.u32 %v2093, 4294901760
        %v2440 = vsub.f32 %v2093, %v2439
        %v2441 = vand.u32 %v2440, 4294901760
        %v2442 = vsub.f32 %v2440, %v2441
        %v2443 = vand.u32 %v2442, 4294901760
        %2444 = vmatpush1.msra.mxu0 %v2443
        %2445 = vmatprep.subr.mxu0 0.0
        %v2446 = vand.u32 %v2099, 4294901760
        %v2447 = vsub.f32 %v2099, %v2446
        %v2448 = vand.u32 %v2447, 4294901760
        %v2449 = vsub.f32 %v2447, %v2448
        %v2450 = vand.u32 %v2449, 4294901760
        %2451 = vmatpush1.msra.mxu0 %v2450
        %2452 = vmatprep.subr.mxu0 0.0
        %v2453 = vand.u32 %v2105, 4294901760
        %v2454 = vsub.f32 %v2105, %v2453
        %v2455 = vand.u32 %v2454, 4294901760
        %v2456 = vsub.f32 %v2454, %v2455
        %v2457 = vand.u32 %v2456, 4294901760
        %2458 = vmatpush1.msra.mxu0 %v2457
        %2459 = vmatprep.subr.mxu0 0.0
        %v2460 = vand.u32 %v2111, 4294901760
        %v2461 = vsub.f32 %v2111, %v2460
        %v2462 = vand.u32 %v2461, 4294901760
        %v2463 = vsub.f32 %v2461, %v2462
        %v2464 = vand.u32 %v2463, 4294901760
        %2465 = vmatpush1.msra.mxu0 %v2464
        %v2466 = vand.u32 %v2128, 4294901760
        %2467 = vmatprep.mubr.f32.mxu0 %v2466
        %v2468 = vand.u32 %v2127, 4294901760
        %2469 = vmatmul.mubr.f32.gmra.mrb[0].mxu0 %v2468
        %v2470 = vpop.f32.mrb[0].mxu0
        %v2471 = vadd.f32 %v2239, %v2470
        %v2472 = vpop.f32.mrb[0].mxu0
        %2473 = vdwg.mxu0
        %2474 = vmatprep.subr.mxu0 0.0
        %v2475 = vand.u32 %v1925, 4294901760
        %v2476 = vsub.f32 %v1925, %v2475
        %2477 = vmatpush1.msra.mxu0 %v2476
        %2478 = vmatprep.subr.mxu0 0.0
        %v2479 = vand.u32 %v1931, 4294901760
        %v2480 = vsub.f32 %v1931, %v2479
        %2481 = vmatpush1.msra.mxu0 %v2480
        %2482 = vmatprep.subr.mxu0 0.0
        %v2483 = vand.u32 %v1937, 4294901760
        %v2484 = vsub.f32 %v1937, %v2483
        %2485 = vmatpush1.msra.mxu0 %v2484
        %2486 = vmatprep.subr.mxu0 0.0
        %v2487 = vand.u32 %v1943, 4294901760
        %v2488 = vsub.f32 %v1943, %v2487
        %2489 = vmatpush1.msra.mxu0 %v2488
        %2490 = vmatprep.subr.mxu0 0.0
        %v2491 = vand.u32 %v1949, 4294901760
        %v2492 = vsub.f32 %v1949, %v2491
        %2493 = vmatpush1.msra.mxu0 %v2492
        %2494 = vmatprep.subr.mxu0 0.0
        %v2495 = vand.u32 %v1955, 4294901760
        %v2496 = vsub.f32 %v1955, %v2495
        %2497 = vmatpush1.msra.mxu0 %v2496
        %2498 = vmatprep.subr.mxu0 0.0
        %v2499 = vand.u32 %v1961, 4294901760
        %v2500 = vsub.f32 %v1961, %v2499
        %2501 = vmatpush1.msra.mxu0 %v2500
        %2502 = vmatprep.subr.mxu0 0.0
        %v2503 = vand.u32 %v1967, 4294901760
        %v2504 = vsub.f32 %v1967, %v2503
        %2505 = vmatpush1.msra.mxu0 %v2504
        %2506 = vmatprep.subr.mxu0 0.0
        %v2507 = vand.u32 %v1973, 4294901760
        %v2508 = vsub.f32 %v1973, %v2507
        %2509 = vmatpush1.msra.mxu0 %v2508
        %2510 = vmatprep.subr.mxu0 0.0
        %v2511 = vand.u32 %v1979, 4294901760
        %v2512 = vsub.f32 %v1979, %v2511
        %2513 = vmatpush1.msra.mxu0 %v2512
        %2514 = vmatprep.subr.mxu0 0.0
        %v2515 = vand.u32 %v1985, 4294901760
        %v2516 = vsub.f32 %v1985, %v2515
        %2517 = vmatpush1.msra.mxu0 %v2516
        %2518 = vmatprep.subr.mxu0 0.0
        %v2519 = vand.u32 %v1991, 4294901760
        %v2520 = vsub.f32 %v1991, %v2519
        %2521 = vmatpush1.msra.mxu0 %v2520
        %2522 = vmatprep.subr.mxu0 0.0
        %v2523 = vand.u32 %v1997, 4294901760
        %v2524 = vsub.f32 %v1997, %v2523
        %2525 = vmatpush1.msra.mxu0 %v2524
        %2526 = vmatprep.subr.mxu0 0.0
        %v2527 = vand.u32 %v2003, 4294901760
        %v2528 = vsub.f32 %v2003, %v2527
        %2529 = vmatpush1.msra.mxu0 %v2528
        %2530 = vmatprep.subr.mxu0 0.0
        %v2531 = vand.u32 %v2009, 4294901760
        %v2532 = vsub.f32 %v2009, %v2531
        %2533 = vmatpush1.msra.mxu0 %v2532
        %2534 = vmatprep.subr.mxu0 0.0
        %v2535 = vand.u32 %v2015, 4294901760
        %v2536 = vsub.f32 %v2015, %v2535
        %2537 = vmatpush1.msra.mxu0 %v2536
        %2538 = vmatprep.subr.mxu0 0.0
        %v2539 = vand.u32 %v2021, 4294901760
        %v2540 = vsub.f32 %v2021, %v2539
        %2541 = vmatpush1.msra.mxu0 %v2540
        %2542 = vmatprep.subr.mxu0 0.0
        %v2543 = vand.u32 %v2027, 4294901760
        %v2544 = vsub.f32 %v2027, %v2543
        %2545 = vmatpush1.msra.mxu0 %v2544
        %2546 = vmatprep.subr.mxu0 0.0
        %v2547 = vand.u32 %v2033, 4294901760
        %v2548 = vsub.f32 %v2033, %v2547
        %2549 = vmatpush1.msra.mxu0 %v2548
        %2550 = vmatprep.subr.mxu0 0.0
        %v2551 = vand.u32 %v2039, 4294901760
        %v2552 = vsub.f32 %v2039, %v2551
        %2553 = vmatpush1.msra.mxu0 %v2552
        %2554 = vmatprep.subr.mxu0 0.0
        %v2555 = vand.u32 %v2045, 4294901760
        %v2556 = vsub.f32 %v2045, %v2555
        %2557 = vmatpush1.msra.mxu0 %v2556
        %2558 = vmatprep.subr.mxu0 0.0
        %v2559 = vand.u32 %v2051, 4294901760
        %v2560 = vsub.f32 %v2051, %v2559
        %2561 = vmatpush1.msra.mxu0 %v2560
        %2562 = vmatprep.subr.mxu0 0.0
        %v2563 = vand.u32 %v2057, 4294901760
        %v2564 = vsub.f32 %v2057, %v2563
        %2565 = vmatpush1.msra.mxu0 %v2564
        %2566 = vmatprep.subr.mxu0 0.0
        %v2567 = vand.u32 %v2063, 4294901760
        %v2568 = vsub.f32 %v2063, %v2567
        %2569 = vmatpush1.msra.mxu0 %v2568
        %2570 = vmatprep.subr.mxu0 0.0
        %v2571 = vand.u32 %v2069, 4294901760
        %v2572 = vsub.f32 %v2069, %v2571
        %2573 = vmatpush1.msra.mxu0 %v2572
        %2574 = vmatprep.subr.mxu0 0.0
        %v2575 = vand.u32 %v2075, 4294901760
        %v2576 = vsub.f32 %v2075, %v2575
        %2577 = vmatpush1.msra.mxu0 %v2576
        %2578 = vmatprep.subr.mxu0 0.0
        %v2579 = vand.u32 %v2081, 4294901760
        %v2580 = vsub.f32 %v2081, %v2579
        %2581 = vmatpush1.msra.mxu0 %v2580
        %2582 = vmatprep.subr.mxu0 0.0
        %v2583 = vand.u32 %v2087, 4294901760
        %v2584 = vsub.f32 %v2087, %v2583
        %2585 = vmatpush1.msra.mxu0 %v2584
        %2586 = vmatprep.subr.mxu0 0.0
        %v2587 = vand.u32 %v2093, 4294901760
        %v2588 = vsub.f32 %v2093, %v2587
        %2589 = vmatpush1.msra.mxu0 %v2588
        %2590 = vmatprep.subr.mxu0 0.0
        %v2591 = vand.u32 %v2099, 4294901760
        %v2592 = vsub.f32 %v2099, %v2591
        %2593 = vmatpush1.msra.mxu0 %v2592
        %2594 = vmatprep.subr.mxu0 0.0
        %v2595 = vand.u32 %v2105, 4294901760
        %v2596 = vsub.f32 %v2105, %v2595
        %2597 = vmatpush1.msra.mxu0 %v2596
        %2598 = vmatprep.subr.mxu0 0.0
        %v2599 = vand.u32 %v2111, 4294901760
        %v2600 = vsub.f32 %v2111, %v2599
        %2601 = vmatpush1.msra.mxu0 %v2600
        %v2602 = vand.u32 %v2128, 4294901760
        %v2603 = vsub.f32 %v2128, %v2602
        %2604 = vmatprep.mubr.f32.mxu0 %v2603
        %v2605 = vand.u32 %v2127, 4294901760
        %v2606 = vsub.f32 %v2127, %v2605
        %2607 = vmatmul.mubr.f32.gmra.mrb[0].mxu0 %v2606
        %v2608 = vpop.f32.mrb[0].mxu0
        %v2609 = vadd.f32 %v2471, %v2608
        %v2610 = vpop.f32.mrb[0].mxu0
        %2611 = vdwg.mxu0
        %2612 = vmatprep.subr.mxu0 0.0
        %v2613 = vand.u32 %v1925, 4294901760
        %2614 = vmatpush1.msra.mxu0 %v2613
        %2615 = vmatprep.subr.mxu0 0.0
        %v2616 = vand.u32 %v1931, 4294901760
        %2617 = vmatpush1.msra.mxu0 %v2616
        %2618 = vmatprep.subr.mxu0 0.0
        %v2619 = vand.u32 %v1937, 4294901760
        %2620 = vmatpush1.msra.mxu0 %v2619
        %2621 = vmatprep.subr.mxu0 0.0
        %v2622 = vand.u32 %v1943, 4294901760
        %2623 = vmatpush1.msra.mxu0 %v2622
        %2624 = vmatprep.subr.mxu0 0.0
        %v2625 = vand.u32 %v1949, 4294901760
        %2626 = vmatpush1.msra.mxu0 %v2625
        %2627 = vmatprep.subr.mxu0 0.0
        %v2628 = vand.u32 %v1955, 4294901760
        %2629 = vmatpush1.msra.mxu0 %v2628
        %2630 = vmatprep.subr.mxu0 0.0
        %v2631 = vand.u32 %v1961, 4294901760
        %2632 = vmatpush1.msra.mxu0 %v2631
        %2633 = vmatprep.subr.mxu0 0.0
        %v2634 = vand.u32 %v1967, 4294901760
        %2635 = vmatpush1.msra.mxu0 %v2634
        %2636 = vmatprep.subr.mxu0 0.0
        %v2637 = vand.u32 %v1973, 4294901760
        %2638 = vmatpush1.msra.mxu0 %v2637
        %2639 = vmatprep.subr.mxu0 0.0
        %v2640 = vand.u32 %v1979, 4294901760
        %2641 = vmatpush1.msra.mxu0 %v2640
        %2642 = vmatprep.subr.mxu0 0.0
        %v2643 = vand.u32 %v1985, 4294901760
        %2644 = vmatpush1.msra.mxu0 %v2643
        %2645 = vmatprep.subr.mxu0 0.0
        %v2646 = vand.u32 %v1991, 4294901760
        %2647 = vmatpush1.msra.mxu0 %v2646
        %2648 = vmatprep.subr.mxu0 0.0
        %v2649 = vand.u32 %v1997, 4294901760
        %2650 = vmatpush1.msra.mxu0 %v2649
        %2651 = vmatprep.subr.mxu0 0.0
        %v2652 = vand.u32 %v2003, 4294901760
        %2653 = vmatpush1.msra.mxu0 %v2652
        %2654 = vmatprep.subr.mxu0 0.0
        %v2655 = vand.u32 %v2009, 4294901760
        %2656 = vmatpush1.msra.mxu0 %v2655
        %2657 = vmatprep.subr.mxu0 0.0
        %v2658 = vand.u32 %v2015, 4294901760
        %2659 = vmatpush1.msra.mxu0 %v2658
        %2660 = vmatprep.subr.mxu0 0.0
        %v2661 = vand.u32 %v2021, 4294901760
        %2662 = vmatpush1.msra.mxu0 %v2661
        %2663 = vmatprep.subr.mxu0 0.0
        %v2664 = vand.u32 %v2027, 4294901760
        %2665 = vmatpush1.msra.mxu0 %v2664
        %2666 = vmatprep.subr.mxu0 0.0
        %v2667 = vand.u32 %v2033, 4294901760
        %2668 = vmatpush1.msra.mxu0 %v2667
        %2669 = vmatprep.subr.mxu0 0.0
        %v2670 = vand.u32 %v2039, 4294901760
        %2671 = vmatpush1.msra.mxu0 %v2670
        %2672 = vmatprep.subr.mxu0 0.0
        %v2673 = vand.u32 %v2045, 4294901760
        %2674 = vmatpush1.msra.mxu0 %v2673
        %2675 = vmatprep.subr.mxu0 0.0
        %v2676 = vand.u32 %v2051, 4294901760
        %2677 = vmatpush1.msra.mxu0 %v2676
        %2678 = vmatprep.subr.mxu0 0.0
        %v2679 = vand.u32 %v2057, 4294901760
        %2680 = vmatpush1.msra.mxu0 %v2679
        %2681 = vmatprep.subr.mxu0 0.0
        %v2682 = vand.u32 %v2063, 4294901760
        %2683 = vmatpush1.msra.mxu0 %v2682
        %2684 = vmatprep.subr.mxu0 0.0
        %v2685 = vand.u32 %v2069, 4294901760
        %2686 = vmatpush1.msra.mxu0 %v2685
        %2687 = vmatprep.subr.mxu0 0.0
        %v2688 = vand.u32 %v2075, 4294901760
        %2689 = vmatpush1.msra.mxu0 %v2688
        %2690 = vmatprep.subr.mxu0 0.0
        %v2691 = vand.u32 %v2081, 4294901760
        %2692 = vmatpush1.msra.mxu0 %v2691
        %2693 = vmatprep.subr.mxu0 0.0
        %v2694 = vand.u32 %v2087, 4294901760
        %2695 = vmatpush1.msra.mxu0 %v2694
        %2696 = vmatprep.subr.mxu0 0.0
        %v2697 = vand.u32 %v2093, 4294901760
        %2698 = vmatpush1.msra.mxu0 %v2697
        %2699 = vmatprep.subr.mxu0 0.0
        %v2700 = vand.u32 %v2099, 4294901760
        %2701 = vmatpush1.msra.mxu0 %v2700
        %2702 = vmatprep.subr.mxu0 0.0
        %v2703 = vand.u32 %v2105, 4294901760
        %2704 = vmatpush1.msra.mxu0 %v2703
        %2705 = vmatprep.subr.mxu0 0.0
        %v2706 = vand.u32 %v2111, 4294901760
        %2707 = vmatpush1.msra.mxu0 %v2706
        %v2708 = vand.u32 %v2128, 4294901760
        %v2709 = vsub.f32 %v2128, %v2708
        %v2710 = vand.u32 %v2709, 4294901760
        %2711 = vmatprep.mubr.f32.mxu0 %v2710
        %v2712 = vand.u32 %v2127, 4294901760
        %v2713 = vsub.f32 %v2127, %v2712
        %v2714 = vand.u32 %v2713, 4294901760
        %2715 = vmatmul.mubr.f32.gmra.mrb[0].mxu0 %v2714
        %v2716 = vpop.f32.mrb[0].mxu0
        %v2717 = vadd.f32 %v2609, %v2716
        %v2718 = vpop.f32.mrb[0].mxu0
        %2719 = vdwg.mxu0
        %2720 = vmatprep.subr.mxu0 0.0
        %v2721 = vand.u32 %v1925, 4294901760
        %v2722 = vsub.f32 %v1925, %v2721
        %v2723 = vand.u32 %v2722, 4294901760
        %2724 = vmatpush1.msra.mxu0 %v2723
        %2725 = vmatprep.subr.mxu0 0.0
        %v2726 = vand.u32 %v1931, 4294901760
        %v2727 = vsub.f32 %v1931, %v2726
        %v2728 = vand.u32 %v2727, 4294901760
        %2729 = vmatpush1.msra.mxu0 %v2728
        %2730 = vmatprep.subr.mxu0 0.0
        %v2731 = vand.u32 %v1937, 4294901760
        %v2732 = vsub.f32 %v1937, %v2731
        %v2733 = vand.u32 %v2732, 4294901760
        %2734 = vmatpush1.msra.mxu0 %v2733
        %2735 = vmatprep.subr.mxu0 0.0
        %v2736 = vand.u32 %v1943, 4294901760
        %v2737 = vsub.f32 %v1943, %v2736
        %v2738 = vand.u32 %v2737, 4294901760
        %2739 = vmatpush1.msra.mxu0 %v2738
        %2740 = vmatprep.subr.mxu0 0.0
        %v2741 = vand.u32 %v1949, 4294901760
        %v2742 = vsub.f32 %v1949, %v2741
        %v2743 = vand.u32 %v2742, 4294901760
        %2744 = vmatpush1.msra.mxu0 %v2743
        %2745 = vmatprep.subr.mxu0 0.0
        %v2746 = vand.u32 %v1955, 4294901760
        %v2747 = vsub.f32 %v1955, %v2746
        %v2748 = vand.u32 %v2747, 4294901760
        %2749 = vmatpush1.msra.mxu0 %v2748
        %2750 = vmatprep.subr.mxu0 0.0
        %v2751 = vand.u32 %v1961, 4294901760
        %v2752 = vsub.f32 %v1961, %v2751
        %v2753 = vand.u32 %v2752, 4294901760
        %2754 = vmatpush1.msra.mxu0 %v2753
        %2755 = vmatprep.subr.mxu0 0.0
        %v2756 = vand.u32 %v1967, 4294901760
        %v2757 = vsub.f32 %v1967, %v2756
        %v2758 = vand.u32 %v2757, 4294901760
        %2759 = vmatpush1.msra.mxu0 %v2758
        %2760 = vmatprep.subr.mxu0 0.0
        %v2761 = vand.u32 %v1973, 4294901760
        %v2762 = vsub.f32 %v1973, %v2761
        %v2763 = vand.u32 %v2762, 4294901760
        %2764 = vmatpush1.msra.mxu0 %v2763
        %2765 = vmatprep.subr.mxu0 0.0
        %v2766 = vand.u32 %v1979, 4294901760
        %v2767 = vsub.f32 %v1979, %v2766
        %v2768 = vand.u32 %v2767, 4294901760
        %2769 = vmatpush1.msra.mxu0 %v2768
        %2770 = vmatprep.subr.mxu0 0.0
        %v2771 = vand.u32 %v1985, 4294901760
        %v2772 = vsub.f32 %v1985, %v2771
        %v2773 = vand.u32 %v2772, 4294901760
        %2774 = vmatpush1.msra.mxu0 %v2773
        %2775 = vmatprep.subr.mxu0 0.0
        %v2776 = vand.u32 %v1991, 4294901760
        %v2777 = vsub.f32 %v1991, %v2776
        %v2778 = vand.u32 %v2777, 4294901760
        %2779 = vmatpush1.msra.mxu0 %v2778
        %2780 = vmatprep.subr.mxu0 0.0
        %v2781 = vand.u32 %v1997, 4294901760
        %v2782 = vsub.f32 %v1997, %v2781
        %v2783 = vand.u32 %v2782, 4294901760
        %2784 = vmatpush1.msra.mxu0 %v2783
        %2785 = vmatprep.subr.mxu0 0.0
        %v2786 = vand.u32 %v2003, 4294901760
        %v2787 = vsub.f32 %v2003, %v2786
        %v2788 = vand.u32 %v2787, 4294901760
        %2789 = vmatpush1.msra.mxu0 %v2788
        %2790 = vmatprep.subr.mxu0 0.0
        %v2791 = vand.u32 %v2009, 4294901760
        %v2792 = vsub.f32 %v2009, %v2791
        %v2793 = vand.u32 %v2792, 4294901760
        %2794 = vmatpush1.msra.mxu0 %v2793
        %2795 = vmatprep.subr.mxu0 0.0
        %v2796 = vand.u32 %v2015, 4294901760
        %v2797 = vsub.f32 %v2015, %v2796
        %v2798 = vand.u32 %v2797, 4294901760
        %2799 = vmatpush1.msra.mxu0 %v2798
        %2800 = vmatprep.subr.mxu0 0.0
        %v2801 = vand.u32 %v2021, 4294901760
        %v2802 = vsub.f32 %v2021, %v2801
        %v2803 = vand.u32 %v2802, 4294901760
        %2804 = vmatpush1.msra.mxu0 %v2803
        %2805 = vmatprep.subr.mxu0 0.0
        %v2806 = vand.u32 %v2027, 4294901760
        %v2807 = vsub.f32 %v2027, %v2806
        %v2808 = vand.u32 %v2807, 4294901760
        %2809 = vmatpush1.msra.mxu0 %v2808
        %2810 = vmatprep.subr.mxu0 0.0
        %v2811 = vand.u32 %v2033, 4294901760
        %v2812 = vsub.f32 %v2033, %v2811
        %v2813 = vand.u32 %v2812, 4294901760
        %2814 = vmatpush1.msra.mxu0 %v2813
        %2815 = vmatprep.subr.mxu0 0.0
        %v2816 = vand.u32 %v2039, 4294901760
        %v2817 = vsub.f32 %v2039, %v2816
        %v2818 = vand.u32 %v2817, 4294901760
        %2819 = vmatpush1.msra.mxu0 %v2818
        %2820 = vmatprep.subr.mxu0 0.0
        %v2821 = vand.u32 %v2045, 4294901760
        %v2822 = vsub.f32 %v2045, %v2821
        %v2823 = vand.u32 %v2822, 4294901760
        %2824 = vmatpush1.msra.mxu0 %v2823
        %2825 = vmatprep.subr.mxu0 0.0
        %v2826 = vand.u32 %v2051, 4294901760
        %v2827 = vsub.f32 %v2051, %v2826
        %v2828 = vand.u32 %v2827, 4294901760
        %2829 = vmatpush1.msra.mxu0 %v2828
        %2830 = vmatprep.subr.mxu0 0.0
        %v2831 = vand.u32 %v2057, 4294901760
        %v2832 = vsub.f32 %v2057, %v2831
        %v2833 = vand.u32 %v2832, 4294901760
        %2834 = vmatpush1.msra.mxu0 %v2833
        %2835 = vmatprep.subr.mxu0 0.0
        %v2836 = vand.u32 %v2063, 4294901760
        %v2837 = vsub.f32 %v2063, %v2836
        %v2838 = vand.u32 %v2837, 4294901760
        %2839 = vmatpush1.msra.mxu0 %v2838
        %2840 = vmatprep.subr.mxu0 0.0
        %v2841 = vand.u32 %v2069, 4294901760
        %v2842 = vsub.f32 %v2069, %v2841
        %v2843 = vand.u32 %v2842, 4294901760
        %2844 = vmatpush1.msra.mxu0 %v2843
        %2845 = vmatprep.subr.mxu0 0.0
        %v2846 = vand.u32 %v2075, 4294901760
        %v2847 = vsub.f32 %v2075, %v2846
        %v2848 = vand.u32 %v2847, 4294901760
        %2849 = vmatpush1.msra.mxu0 %v2848
        %2850 = vmatprep.subr.mxu0 0.0
        %v2851 = vand.u32 %v2081, 4294901760
        %v2852 = vsub.f32 %v2081, %v2851
        %v2853 = vand.u32 %v2852, 4294901760
        %2854 = vmatpush1.msra.mxu0 %v2853
        %2855 = vmatprep.subr.mxu0 0.0
        %v2856 = vand.u32 %v2087, 4294901760
        %v2857 = vsub.f32 %v2087, %v2856
        %v2858 = vand.u32 %v2857, 4294901760
        %2859 = vmatpush1.msra.mxu0 %v2858
        %2860 = vmatprep.subr.mxu0 0.0
        %v2861 = vand.u32 %v2093, 4294901760
        %v2862 = vsub.f32 %v2093, %v2861
        %v2863 = vand.u32 %v2862, 4294901760
        %2864 = vmatpush1.msra.mxu0 %v2863
        %2865 = vmatprep.subr.mxu0 0.0
        %v2866 = vand.u32 %v2099, 4294901760
        %v2867 = vsub.f32 %v2099, %v2866
        %v2868 = vand.u32 %v2867, 4294901760
        %2869 = vmatpush1.msra.mxu0 %v2868
        %2870 = vmatprep.subr.mxu0 0.0
        %v2871 = vand.u32 %v2105, 4294901760
        %v2872 = vsub.f32 %v2105, %v2871
        %v2873 = vand.u32 %v2872, 4294901760
        %2874 = vmatpush1.msra.mxu0 %v2873
        %2875 = vmatprep.subr.mxu0 0.0
        %v2876 = vand.u32 %v2111, 4294901760
        %v2877 = vsub.f32 %v2111, %v2876
        %v2878 = vand.u32 %v2877, 4294901760
        %2879 = vmatpush1.msra.mxu0 %v2878
        %v2880 = vand.u32 %v2128, 4294901760
        %2881 = vmatprep.mubr.f32.mxu0 %v2880
        %v2882 = vand.u32 %v2127, 4294901760
        %2883 = vmatmul.mubr.f32.gmra.mrb[0].mxu0 %v2882
        %v2884 = vpop.f32.mrb[0].mxu0
        %v2885 = vadd.f32 %v2717, %v2884
        %v2886 = vpop.f32.mrb[0].mxu0
        %2887 = vdwg.mxu0
        %2888 = vmatprep.subr.mxu0 0.0
        %v2889 = vand.u32 %v1925, 4294901760
        %2890 = vmatpush1.msra.mxu0 %v2889
        %2891 = vmatprep.subr.mxu0 0.0
        %v2892 = vand.u32 %v1931, 4294901760
        %2893 = vmatpush1.msra.mxu0 %v2892
        %2894 = vmatprep.subr.mxu0 0.0
        %v2895 = vand.u32 %v1937, 4294901760
        %2896 = vmatpush1.msra.mxu0 %v2895
        %2897 = vmatprep.subr.mxu0 0.0
        %v2898 = vand.u32 %v1943, 4294901760
        %2899 = vmatpush1.msra.mxu0 %v2898
        %2900 = vmatprep.subr.mxu0 0.0
        %v2901 = vand.u32 %v1949, 4294901760
        %2902 = vmatpush1.msra.mxu0 %v2901
        %2903 = vmatprep.subr.mxu0 0.0
        %v2904 = vand.u32 %v1955, 4294901760
        %2905 = vmatpush1.msra.mxu0 %v2904
        %2906 = vmatprep.subr.mxu0 0.0
        %v2907 = vand.u32 %v1961, 4294901760
        %2908 = vmatpush1.msra.mxu0 %v2907
        %2909 = vmatprep.subr.mxu0 0.0
        %v2910 = vand.u32 %v1967, 4294901760
        %2911 = vmatpush1.msra.mxu0 %v2910
        %2912 = vmatprep.subr.mxu0 0.0
        %v2913 = vand.u32 %v1973, 4294901760
        %2914 = vmatpush1.msra.mxu0 %v2913
        %2915 = vmatprep.subr.mxu0 0.0
        %v2916 = vand.u32 %v1979, 4294901760
        %2917 = vmatpush1.msra.mxu0 %v2916
        %2918 = vmatprep.subr.mxu0 0.0
        %v2919 = vand.u32 %v1985, 4294901760
        %2920 = vmatpush1.msra.mxu0 %v2919
        %2921 = vmatprep.subr.mxu0 0.0
        %v2922 = vand.u32 %v1991, 4294901760
        %2923 = vmatpush1.msra.mxu0 %v2922
        %2924 = vmatprep.subr.mxu0 0.0
        %v2925 = vand.u32 %v1997, 4294901760
        %2926 = vmatpush1.msra.mxu0 %v2925
        %2927 = vmatprep.subr.mxu0 0.0
        %v2928 = vand.u32 %v2003, 4294901760
        %2929 = vmatpush1.msra.mxu0 %v2928
        %2930 = vmatprep.subr.mxu0 0.0
        %v2931 = vand.u32 %v2009, 4294901760
        %2932 = vmatpush1.msra.mxu0 %v2931
        %2933 = vmatprep.subr.mxu0 0.0
        %v2934 = vand.u32 %v2015, 4294901760
        %2935 = vmatpush1.msra.mxu0 %v2934
        %2936 = vmatprep.subr.mxu0 0.0
        %v2937 = vand.u32 %v2021, 4294901760
        %2938 = vmatpush1.msra.mxu0 %v2937
        %2939 = vmatprep.subr.mxu0 0.0
        %v2940 = vand.u32 %v2027, 4294901760
        %2941 = vmatpush1.msra.mxu0 %v2940
        %2942 = vmatprep.subr.mxu0 0.0
        %v2943 = vand.u32 %v2033, 4294901760
        %2944 = vmatpush1.msra.mxu0 %v2943
        %2945 = vmatprep.subr.mxu0 0.0
        %v2946 = vand.u32 %v2039, 4294901760
        %2947 = vmatpush1.msra.mxu0 %v2946
        %2948 = vmatprep.subr.mxu0 0.0
        %v2949 = vand.u32 %v2045, 4294901760
        %2950 = vmatpush1.msra.mxu0 %v2949
        %2951 = vmatprep.subr.mxu0 0.0
        %v2952 = vand.u32 %v2051, 4294901760
        %2953 = vmatpush1.msra.mxu0 %v2952
        %2954 = vmatprep.subr.mxu0 0.0
        %v2955 = vand.u32 %v2057, 4294901760
        %2956 = vmatpush1.msra.mxu0 %v2955
        %2957 = vmatprep.subr.mxu0 0.0
        %v2958 = vand.u32 %v2063, 4294901760
        %2959 = vmatpush1.msra.mxu0 %v2958
        %2960 = vmatprep.subr.mxu0 0.0
        %v2961 = vand.u32 %v2069, 4294901760
        %2962 = vmatpush1.msra.mxu0 %v2961
        %2963 = vmatprep.subr.mxu0 0.0
        %v2964 = vand.u32 %v2075, 4294901760
        %2965 = vmatpush1.msra.mxu0 %v2964
        %2966 = vmatprep.subr.mxu0 0.0
        %v2967 = vand.u32 %v2081, 4294901760
        %2968 = vmatpush1.msra.mxu0 %v2967
        %2969 = vmatprep.subr.mxu0 0.0
        %v2970 = vand.u32 %v2087, 4294901760
        %2971 = vmatpush1.msra.mxu0 %v2970
        %2972 = vmatprep.subr.mxu0 0.0
        %v2973 = vand.u32 %v2093, 4294901760
        %2974 = vmatpush1.msra.mxu0 %v2973
        %2975 = vmatprep.subr.mxu0 0.0
        %v2976 = vand.u32 %v2099, 4294901760
        %2977 = vmatpush1.msra.mxu0 %v2976
        %2978 = vmatprep.subr.mxu0 0.0
        %v2979 = vand.u32 %v2105, 4294901760
        %2980 = vmatpush1.msra.mxu0 %v2979
        %2981 = vmatprep.subr.mxu0 0.0
        %v2982 = vand.u32 %v2111, 4294901760
        %2983 = vmatpush1.msra.mxu0 %v2982
        %v2984 = vand.u32 %v2128, 4294901760
        %2985 = vmatprep.mubr.f32.mxu0 %v2984
        %v2986 = vand.u32 %v2127, 4294901760
        %2987 = vmatmul.mubr.f32.gmra.mrb[0].mxu0 %v2986
        %v2988 = vpop.f32.mrb[0].mxu0
        %v2989 = vadd.f32 %v2885, %v2988
        %v2990 = vpop.f32.mrb[0].mxu0
        %2991 = vdwg.mxu0
        %v2992 = vadd.f32 %v2129, %v2989
        %vm2993 = vcmask 122880
        %2994 = vst.msk [vmem:[#allocation4] sm:$0x1] %vm2993, %v2992
        %v2995 = vld [vmem:[#allocation6] sm:$0x1]
        %v2996 = vmul.f32 %v1925, %v1925
        %v2997 = vmul.f32 %v1931, %v1931
        %v2998 = vmul.f32 %v1937, %v1937
        %v2999 = vmul.f32 %v1943, %v1943
        %v3000 = vmul.f32 %v1949, %v1949
        %v3001 = vmul.f32 %v1955, %v1955
        %v3002 = vmul.f32 %v1961, %v1961
        %v3003 = vmul.f32 %v1967, %v1967
        %v3004 = vmul.f32 %v1973, %v1973
        %v3005 = vmul.f32 %v1979, %v1979
        %v3006 = vmul.f32 %v1985, %v1985
        %v3007 = vmul.f32 %v1991, %v1991
        %v3008 = vmul.f32 %v1997, %v1997
        %v3009 = vmul.f32 %v2003, %v2003
        %v3010 = vmul.f32 %v2009, %v2009
        %v3011 = vmul.f32 %v2015, %v2015
        %v3012 = vmul.f32 %v2021, %v2021
        %v3013 = vmul.f32 %v2027, %v2027
        %v3014 = vmul.f32 %v2033, %v2033
        %v3015 = vmul.f32 %v2039, %v2039
        %v3016 = vmul.f32 %v2045, %v2045
        %v3017 = vmul.f32 %v2051, %v2051
        %v3018 = vmul.f32 %v2057, %v2057
        %v3019 = vmul.f32 %v2063, %v2063
        %v3020 = vmul.f32 %v2069, %v2069
        %v3021 = vmul.f32 %v2075, %v2075
        %v3022 = vmul.f32 %v2081, %v2081
        %v3023 = vmul.f32 %v2087, %v2087
        %v3024 = vmul.f32 %v2093, %v2093
        %v3025 = vmul.f32 %v2099, %v2099
        %v3026 = vmul.f32 %v2105, %v2105
        %v3027 = vmul.f32 %v2111, %v2111
        %3028 = vmatprep.subr.mxu0 0.0
        %v3029 = vand.u32 %v2996, 4294901760
        %3030 = vmatpush1.msra.mxu0 %v3029
        %3031 = vmatprep.subr.mxu0 0.0
        %v3032 = vand.u32 %v2997, 4294901760
        %3033 = vmatpush1.msra.mxu0 %v3032
        %3034 = vmatprep.subr.mxu0 0.0
        %v3035 = vand.u32 %v2998, 4294901760
        %3036 = vmatpush1.msra.mxu0 %v3035
        %3037 = vmatprep.subr.mxu0 0.0
        %v3038 = vand.u32 %v2999, 4294901760
        %3039 = vmatpush1.msra.mxu0 %v3038
        %3040 = vmatprep.subr.mxu0 0.0
        %v3041 = vand.u32 %v3000, 4294901760
        %3042 = vmatpush1.msra.mxu0 %v3041
        %3043 = vmatprep.subr.mxu0 0.0
        %v3044 = vand.u32 %v3001, 4294901760
        %3045 = vmatpush1.msra.mxu0 %v3044
        %3046 = vmatprep.subr.mxu0 0.0
        %v3047 = vand.u32 %v3002, 4294901760
        %3048 = vmatpush1.msra.mxu0 %v3047
        %3049 = vmatprep.subr.mxu0 0.0
        %v3050 = vand.u32 %v3003, 4294901760
        %3051 = vmatpush1.msra.mxu0 %v3050
        %3052 = vmatprep.subr.mxu0 0.0
        %v3053 = vand.u32 %v3004, 4294901760
        %3054 = vmatpush1.msra.mxu0 %v3053
        %3055 = vmatprep.subr.mxu0 0.0
        %v3056 = vand.u32 %v3005, 4294901760
        %3057 = vmatpush1.msra.mxu0 %v3056
        %3058 = vmatprep.subr.mxu0 0.0
        %v3059 = vand.u32 %v3006, 4294901760
        %3060 = vmatpush1.msra.mxu0 %v3059
        %3061 = vmatprep.subr.mxu0 0.0
        %v3062 = vand.u32 %v3007, 4294901760
        %3063 = vmatpush1.msra.mxu0 %v3062
        %3064 = vmatprep.subr.mxu0 0.0
        %v3065 = vand.u32 %v3008, 4294901760
        %3066 = vmatpush1.msra.mxu0 %v3065
        %3067 = vmatprep.subr.mxu0 0.0
        %v3068 = vand.u32 %v3009, 4294901760
        %3069 = vmatpush1.msra.mxu0 %v3068
        %3070 = vmatprep.subr.mxu0 0.0
        %v3071 = vand.u32 %v3010, 4294901760
        %3072 = vmatpush1.msra.mxu0 %v3071
        %3073 = vmatprep.subr.mxu0 0.0
        %v3074 = vand.u32 %v3011, 4294901760
        %3075 = vmatpush1.msra.mxu0 %v3074
        %3076 = vmatprep.subr.mxu0 0.0
        %v3077 = vand.u32 %v3012, 4294901760
        %3078 = vmatpush1.msra.mxu0 %v3077
        %3079 = vmatprep.subr.mxu0 0.0
        %v3080 = vand.u32 %v3013, 4294901760
        %3081 = vmatpush1.msra.mxu0 %v3080
        %3082 = vmatprep.subr.mxu0 0.0
        %v3083 = vand.u32 %v3014, 4294901760
        %3084 = vmatpush1.msra.mxu0 %v3083
        %3085 = vmatprep.subr.mxu0 0.0
        %v3086 = vand.u32 %v3015, 4294901760
        %3087 = vmatpush1.msra.mxu0 %v3086
        %3088 = vmatprep.subr.mxu0 0.0
        %v3089 = vand.u32 %v3016, 4294901760
        %3090 = vmatpush1.msra.mxu0 %v3089
        %3091 = vmatprep.subr.mxu0 0.0
        %v3092 = vand.u32 %v3017, 4294901760
        %3093 = vmatpush1.msra.mxu0 %v3092
        %3094 = vmatprep.subr.mxu0 0.0
        %v3095 = vand.u32 %v3018, 4294901760
        %3096 = vmatpush1.msra.mxu0 %v3095
        %3097 = vmatprep.subr.mxu0 0.0
        %v3098 = vand.u32 %v3019, 4294901760
        %3099 = vmatpush1.msra.mxu0 %v3098
        %3100 = vmatprep.subr.mxu0 0.0
        %v3101 = vand.u32 %v3020, 4294901760
        %3102 = vmatpush1.msra.mxu0 %v3101
        %3103 = vmatprep.subr.mxu0 0.0
        %v3104 = vand.u32 %v3021, 4294901760
        %3105 = vmatpush1.msra.mxu0 %v3104
        %3106 = vmatprep.subr.mxu0 0.0
        %v3107 = vand.u32 %v3022, 4294901760
        %3108 = vmatpush1.msra.mxu0 %v3107
        %3109 = vmatprep.subr.mxu0 0.0
        %v3110 = vand.u32 %v3023, 4294901760
        %3111 = vmatpush1.msra.mxu0 %v3110
        %3112 = vmatprep.subr.mxu0 0.0
        %v3113 = vand.u32 %v3024, 4294901760
        %3114 = vmatpush1.msra.mxu0 %v3113
        %3115 = vmatprep.subr.mxu0 0.0
        %v3116 = vand.u32 %v3025, 4294901760
        %3117 = vmatpush1.msra.mxu0 %v3116
        %3118 = vmatprep.subr.mxu0 0.0
        %v3119 = vand.u32 %v3026, 4294901760
        %3120 = vmatpush1.msra.mxu0 %v3119
        %3121 = vmatprep.subr.mxu0 0.0
        %v3122 = vand.u32 %v3027, 4294901760
        %3123 = vmatpush1.msra.mxu0 %v3122
        %v3124 = vand.u32 %v2128, 4294901760
        %v3125 = vsub.f32 %v2128, %v3124
        %v3126 = vand.u32 %v3125, 4294901760
        %v3127 = vsub.f32 %v3125, %v3126
        %v3128 = vand.u32 %v3127, 4294901760
        %3129 = vmatprep.mubr.f32.mxu0 %v3128
        %v3130 = vand.u32 %v2127, 4294901760
        %v3131 = vsub.f32 %v2127, %v3130
        %v3132 = vand.u32 %v3131, 4294901760
        %v3133 = vsub.f32 %v3131, %v3132
        %v3134 = vand.u32 %v3133, 4294901760
        %3135 = vmatmul.mubr.f32.gmra.mrb[0].mxu0 %v3134
        %v3136 = vpop.f32.mrb[0].mxu0
        %v3137 = vadd.f32 0.0, %v3136
        %v3138 = vpop.f32.mrb[0].mxu0
        %3139 = vdwg.mxu0
        %3140 = vmatprep.subr.mxu0 0.0
        %v3141 = vand.u32 %v2996, 4294901760
        %v3142 = vsub.f32 %v2996, %v3141
        %v3143 = vand.u32 %v3142, 4294901760
        %v3144 = vsub.f32 %v3142, %v3143
        %v3145 = vand.u32 %v3144, 4294901760
        %3146 = vmatpush1.msra.mxu0 %v3145
        %3147 = vmatprep.subr.mxu0 0.0
        %v3148 = vand.u32 %v2997, 4294901760
        %v3149 = vsub.f32 %v2997, %v3148
        %v3150 = vand.u32 %v3149, 4294901760
        %v3151 = vsub.f32 %v3149, %v3150
        %v3152 = vand.u32 %v3151, 4294901760
        %3153 = vmatpush1.msra.mxu0 %v3152
        %3154 = vmatprep.subr.mxu0 0.0
        %v3155 = vand.u32 %v2998, 4294901760
        %v3156 = vsub.f32 %v2998, %v3155
        %v3157 = vand.u32 %v3156, 4294901760
        %v3158 = vsub.f32 %v3156, %v3157
        %v3159 = vand.u32 %v3158, 4294901760
        %3160 = vmatpush1.msra.mxu0 %v3159
        %3161 = vmatprep.subr.mxu0 0.0
        %v3162 = vand.u32 %v2999, 4294901760
        %v3163 = vsub.f32 %v2999, %v3162
        %v3164 = vand.u32 %v3163, 4294901760
        %v3165 = vsub.f32 %v3163, %v3164
        %v3166 = vand.u32 %v3165, 4294901760
        %3167 = vmatpush1.msra.mxu0 %v3166
        %3168 = vmatprep.subr.mxu0 0.0
        %v3169 = vand.u32 %v3000, 4294901760
        %v3170 = vsub.f32 %v3000, %v3169
        %v3171 = vand.u32 %v3170, 4294901760
        %v3172 = vsub.f32 %v3170, %v3171
        %v3173 = vand.u32 %v3172, 4294901760
        %3174 = vmatpush1.msra.mxu0 %v3173
        %3175 = vmatprep.subr.mxu0 0.0
        %v3176 = vand.u32 %v3001, 4294901760
        %v3177 = vsub.f32 %v3001, %v3176
        %v3178 = vand.u32 %v3177, 4294901760
        %v3179 = vsub.f32 %v3177, %v3178
        %v3180 = vand.u32 %v3179, 4294901760
        %3181 = vmatpush1.msra.mxu0 %v3180
        %3182 = vmatprep.subr.mxu0 0.0
        %v3183 = vand.u32 %v3002, 4294901760
        %v3184 = vsub.f32 %v3002, %v3183
        %v3185 = vand.u32 %v3184, 4294901760
        %v3186 = vsub.f32 %v3184, %v3185
        %v3187 = vand.u32 %v3186, 4294901760
        %3188 = vmatpush1.msra.mxu0 %v3187
        %3189 = vmatprep.subr.mxu0 0.0
        %v3190 = vand.u32 %v3003, 4294901760
        %v3191 = vsub.f32 %v3003, %v3190
        %v3192 = vand.u32 %v3191, 4294901760
        %v3193 = vsub.f32 %v3191, %v3192
        %v3194 = vand.u32 %v3193, 4294901760
        %3195 = vmatpush1.msra.mxu0 %v3194
        %3196 = vmatprep.subr.mxu0 0.0
        %v3197 = vand.u32 %v3004, 4294901760
        %v3198 = vsub.f32 %v3004, %v3197
        %v3199 = vand.u32 %v3198, 4294901760
        %v3200 = vsub.f32 %v3198, %v3199
        %v3201 = vand.u32 %v3200, 4294901760
        %3202 = vmatpush1.msra.mxu0 %v3201
        %3203 = vmatprep.subr.mxu0 0.0
        %v3204 = vand.u32 %v3005, 4294901760
        %v3205 = vsub.f32 %v3005, %v3204
        %v3206 = vand.u32 %v3205, 4294901760
        %v3207 = vsub.f32 %v3205, %v3206
        %v3208 = vand.u32 %v3207, 4294901760
        %3209 = vmatpush1.msra.mxu0 %v3208
        %3210 = vmatprep.subr.mxu0 0.0
        %v3211 = vand.u32 %v3006, 4294901760
        %v3212 = vsub.f32 %v3006, %v3211
        %v3213 = vand.u32 %v3212, 4294901760
        %v3214 = vsub.f32 %v3212, %v3213
        %v3215 = vand.u32 %v3214, 4294901760
        %3216 = vmatpush1.msra.mxu0 %v3215
        %3217 = vmatprep.subr.mxu0 0.0
        %v3218 = vand.u32 %v3007, 4294901760
        %v3219 = vsub.f32 %v3007, %v3218
        %v3220 = vand.u32 %v3219, 4294901760
        %v3221 = vsub.f32 %v3219, %v3220
        %v3222 = vand.u32 %v3221, 4294901760
        %3223 = vmatpush1.msra.mxu0 %v3222
        %3224 = vmatprep.subr.mxu0 0.0
        %v3225 = vand.u32 %v3008, 4294901760
        %v3226 = vsub.f32 %v3008, %v3225
        %v3227 = vand.u32 %v3226, 4294901760
        %v3228 = vsub.f32 %v3226, %v3227
        %v3229 = vand.u32 %v3228, 4294901760
        %3230 = vmatpush1.msra.mxu0 %v3229
        %3231 = vmatprep.subr.mxu0 0.0
        %v3232 = vand.u32 %v3009, 4294901760
        %v3233 = vsub.f32 %v3009, %v3232
        %v3234 = vand.u32 %v3233, 4294901760
        %v3235 = vsub.f32 %v3233, %v3234
        %v3236 = vand.u32 %v3235, 4294901760
        %3237 = vmatpush1.msra.mxu0 %v3236
        %3238 = vmatprep.subr.mxu0 0.0
        %v3239 = vand.u32 %v3010, 4294901760
        %v3240 = vsub.f32 %v3010, %v3239
        %v3241 = vand.u32 %v3240, 4294901760
        %v3242 = vsub.f32 %v3240, %v3241
        %v3243 = vand.u32 %v3242, 4294901760
        %3244 = vmatpush1.msra.mxu0 %v3243
        %3245 = vmatprep.subr.mxu0 0.0
        %v3246 = vand.u32 %v3011, 4294901760
        %v3247 = vsub.f32 %v3011, %v3246
        %v3248 = vand.u32 %v3247, 4294901760
        %v3249 = vsub.f32 %v3247, %v3248
        %v3250 = vand.u32 %v3249, 4294901760
        %3251 = vmatpush1.msra.mxu0 %v3250
        %3252 = vmatprep.subr.mxu0 0.0
        %v3253 = vand.u32 %v3012, 4294901760
        %v3254 = vsub.f32 %v3012, %v3253
        %v3255 = vand.u32 %v3254, 4294901760
        %v3256 = vsub.f32 %v3254, %v3255
        %v3257 = vand.u32 %v3256, 4294901760
        %3258 = vmatpush1.msra.mxu0 %v3257
        %3259 = vmatprep.subr.mxu0 0.0
        %v3260 = vand.u32 %v3013, 4294901760
        %v3261 = vsub.f32 %v3013, %v3260
        %v3262 = vand.u32 %v3261, 4294901760
        %v3263 = vsub.f32 %v3261, %v3262
        %v3264 = vand.u32 %v3263, 4294901760
        %3265 = vmatpush1.msra.mxu0 %v3264
        %3266 = vmatprep.subr.mxu0 0.0
        %v3267 = vand.u32 %v3014, 4294901760
        %v3268 = vsub.f32 %v3014, %v3267
        %v3269 = vand.u32 %v3268, 4294901760
        %v3270 = vsub.f32 %v3268, %v3269
        %v3271 = vand.u32 %v3270, 4294901760
        %3272 = vmatpush1.msra.mxu0 %v3271
        %3273 = vmatprep.subr.mxu0 0.0
        %v3274 = vand.u32 %v3015, 4294901760
        %v3275 = vsub.f32 %v3015, %v3274
        %v3276 = vand.u32 %v3275, 4294901760
        %v3277 = vsub.f32 %v3275, %v3276
        %v3278 = vand.u32 %v3277, 4294901760
        %3279 = vmatpush1.msra.mxu0 %v3278
        %3280 = vmatprep.subr.mxu0 0.0
        %v3281 = vand.u32 %v3016, 4294901760
        %v3282 = vsub.f32 %v3016, %v3281
        %v3283 = vand.u32 %v3282, 4294901760
        %v3284 = vsub.f32 %v3282, %v3283
        %v3285 = vand.u32 %v3284, 4294901760
        %3286 = vmatpush1.msra.mxu0 %v3285
        %3287 = vmatprep.subr.mxu0 0.0
        %v3288 = vand.u32 %v3017, 4294901760
        %v3289 = vsub.f32 %v3017, %v3288
        %v3290 = vand.u32 %v3289, 4294901760
        %v3291 = vsub.f32 %v3289, %v3290
        %v3292 = vand.u32 %v3291, 4294901760
        %3293 = vmatpush1.msra.mxu0 %v3292
        %3294 = vmatprep.subr.mxu0 0.0
        %v3295 = vand.u32 %v3018, 4294901760
        %v3296 = vsub.f32 %v3018, %v3295
        %v3297 = vand.u32 %v3296, 4294901760
        %v3298 = vsub.f32 %v3296, %v3297
        %v3299 = vand.u32 %v3298, 4294901760
        %3300 = vmatpush1.msra.mxu0 %v3299
        %3301 = vmatprep.subr.mxu0 0.0
        %v3302 = vand.u32 %v3019, 4294901760
        %v3303 = vsub.f32 %v3019, %v3302
        %v3304 = vand.u32 %v3303, 4294901760
        %v3305 = vsub.f32 %v3303, %v3304
        %v3306 = vand.u32 %v3305, 4294901760
        %3307 = vmatpush1.msra.mxu0 %v3306
        %3308 = vmatprep.subr.mxu0 0.0
        %v3309 = vand.u32 %v3020, 4294901760
        %v3310 = vsub.f32 %v3020, %v3309
        %v3311 = vand.u32 %v3310, 4294901760
        %v3312 = vsub.f32 %v3310, %v3311
        %v3313 = vand.u32 %v3312, 4294901760
        %3314 = vmatpush1.msra.mxu0 %v3313
        %3315 = vmatprep.subr.mxu0 0.0
        %v3316 = vand.u32 %v3021, 4294901760
        %v3317 = vsub.f32 %v3021, %v3316
        %v3318 = vand.u32 %v3317, 4294901760
        %v3319 = vsub.f32 %v3317, %v3318
        %v3320 = vand.u32 %v3319, 4294901760
        %3321 = vmatpush1.msra.mxu0 %v3320
        %3322 = vmatprep.subr.mxu0 0.0
        %v3323 = vand.u32 %v3022, 4294901760
        %v3324 = vsub.f32 %v3022, %v3323
        %v3325 = vand.u32 %v3324, 4294901760
        %v3326 = vsub.f32 %v3324, %v3325
        %v3327 = vand.u32 %v3326, 4294901760
        %3328 = vmatpush1.msra.mxu0 %v3327
        %3329 = vmatprep.subr.mxu0 0.0
        %v3330 = vand.u32 %v3023, 4294901760
        %v3331 = vsub.f32 %v3023, %v3330
        %v3332 = vand.u32 %v3331, 4294901760
        %v3333 = vsub.f32 %v3331, %v3332
        %v3334 = vand.u32 %v3333, 4294901760
        %3335 = vmatpush1.msra.mxu0 %v3334
        %3336 = vmatprep.subr.mxu0 0.0
        %v3337 = vand.u32 %v3024, 4294901760
        %v3338 = vsub.f32 %v3024, %v3337
        %v3339 = vand.u32 %v3338, 4294901760
        %v3340 = vsub.f32 %v3338, %v3339
        %v3341 = vand.u32 %v3340, 4294901760
        %3342 = vmatpush1.msra.mxu0 %v3341
        %3343 = vmatprep.subr.mxu0 0.0
        %v3344 = vand.u32 %v3025, 4294901760
        %v3345 = vsub.f32 %v3025, %v3344
        %v3346 = vand.u32 %v3345, 4294901760
        %v3347 = vsub.f32 %v3345, %v3346
        %v3348 = vand.u32 %v3347, 4294901760
        %3349 = vmatpush1.msra.mxu0 %v3348
        %3350 = vmatprep.subr.mxu0 0.0
        %v3351 = vand.u32 %v3026, 4294901760
        %v3352 = vsub.f32 %v3026, %v3351
        %v3353 = vand.u32 %v3352, 4294901760
        %v3354 = vsub.f32 %v3352, %v3353
        %v3355 = vand.u32 %v3354, 4294901760
        %3356 = vmatpush1.msra.mxu0 %v3355
        %3357 = vmatprep.subr.mxu0 0.0
        %v3358 = vand.u32 %v3027, 4294901760
        %v3359 = vsub.f32 %v3027, %v3358
        %v3360 = vand.u32 %v3359, 4294901760
        %v3361 = vsub.f32 %v3359, %v3360
        %v3362 = vand.u32 %v3361, 4294901760
        %3363 = vmatpush1.msra.mxu0 %v3362
        %v3364 = vand.u32 %v2128, 4294901760
        %3365 = vmatprep.mubr.f32.mxu0 %v3364
        %v3366 = vand.u32 %v2127, 4294901760
        %3367 = vmatmul.mubr.f32.gmra.mrb[0].mxu0 %v3366
        %v3368 = vpop.f32.mrb[0].mxu0
        %v3369 = vadd.f32 %v3137, %v3368
        %v3370 = vpop.f32.mrb[0].mxu0
        %3371 = vdwg.mxu0
        %3372 = vmatprep.subr.mxu0 0.0
        %v3373 = vand.u32 %v2996, 4294901760
        %v3374 = vsub.f32 %v2996, %v3373
        %3375 = vmatpush1.msra.mxu0 %v3374
        %3376 = vmatprep.subr.mxu0 0.0
        %v3377 = vand.u32 %v2997, 4294901760
        %v3378 = vsub.f32 %v2997, %v3377
        %3379 = vmatpush1.msra.mxu0 %v3378
        %3380 = vmatprep.subr.mxu0 0.0
        %v3381 = vand.u32 %v2998, 4294901760
        %v3382 = vsub.f32 %v2998, %v3381
        %3383 = vmatpush1.msra.mxu0 %v3382
        %3384 = vmatprep.subr.mxu0 0.0
        %v3385 = vand.u32 %v2999, 4294901760
        %v3386 = vsub.f32 %v2999, %v3385
        %3387 = vmatpush1.msra.mxu0 %v3386
        %3388 = vmatprep.subr.mxu0 0.0
        %v3389 = vand.u32 %v3000, 4294901760
        %v3390 = vsub.f32 %v3000, %v3389
        %3391 = vmatpush1.msra.mxu0 %v3390
        %3392 = vmatprep.subr.mxu0 0.0
        %v3393 = vand.u32 %v3001, 4294901760
        %v3394 = vsub.f32 %v3001, %v3393
        %3395 = vmatpush1.msra.mxu0 %v3394
        %3396 = vmatprep.subr.mxu0 0.0
        %v3397 = vand.u32 %v3002, 4294901760
        %v3398 = vsub.f32 %v3002, %v3397
        %3399 = vmatpush1.msra.mxu0 %v3398
        %3400 = vmatprep.subr.mxu0 0.0
        %v3401 = vand.u32 %v3003, 4294901760
        %v3402 = vsub.f32 %v3003, %v3401
        %3403 = vmatpush1.msra.mxu0 %v3402
        %3404 = vmatprep.subr.mxu0 0.0
        %v3405 = vand.u32 %v3004, 4294901760
        %v3406 = vsub.f32 %v3004, %v3405
        %3407 = vmatpush1.msra.mxu0 %v3406
        %3408 = vmatprep.subr.mxu0 0.0
        %v3409 = vand.u32 %v3005, 4294901760
        %v3410 = vsub.f32 %v3005, %v3409
        %3411 = vmatpush1.msra.mxu0 %v3410
        %3412 = vmatprep.subr.mxu0 0.0
        %v3413 = vand.u32 %v3006, 4294901760
        %v3414 = vsub.f32 %v3006, %v3413
        %3415 = vmatpush1.msra.mxu0 %v3414
        %3416 = vmatprep.subr.mxu0 0.0
        %v3417 = vand.u32 %v3007, 4294901760
        %v3418 = vsub.f32 %v3007, %v3417
        %3419 = vmatpush1.msra.mxu0 %v3418
        %3420 = vmatprep.subr.mxu0 0.0
        %v3421 = vand.u32 %v3008, 4294901760
        %v3422 = vsub.f32 %v3008, %v3421
        %3423 = vmatpush1.msra.mxu0 %v3422
        %3424 = vmatprep.subr.mxu0 0.0
        %v3425 = vand.u32 %v3009, 4294901760
        %v3426 = vsub.f32 %v3009, %v3425
        %3427 = vmatpush1.msra.mxu0 %v3426
        %3428 = vmatprep.subr.mxu0 0.0
        %v3429 = vand.u32 %v3010, 4294901760
        %v3430 = vsub.f32 %v3010, %v3429
        %3431 = vmatpush1.msra.mxu0 %v3430
        %3432 = vmatprep.subr.mxu0 0.0
        %v3433 = vand.u32 %v3011, 4294901760
        %v3434 = vsub.f32 %v3011, %v3433
        %3435 = vmatpush1.msra.mxu0 %v3434
        %3436 = vmatprep.subr.mxu0 0.0
        %v3437 = vand.u32 %v3012, 4294901760
        %v3438 = vsub.f32 %v3012, %v3437
        %3439 = vmatpush1.msra.mxu0 %v3438
        %3440 = vmatprep.subr.mxu0 0.0
        %v3441 = vand.u32 %v3013, 4294901760
        %v3442 = vsub.f32 %v3013, %v3441
        %3443 = vmatpush1.msra.mxu0 %v3442
        %3444 = vmatprep.subr.mxu0 0.0
        %v3445 = vand.u32 %v3014, 4294901760
        %v3446 = vsub.f32 %v3014, %v3445
        %3447 = vmatpush1.msra.mxu0 %v3446
        %3448 = vmatprep.subr.mxu0 0.0
        %v3449 = vand.u32 %v3015, 4294901760
        %v3450 = vsub.f32 %v3015, %v3449
        %3451 = vmatpush1.msra.mxu0 %v3450
        %3452 = vmatprep.subr.mxu0 0.0
        %v3453 = vand.u32 %v3016, 4294901760
        %v3454 = vsub.f32 %v3016, %v3453
        %3455 = vmatpush1.msra.mxu0 %v3454
        %3456 = vmatprep.subr.mxu0 0.0
        %v3457 = vand.u32 %v3017, 4294901760
        %v3458 = vsub.f32 %v3017, %v3457
        %3459 = vmatpush1.msra.mxu0 %v3458
        %3460 = vmatprep.subr.mxu0 0.0
        %v3461 = vand.u32 %v3018, 4294901760
        %v3462 = vsub.f32 %v3018, %v3461
        %3463 = vmatpush1.msra.mxu0 %v3462
        %3464 = vmatprep.subr.mxu0 0.0
        %v3465 = vand.u32 %v3019, 4294901760
        %v3466 = vsub.f32 %v3019, %v3465
        %3467 = vmatpush1.msra.mxu0 %v3466
        %3468 = vmatprep.subr.mxu0 0.0
        %v3469 = vand.u32 %v3020, 4294901760
        %v3470 = vsub.f32 %v3020, %v3469
        %3471 = vmatpush1.msra.mxu0 %v3470
        %3472 = vmatprep.subr.mxu0 0.0
        %v3473 = vand.u32 %v3021, 4294901760
        %v3474 = vsub.f32 %v3021, %v3473
        %3475 = vmatpush1.msra.mxu0 %v3474
        %3476 = vmatprep.subr.mxu0 0.0
        %v3477 = vand.u32 %v3022, 4294901760
        %v3478 = vsub.f32 %v3022, %v3477
        %3479 = vmatpush1.msra.mxu0 %v3478
        %3480 = vmatprep.subr.mxu0 0.0
        %v3481 = vand.u32 %v3023, 4294901760
        %v3482 = vsub.f32 %v3023, %v3481
        %3483 = vmatpush1.msra.mxu0 %v3482
        %3484 = vmatprep.subr.mxu0 0.0
        %v3485 = vand.u32 %v3024, 4294901760
        %v3486 = vsub.f32 %v3024, %v3485
        %3487 = vmatpush1.msra.mxu0 %v3486
        %3488 = vmatprep.subr.mxu0 0.0
        %v3489 = vand.u32 %v3025, 4294901760
        %v3490 = vsub.f32 %v3025, %v3489
        %3491 = vmatpush1.msra.mxu0 %v3490
        %3492 = vmatprep.subr.mxu0 0.0
        %v3493 = vand.u32 %v3026, 4294901760
        %v3494 = vsub.f32 %v3026, %v3493
        %3495 = vmatpush1.msra.mxu0 %v3494
        %3496 = vmatprep.subr.mxu0 0.0
        %v3497 = vand.u32 %v3027, 4294901760
        %v3498 = vsub.f32 %v3027, %v3497
        %3499 = vmatpush1.msra.mxu0 %v3498
        %v3500 = vand.u32 %v2128, 4294901760
        %v3501 = vsub.f32 %v2128, %v3500
        %3502 = vmatprep.mubr.f32.mxu0 %v3501
        %v3503 = vand.u32 %v2127, 4294901760
        %v3504 = vsub.f32 %v2127, %v3503
        %3505 = vmatmul.mubr.f32.gmra.mrb[0].mxu0 %v3504
        %v3506 = vpop.f32.mrb[0].mxu0
        %v3507 = vadd.f32 %v3369, %v3506
        %v3508 = vpop.f32.mrb[0].mxu0
        %3509 = vdwg.mxu0
        %3510 = vmatprep.subr.mxu0 0.0
        %v3511 = vand.u32 %v2996, 4294901760
        %3512 = vmatpush1.msra.mxu0 %v3511
        %3513 = vmatprep.subr.mxu0 0.0
        %v3514 = vand.u32 %v2997, 4294901760
        %3515 = vmatpush1.msra.mxu0 %v3514
        %3516 = vmatprep.subr.mxu0 0.0
        %v3517 = vand.u32 %v2998, 4294901760
        %3518 = vmatpush1.msra.mxu0 %v3517
        %3519 = vmatprep.subr.mxu0 0.0
        %v3520 = vand.u32 %v2999, 4294901760
        %3521 = vmatpush1.msra.mxu0 %v3520
        %3522 = vmatprep.subr.mxu0 0.0
        %v3523 = vand.u32 %v3000, 4294901760
        %3524 = vmatpush1.msra.mxu0 %v3523
        %3525 = vmatprep.subr.mxu0 0.0
        %v3526 = vand.u32 %v3001, 4294901760
        %3527 = vmatpush1.msra.mxu0 %v3526
        %3528 = vmatprep.subr.mxu0 0.0
        %v3529 = vand.u32 %v3002, 4294901760
        %3530 = vmatpush1.msra.mxu0 %v3529
        %3531 = vmatprep.subr.mxu0 0.0
        %v3532 = vand.u32 %v3003, 4294901760
        %3533 = vmatpush1.msra.mxu0 %v3532
        %3534 = vmatprep.subr.mxu0 0.0
        %v3535 = vand.u32 %v3004, 4294901760
        %3536 = vmatpush1.msra.mxu0 %v3535
        %3537 = vmatprep.subr.mxu0 0.0
        %v3538 = vand.u32 %v3005, 4294901760
        %3539 = vmatpush1.msra.mxu0 %v3538
        %3540 = vmatprep.subr.mxu0 0.0
        %v3541 = vand.u32 %v3006, 4294901760
        %3542 = vmatpush1.msra.mxu0 %v3541
        %3543 = vmatprep.subr.mxu0 0.0
        %v3544 = vand.u32 %v3007, 4294901760
        %3545 = vmatpush1.msra.mxu0 %v3544
        %3546 = vmatprep.subr.mxu0 0.0
        %v3547 = vand.u32 %v3008, 4294901760
        %3548 = vmatpush1.msra.mxu0 %v3547
        %3549 = vmatprep.subr.mxu0 0.0
        %v3550 = vand.u32 %v3009, 4294901760
        %3551 = vmatpush1.msra.mxu0 %v3550
        %3552 = vmatprep.subr.mxu0 0.0
        %v3553 = vand.u32 %v3010, 4294901760
        %3554 = vmatpush1.msra.mxu0 %v3553
        %3555 = vmatprep.subr.mxu0 0.0
        %v3556 = vand.u32 %v3011, 4294901760
        %3557 = vmatpush1.msra.mxu0 %v3556
        %3558 = vmatprep.subr.mxu0 0.0
        %v3559 = vand.u32 %v3012, 4294901760
        %3560 = vmatpush1.msra.mxu0 %v3559
        %3561 = vmatprep.subr.mxu0 0.0
        %v3562 = vand.u32 %v3013, 4294901760
        %3563 = vmatpush1.msra.mxu0 %v3562
        %3564 = vmatprep.subr.mxu0 0.0
        %v3565 = vand.u32 %v3014, 4294901760
        %3566 = vmatpush1.msra.mxu0 %v3565
        %3567 = vmatprep.subr.mxu0 0.0
        %v3568 = vand.u32 %v3015, 4294901760
        %3569 = vmatpush1.msra.mxu0 %v3568
        %3570 = vmatprep.subr.mxu0 0.0
        %v3571 = vand.u32 %v3016, 4294901760
        %3572 = vmatpush1.msra.mxu0 %v3571
        %3573 = vmatprep.subr.mxu0 0.0
        %v3574 = vand.u32 %v3017, 4294901760
        %3575 = vmatpush1.msra.mxu0 %v3574
        %3576 = vmatprep.subr.mxu0 0.0
        %v3577 = vand.u32 %v3018, 4294901760
        %3578 = vmatpush1.msra.mxu0 %v3577
        %3579 = vmatprep.subr.mxu0 0.0
        %v3580 = vand.u32 %v3019, 4294901760
        %3581 = vmatpush1.msra.mxu0 %v3580
        %3582 = vmatprep.subr.mxu0 0.0
        %v3583 = vand.u32 %v3020, 4294901760
        %3584 = vmatpush1.msra.mxu0 %v3583
        %3585 = vmatprep.subr.mxu0 0.0
        %v3586 = vand.u32 %v3021, 4294901760
        %3587 = vmatpush1.msra.mxu0 %v3586
        %3588 = vmatprep.subr.mxu0 0.0
        %v3589 = vand.u32 %v3022, 4294901760
        %3590 = vmatpush1.msra.mxu0 %v3589
        %3591 = vmatprep.subr.mxu0 0.0
        %v3592 = vand.u32 %v3023, 4294901760
        %3593 = vmatpush1.msra.mxu0 %v3592
        %3594 = vmatprep.subr.mxu0 0.0
        %v3595 = vand.u32 %v3024, 4294901760
        %3596 = vmatpush1.msra.mxu0 %v3595
        %3597 = vmatprep.subr.mxu0 0.0
        %v3598 = vand.u32 %v3025, 4294901760
        %3599 = vmatpush1.msra.mxu0 %v3598
        %3600 = vmatprep.subr.mxu0 0.0
        %v3601 = vand.u32 %v3026, 4294901760
        %3602 = vmatpush1.msra.mxu0 %v3601
        %3603 = vmatprep.subr.mxu0 0.0
        %v3604 = vand.u32 %v3027, 4294901760
        %3605 = vmatpush1.msra.mxu0 %v3604
        %v3606 = vand.u32 %v2128, 4294901760
        %v3607 = vsub.f32 %v2128, %v3606
        %v3608 = vand.u32 %v3607, 4294901760
        %3609 = vmatprep.mubr.f32.mxu0 %v3608
        %v3610 = vand.u32 %v2127, 4294901760
        %v3611 = vsub.f32 %v2127, %v3610
        %v3612 = vand.u32 %v3611, 4294901760
        %3613 = vmatmul.mubr.f32.gmra.mrb[0].mxu0 %v3612
        %v3614 = vpop.f32.mrb[0].mxu0
        %v3615 = vadd.f32 %v3507, %v3614
        %v3616 = vpop.f32.mrb[0].mxu0
        %3617 = vdwg.mxu0
        %3618 = vmatprep.subr.mxu0 0.0
        %v3619 = vand.u32 %v2996, 4294901760
        %v3620 = vsub.f32 %v2996, %v3619
        %v3621 = vand.u32 %v3620, 4294901760
        %3622 = vmatpush1.msra.mxu0 %v3621
        %3623 = vmatprep.subr.mxu0 0.0
        %v3624 = vand.u32 %v2997, 4294901760
        %v3625 = vsub.f32 %v2997, %v3624
        %v3626 = vand.u32 %v3625, 4294901760
        %3627 = vmatpush1.msra.mxu0 %v3626
        %3628 = vmatprep.subr.mxu0 0.0
        %v3629 = vand.u32 %v2998, 4294901760
        %v3630 = vsub.f32 %v2998, %v3629
        %v3631 = vand.u32 %v3630, 4294901760
        %3632 = vmatpush1.msra.mxu0 %v3631
        %3633 = vmatprep.subr.mxu0 0.0
        %v3634 = vand.u32 %v2999, 4294901760
        %v3635 = vsub.f32 %v2999, %v3634
        %v3636 = vand.u32 %v3635, 4294901760
        %3637 = vmatpush1.msra.mxu0 %v3636
        %3638 = vmatprep.subr.mxu0 0.0
        %v3639 = vand.u32 %v3000, 4294901760
        %v3640 = vsub.f32 %v3000, %v3639
        %v3641 = vand.u32 %v3640, 4294901760
        %3642 = vmatpush1.msra.mxu0 %v3641
        %3643 = vmatprep.subr.mxu0 0.0
        %v3644 = vand.u32 %v3001, 4294901760
        %v3645 = vsub.f32 %v3001, %v3644
        %v3646 = vand.u32 %v3645, 4294901760
        %3647 = vmatpush1.msra.mxu0 %v3646
        %3648 = vmatprep.subr.mxu0 0.0
        %v3649 = vand.u32 %v3002, 4294901760
        %v3650 = vsub.f32 %v3002, %v3649
        %v3651 = vand.u32 %v3650, 4294901760
        %3652 = vmatpush1.msra.mxu0 %v3651
        %3653 = vmatprep.subr.mxu0 0.0
        %v3654 = vand.u32 %v3003, 4294901760
        %v3655 = vsub.f32 %v3003, %v3654
        %v3656 = vand.u32 %v3655, 4294901760
        %3657 = vmatpush1.msra.mxu0 %v3656
        %3658 = vmatprep.subr.mxu0 0.0
        %v3659 = vand.u32 %v3004, 4294901760
        %v3660 = vsub.f32 %v3004, %v3659
        %v3661 = vand.u32 %v3660, 4294901760
        %3662 = vmatpush1.msra.mxu0 %v3661
        %3663 = vmatprep.subr.mxu0 0.0
        %v3664 = vand.u32 %v3005, 4294901760
        %v3665 = vsub.f32 %v3005, %v3664
        %v3666 = vand.u32 %v3665, 4294901760
        %3667 = vmatpush1.msra.mxu0 %v3666
        %3668 = vmatprep.subr.mxu0 0.0
        %v3669 = vand.u32 %v3006, 4294901760
        %v3670 = vsub.f32 %v3006, %v3669
        %v3671 = vand.u32 %v3670, 4294901760
        %3672 = vmatpush1.msra.mxu0 %v3671
        %3673 = vmatprep.subr.mxu0 0.0
        %v3674 = vand.u32 %v3007, 4294901760
        %v3675 = vsub.f32 %v3007, %v3674
        %v3676 = vand.u32 %v3675, 4294901760
        %3677 = vmatpush1.msra.mxu0 %v3676
        %3678 = vmatprep.subr.mxu0 0.0
        %v3679 = vand.u32 %v3008, 4294901760
        %v3680 = vsub.f32 %v3008, %v3679
        %v3681 = vand.u32 %v3680, 4294901760
        %3682 = vmatpush1.msra.mxu0 %v3681
        %3683 = vmatprep.subr.mxu0 0.0
        %v3684 = vand.u32 %v3009, 4294901760
        %v3685 = vsub.f32 %v3009, %v3684
        %v3686 = vand.u32 %v3685, 4294901760
        %3687 = vmatpush1.msra.mxu0 %v3686
        %3688 = vmatprep.subr.mxu0 0.0
        %v3689 = vand.u32 %v3010, 4294901760
        %v3690 = vsub.f32 %v3010, %v3689
        %v3691 = vand.u32 %v3690, 4294901760
        %3692 = vmatpush1.msra.mxu0 %v3691
        %3693 = vmatprep.subr.mxu0 0.0
        %v3694 = vand.u32 %v3011, 4294901760
        %v3695 = vsub.f32 %v3011, %v3694
        %v3696 = vand.u32 %v3695, 4294901760
        %3697 = vmatpush1.msra.mxu0 %v3696
        %3698 = vmatprep.subr.mxu0 0.0
        %v3699 = vand.u32 %v3012, 4294901760
        %v3700 = vsub.f32 %v3012, %v3699
        %v3701 = vand.u32 %v3700, 4294901760
        %3702 = vmatpush1.msra.mxu0 %v3701
        %3703 = vmatprep.subr.mxu0 0.0
        %v3704 = vand.u32 %v3013, 4294901760
        %v3705 = vsub.f32 %v3013, %v3704
        %v3706 = vand.u32 %v3705, 4294901760
        %3707 = vmatpush1.msra.mxu0 %v3706
        %3708 = vmatprep.subr.mxu0 0.0
        %v3709 = vand.u32 %v3014, 4294901760
        %v3710 = vsub.f32 %v3014, %v3709
        %v3711 = vand.u32 %v3710, 4294901760
        %3712 = vmatpush1.msra.mxu0 %v3711
        %3713 = vmatprep.subr.mxu0 0.0
        %v3714 = vand.u32 %v3015, 4294901760
        %v3715 = vsub.f32 %v3015, %v3714
        %v3716 = vand.u32 %v3715, 4294901760
        %3717 = vmatpush1.msra.mxu0 %v3716
        %3718 = vmatprep.subr.mxu0 0.0
        %v3719 = vand.u32 %v3016, 4294901760
        %v3720 = vsub.f32 %v3016, %v3719
        %v3721 = vand.u32 %v3720, 4294901760
        %3722 = vmatpush1.msra.mxu0 %v3721
        %3723 = vmatprep.subr.mxu0 0.0
        %v3724 = vand.u32 %v3017, 4294901760
        %v3725 = vsub.f32 %v3017, %v3724
        %v3726 = vand.u32 %v3725, 4294901760
        %3727 = vmatpush1.msra.mxu0 %v3726
        %3728 = vmatprep.subr.mxu0 0.0
        %v3729 = vand.u32 %v3018, 4294901760
        %v3730 = vsub.f32 %v3018, %v3729
        %v3731 = vand.u32 %v3730, 4294901760
        %3732 = vmatpush1.msra.mxu0 %v3731
        %3733 = vmatprep.subr.mxu0 0.0
        %v3734 = vand.u32 %v3019, 4294901760
        %v3735 = vsub.f32 %v3019, %v3734
        %v3736 = vand.u32 %v3735, 4294901760
        %3737 = vmatpush1.msra.mxu0 %v3736
        %3738 = vmatprep.subr.mxu0 0.0
        %v3739 = vand.u32 %v3020, 4294901760
        %v3740 = vsub.f32 %v3020, %v3739
        %v3741 = vand.u32 %v3740, 4294901760
        %3742 = vmatpush1.msra.mxu0 %v3741
        %3743 = vmatprep.subr.mxu0 0.0
        %v3744 = vand.u32 %v3021, 4294901760
        %v3745 = vsub.f32 %v3021, %v3744
        %v3746 = vand.u32 %v3745, 4294901760
        %3747 = vmatpush1.msra.mxu0 %v3746
        %3748 = vmatprep.subr.mxu0 0.0
        %v3749 = vand.u32 %v3022, 4294901760
        %v3750 = vsub.f32 %v3022, %v3749
        %v3751 = vand.u32 %v3750, 4294901760
        %3752 = vmatpush1.msra.mxu0 %v3751
        %3753 = vmatprep.subr.mxu0 0.0
        %v3754 = vand.u32 %v3023, 4294901760
        %v3755 = vsub.f32 %v3023, %v3754
        %v3756 = vand.u32 %v3755, 4294901760
        %3757 = vmatpush1.msra.mxu0 %v3756
        %3758 = vmatprep.subr.mxu0 0.0
        %v3759 = vand.u32 %v3024, 4294901760
        %v3760 = vsub.f32 %v3024, %v3759
        %v3761 = vand.u32 %v3760, 4294901760
        %3762 = vmatpush1.msra.mxu0 %v3761
        %3763 = vmatprep.subr.mxu0 0.0
        %v3764 = vand.u32 %v3025, 4294901760
        %v3765 = vsub.f32 %v3025, %v3764
        %v3766 = vand.u32 %v3765, 4294901760
        %3767 = vmatpush1.msra.mxu0 %v3766
        %3768 = vmatprep.subr.mxu0 0.0
        %v3769 = vand.u32 %v3026, 4294901760
        %v3770 = vsub.f32 %v3026, %v3769
        %v3771 = vand.u32 %v3770, 4294901760
        %3772 = vmatpush1.msra.mxu0 %v3771
        %3773 = vmatprep.subr.mxu0 0.0
        %v3774 = vand.u32 %v3027, 4294901760
        %v3775 = vsub.f32 %v3027, %v3774
        %v3776 = vand.u32 %v3775, 4294901760
        %3777 = vmatpush1.msra.mxu0 %v3776
        %v3778 = vand.u32 %v2128, 4294901760
        %3779 = vmatprep.mubr.f32.mxu0 %v3778
        %v3780 = vand.u32 %v2127, 4294901760
        %3781 = vmatmul.mubr.f32.gmra.mrb[0].mxu0 %v3780
        %v3782 = vpop.f32.mrb[0].mxu0
        %v3783 = vadd.f32 %v3615, %v3782
        %v3784 = vpop.f32.mrb[0].mxu0
        %3785 = vdwg.mxu0
        %3786 = vmatprep.subr.mxu0 0.0
        %v3787 = vand.u32 %v2996, 4294901760
        %3788 = vmatpush1.msra.mxu0 %v3787
        %3789 = vmatprep.subr.mxu0 0.0
        %v3790 = vand.u32 %v2997, 4294901760
        %3791 = vmatpush1.msra.mxu0 %v3790
        %3792 = vmatprep.subr.mxu0 0.0
        %v3793 = vand.u32 %v2998, 4294901760
        %3794 = vmatpush1.msra.mxu0 %v3793
        %3795 = vmatprep.subr.mxu0 0.0
        %v3796 = vand.u32 %v2999, 4294901760
        %3797 = vmatpush1.msra.mxu0 %v3796
        %3798 = vmatprep.subr.mxu0 0.0
        %v3799 = vand.u32 %v3000, 4294901760
        %3800 = vmatpush1.msra.mxu0 %v3799
        %3801 = vmatprep.subr.mxu0 0.0
        %v3802 = vand.u32 %v3001, 4294901760
        %3803 = vmatpush1.msra.mxu0 %v3802
        %3804 = vmatprep.subr.mxu0 0.0
        %v3805 = vand.u32 %v3002, 4294901760
        %3806 = vmatpush1.msra.mxu0 %v3805
        %3807 = vmatprep.subr.mxu0 0.0
        %v3808 = vand.u32 %v3003, 4294901760
        %3809 = vmatpush1.msra.mxu0 %v3808
        %3810 = vmatprep.subr.mxu0 0.0
        %v3811 = vand.u32 %v3004, 4294901760
        %3812 = vmatpush1.msra.mxu0 %v3811
        %3813 = vmatprep.subr.mxu0 0.0
        %v3814 = vand.u32 %v3005, 4294901760
        %3815 = vmatpush1.msra.mxu0 %v3814
        %3816 = vmatprep.subr.mxu0 0.0
        %v3817 = vand.u32 %v3006, 4294901760
        %3818 = vmatpush1.msra.mxu0 %v3817
        %3819 = vmatprep.subr.mxu0 0.0
        %v3820 = vand.u32 %v3007, 4294901760
        %3821 = vmatpush1.msra.mxu0 %v3820
        %3822 = vmatprep.subr.mxu0 0.0
        %v3823 = vand.u32 %v3008, 4294901760
        %3824 = vmatpush1.msra.mxu0 %v3823
        %3825 = vmatprep.subr.mxu0 0.0
        %v3826 = vand.u32 %v3009, 4294901760
        %3827 = vmatpush1.msra.mxu0 %v3826
        %3828 = vmatprep.subr.mxu0 0.0
        %v3829 = vand.u32 %v3010, 4294901760
        %3830 = vmatpush1.msra.mxu0 %v3829
        %3831 = vmatprep.subr.mxu0 0.0
        %v3832 = vand.u32 %v3011, 4294901760
        %3833 = vmatpush1.msra.mxu0 %v3832
        %3834 = vmatprep.subr.mxu0 0.0
        %v3835 = vand.u32 %v3012, 4294901760
        %3836 = vmatpush1.msra.mxu0 %v3835
        %3837 = vmatprep.subr.mxu0 0.0
        %v3838 = vand.u32 %v3013, 4294901760
        %3839 = vmatpush1.msra.mxu0 %v3838
        %3840 = vmatprep.subr.mxu0 0.0
        %v3841 = vand.u32 %v3014, 4294901760
        %3842 = vmatpush1.msra.mxu0 %v3841
        %3843 = vmatprep.subr.mxu0 0.0
        %v3844 = vand.u32 %v3015, 4294901760
        %3845 = vmatpush1.msra.mxu0 %v3844
        %3846 = vmatprep.subr.mxu0 0.0
        %v3847 = vand.u32 %v3016, 4294901760
        %3848 = vmatpush1.msra.mxu0 %v3847
        %3849 = vmatprep.subr.mxu0 0.0
        %v3850 = vand.u32 %v3017, 4294901760
        %3851 = vmatpush1.msra.mxu0 %v3850
        %3852 = vmatprep.subr.mxu0 0.0
        %v3853 = vand.u32 %v3018, 4294901760
        %3854 = vmatpush1.msra.mxu0 %v3853
        %3855 = vmatprep.subr.mxu0 0.0
        %v3856 = vand.u32 %v3019, 4294901760
        %3857 = vmatpush1.msra.mxu0 %v3856
        %3858 = vmatprep.subr.mxu0 0.0
        %v3859 = vand.u32 %v3020, 4294901760
        %3860 = vmatpush1.msra.mxu0 %v3859
        %3861 = vmatprep.subr.mxu0 0.0
        %v3862 = vand.u32 %v3021, 4294901760
        %3863 = vmatpush1.msra.mxu0 %v3862
        %3864 = vmatprep.subr.mxu0 0.0
        %v3865 = vand.u32 %v3022, 4294901760
        %3866 = vmatpush1.msra.mxu0 %v3865
        %3867 = vmatprep.subr.mxu0 0.0
        %v3868 = vand.u32 %v3023, 4294901760
        %3869 = vmatpush1.msra.mxu0 %v3868
        %3870 = vmatprep.subr.mxu0 0.0
        %v3871 = vand.u32 %v3024, 4294901760
        %3872 = vmatpush1.msra.mxu0 %v3871
        %3873 = vmatprep.subr.mxu0 0.0
        %v3874 = vand.u32 %v3025, 4294901760
        %3875 = vmatpush1.msra.mxu0 %v3874
        %3876 = vmatprep.subr.mxu0 0.0
        %v3877 = vand.u32 %v3026, 4294901760
        %3878 = vmatpush1.msra.mxu0 %v3877
        %3879 = vmatprep.subr.mxu0 0.0
        %v3880 = vand.u32 %v3027, 4294901760
        %3881 = vmatpush1.msra.mxu0 %v3880
        %v3882 = vand.u32 %v2128, 4294901760
        %3883 = vmatprep.mubr.f32.mxu0 %v3882
        %v3884 = vand.u32 %v2127, 4294901760
        %3885 = vmatmul.mubr.f32.gmra.mrb[0].mxu0 %v3884
        %v3886 = vpop.f32.mrb[0].mxu0
        %v3887 = vadd.f32 %v3783, %v3886
        %v3888 = vpop.f32.mrb[0].mxu0
        %3889 = vdwg.mxu0
        %v3890 = vadd.f32 %v2995, %v3887
        %3891 = vst.msk [vmem:[#allocation6] sm:$0x1] %vm2993, %v3890
        // Predicated region
        $region37: #{tpu_custom_call.1} parent=31 // pred_check
          %p3892 = pneg %p101
        $region38: #{tpu_custom_call.1} parent=31 // pred_check_branch
          %3894 = sbr.rel (%p3892) target = $region40
        $region39: #{tpu_custom_call.1} parent=31 // pred_region
          %s3896 = ssub.s32 16, 16
          %3897 = vsyncadd [#allocation5], %s3896
          %s3899 = sshll.u32 [#allocation4], 4
          %s3900 = int_to_ptr.vmem [resolvable:$true] %s3899
          %3902 = dma.vmem_to_hbm [thread:$0]  %s3900, 16, %s4, [#allocation5]
        $region40: #{tpu_custom_call.1} parent=31 // pred_fallthru
          _
        // Predicated region
        $region41: #{tpu_custom_call.1} parent=31 // pred_check
          %p3903 = pneg %p122
        $region42: #{tpu_custom_call.1} parent=31 // pred_check_branch
          %3905 = sbr.rel (%p3903) target = $region44
        $region43: #{tpu_custom_call.1} parent=31 // pred_region
          %s3907 = ssub.s32 16, 16
          %3908 = vsyncadd [#allocation7], %s3907
          %s3910 = sshll.u32 [#allocation6], 4
          %s3911 = int_to_ptr.vmem [resolvable:$true] %s3910
          %3913 = dma.vmem_to_hbm [thread:$0]  %s3911, 16, %s5, [#allocation7]
        $region44: #{tpu_custom_call.1} parent=31 // pred_fallthru
          _
        // Predicated region
        $region45: #{tpu_custom_call.1} parent=31 // pred_check
          %p3914 = pneg %p101
        $region46: #{tpu_custom_call.1} parent=31 // pred_check_branch
          %3916 = sbr.rel (%p3914) target = $region48
        $region47: #{tpu_custom_call.1} parent=31 // pred_region
          %3917 = dma.done [#allocation5], 16
        $region48: #{tpu_custom_call.1} parent=31 // pred_fallthru
          _
        // Predicated region
        $region49: #{tpu_custom_call.1} parent=31 // pred_check
          %p3918 = pneg %p122
        $region50: #{tpu_custom_call.1} parent=31 // pred_check_branch
          %3920 = sbr.rel (%p3918) target = $region52
        $region51: #{tpu_custom_call.1} parent=31 // pred_region
          %3921 = dma.done [#allocation7], 16
        $region52: #{tpu_custom_call.1} parent=31 // pred_fallthru
          _
      $region32: #{tpu_custom_call.1} parent=5 // pred_fallthru
        _
      %p3922 = scmp.le.s32.totalorder 2, %s15
      // Predicated region
      $region53: #{tpu_custom_call.1} parent=5 // pred_check
        %p3923 = pneg %p3922
      $region54: #{tpu_custom_call.1} parent=5 // pred_check_branch
        %3925 = sbr.rel (%p3923) target = $region56
      $region55: #{tpu_custom_call.1} parent=5 // pred_region
        %s3926 = ssub.s32 %s15, 2
      $region56: #{tpu_custom_call.1} parent=5 // pred_fallthru
        _
    $region6: #{tpu_custom_call.1} parent=1 // loop_footer
      %s19 = sadd.s32 1, %s15
    $region7: #{tpu_custom_call.1} parent=1 // loop_footer_branch
      %14 = sbr.rel target = $region3
    $region8: #{tpu_custom_call.1} parent=1 // loop_exit
      _
    %3927 = vsyncpa [#allocation5], 1
    %s3928 = scalar_lea.sflag [#allocation5], 1
    %3929 = vsyncpa %s3928, 1
    %3930 = vsyncpa [#allocation7], 1

</llo_original>
